<compile_context>
chip_gen: v7x
topology: tpu7x:2x2x1
jax: 0.10.0
libtpu: 0.0.40
codegen_flags: <defaults>
</compile_context>

<pallas_src>
import functools

import jax
import jax.numpy as jnp
from jax.experimental import pallas as pl
from jax.experimental.pallas import tpu as pltpu

LANE = 128
SUBLANE = 8


def _round_up(x, m):
    return (x + m - 1) // m * m


def _pad2(a, rows, cols):
    out = jnp.zeros((rows, cols), a.dtype)
    return out.at[: a.shape[0], : a.shape[1]].set(a)


def _tm_mlp_kernel(tok_ref, emb_ref, w1e_ref, w1x_ref, b1_ref,
                   wh_ref, bh_ref, wo_ref, bo_ref, o_ref,
                   *, tmpl_len, n_hidden, xxt_scaling):
    tok = tok_ref[...]                    # (TM, Tp) int32; cols >= T hold -1
    emb = emb_ref[...]                    # (Vp, Hp) shared embedding (padded)
    cdt = emb.dtype
    tm = tok.shape[0]
    vp, hp = emb.shape

    acc = jnp.zeros((tm, hp), jnp.float32)
    vocab_iota = jax.lax.broadcasted_iota(jnp.int32, (tm, vp), 1)  # hoisted

    # --- layer 0, embedding part: concat_t emb[tok[:, t]] @ W1_emb[t] -------
    # (one-hot @ table is an exact gather and keeps the lookup on the MXU)
    for t in range(tmpl_len):
        tok_t = tok[:, t:t + 1]                                   # (TM, 1)
        onehot = (vocab_iota == tok_t).astype(cdt)                # (TM, Vp)
        e_t = jnp.dot(onehot, emb, preferred_element_type=jnp.float32)
        acc = acc + jnp.dot(e_t.astype(cdt), w1e_ref[t],
                            preferred_element_type=jnp.float32)

    # --- layer 0, XXT part: (tok_j == tok_i) * scale, flattened, @ W1_xxt ---
    for i in range(tmpl_len):
        tok_i = tok[:, i:i + 1]                                   # (TM, 1)
        eq_i = (tok == tok_i).astype(cdt) * xxt_scaling           # (TM, Tp)
        acc = acc + jnp.dot(eq_i, w1x_ref[i],
                            preferred_element_type=jnp.float32)

    h = jnp.maximum(acc + b1_ref[...].astype(jnp.float32), 0.0)

    # --- hidden Linear(H, H) layers, relu after each -------------------------
    for l in range(n_hidden):
        pre = jnp.dot(h.astype(cdt), wh_ref[l],
                      preferred_element_type=jnp.float32)
        h = jnp.maximum(pre + bh_ref[l].astype(jnp.float32), 0.0)

    # --- output Linear(H, O), no relu ----------------------------------------
    out = jnp.dot(h.astype(cdt), wo_ref[...],
                  preferred_element_type=jnp.float32)
    out = out + bo_ref[...].astype(jnp.float32)
    o_ref[...] = out.astype(o_ref.dtype)


def template_matching_mlp_xxt(tokens, emb, w1, b1, w_hidden, b_hidden, wo, bo,
                              *, xxt_scaling=1.0, block_rows=512):
    """Forward of TemplateMatchingMLPSharedEmbeddingWithXXT.

    tokens:   (B, T) int32 token ids in [0, V)
    emb:      (V, H) shared embedding table
    w1, b1:   (T*H + T*T, H), (H,)   first Linear (stored as x @ w1 + b1)
    w_hidden: list of (H, H); b_hidden: list of (H,)
    wo, bo:   (H, O), (O,)           output Linear
    """
    B, T = tokens.shape
    V, H = emb.shape
    O = wo.shape[1]
    n_hidden = len(w_hidden)
    assert w1.shape == (T * H + T * T, H)
    dt = emb.dtype

    # Lane-dense padded dims (exact: padded weight rows/cols are zero).
    Vp = _round_up(V, LANE)
    Hp = _round_up(H, LANE)
    Op = _round_up(O, LANE)
    Tp = _round_up(T, LANE)

    # Batch tiling.  Production: ~512-1024 rows (v5e/v6e), ~256-512 (v7x).
    TM = _round_up(min(block_rows, _round_up(B, SUBLANE)), SUBLANE)
    Bp = _round_up(B, TM)
    grid = (Bp // TM,)

    # Tokens: pad extra rows with id 0, extra template columns with -1
    # (never equal to a real id, so padded columns contribute 0 to XXT).
    tok_p = jnp.full((Bp, Tp), -1, jnp.int32)
    tok_p = tok_p.at[:B, :T].set(tokens.astype(jnp.int32))
    tok_p = tok_p.at[B:, :T].set(0)

    emb_p = _pad2(emb, Vp, Hp)

    # Split first-layer weight: rows [0, T*H) multiply the flattened embedding
    # (grouped per template position t), rows [T*H, T*H+T*T) multiply XXT.
    w1_emb = w1[: T * H].reshape(T, H, H)
    w1_xxt = w1[T * H:].reshape(T, T, H)
    w1e_p = jnp.zeros((T, Hp, Hp), dt).at[:, :H, :H].set(w1_emb)
    w1x_p = jnp.zeros((T, Tp, Hp), dt).at[:, :T, :H].set(w1_xxt)
    b1_p = _pad2(b1.reshape(1, H), 1, Hp)

    if n_hidden > 0:
        wh = jnp.stack(w_hidden)
        bh = jnp.stack(b_hidden).reshape(n_hidden, 1, H)
        wh_p = jnp.zeros((n_hidden, Hp, Hp), dt).at[:, :H, :H].set(wh)
        bh_p = jnp.zeros((n_hidden, 1, Hp), dt).at[:, :, :H].set(bh)
    else:  # dummy, never read (the in-kernel hidden loop has 0 iterations)
        wh_p = jnp.zeros((1, Hp, Hp), dt)
        bh_p = jnp.zeros((1, 1, Hp), dt)
    n_w = wh_p.shape[0]

    wo_p = _pad2(wo, Hp, Op)
    bo_p = _pad2(bo.reshape(1, O), 1, Op)

    kernel = functools.partial(_tm_mlp_kernel, tmpl_len=T, n_hidden=n_hidden,
                               xxt_scaling=float(xxt_scaling))

    itemsize = jnp.dtype(dt).itemsize
    flops_per_row = (2 * T * (Vp * Hp + Hp * Hp) + 2 * T * Tp * Hp
                     + 2 * n_hidden * Hp * Hp + 2 * Hp * Op)
    weight_bytes = sum(int(a.size) * a.dtype.itemsize for a in
                       (emb_p, w1e_p, w1x_p, b1_p, wh_p, bh_p, wo_p, bo_p))
    cost = pl.CostEstimate(
        flops=int(Bp * flops_per_row),
        transcendentals=0,
        bytes_accessed=int(tok_p.size * 4 + Bp * Op * itemsize + weight_bytes),
    )

    out_p = pl.pallas_call(
        kernel,
        out_shape=jax.ShapeDtypeStruct((Bp, Op), dt),
        grid=grid,
        in_specs=[
            pl.BlockSpec((TM, Tp), lambda i: (i, 0)),           # tokens (tiled)
            pl.BlockSpec((Vp, Hp), lambda i: (0, 0)),           # embedding
            pl.BlockSpec((T, Hp, Hp), lambda i: (0, 0, 0)),     # W1 (emb part)
            pl.BlockSpec((T, Tp, Hp), lambda i: (0, 0, 0)),     # W1 (xxt part)
            pl.BlockSpec((1, Hp), lambda i: (0, 0)),            # b1
            pl.BlockSpec((n_w, Hp, Hp), lambda i: (0, 0, 0)),   # hidden Ws
            pl.BlockSpec((n_w, 1, Hp), lambda i: (0, 0, 0)),    # hidden bs
            pl.BlockSpec((Hp, Op), lambda i: (0, 0)),           # W_out
            pl.BlockSpec((1, Op), lambda i: (0, 0)),            # b_out
        ],
        out_specs=pl.BlockSpec((TM, Op), lambda i: (i, 0)),
        compiler_params=pltpu.CompilerParams(
            dimension_semantics=("parallel",),
            vmem_limit_bytes=32 * 1024 * 1024,
        ),
        cost_estimate=cost,
    )(tok_p, emb_p, w1e_p, w1x_p, b1_p, wh_p, bh_p, wo_p, bo_p)

    return out_p[:B, :O]


if __name__ == "__main__":
    # Small config consistent with the module.
    vocab_size = 32
    template_length = 8
    hidden_dim = 32
    output_dim = 8
    num_layers = 3            # linears = [Linear(F, H), Linear(H, H)], then output
    xxt_scaling = 0.5
    batch = 64

    F = hidden_dim * template_length + template_length ** 2

    key = jax.random.PRNGKey(0)
    ks = jax.random.split(key, 8)

    x = jax.random.randint(ks[0], (batch, template_length), 0, vocab_size,
                           dtype=jnp.int32)

    def linear_init(kw, kb, fan_in, fan_out):
        bound = fan_in ** -0.5
        w = jax.random.uniform(kw, (fan_in, fan_out), jnp.float32, -bound, bound)
        b = jax.random.uniform(kb, (fan_out,), jnp.float32, -bound, bound)
        return w, b

    emb = jax.random.normal(ks[1], (vocab_size, hidden_dim), jnp.float32)
    w1, b1 = linear_init(ks[2], ks[3], F, hidden_dim)
    w2, b2 = linear_init(ks[4], ks[5], hidden_dim, hidden_dim)
    wo, bo = linear_init(ks[6], ks[7], hidden_dim, output_dim)

    out = template_matching_mlp_xxt(
        x, emb, w1, b1, [w2], [b2], wo, bo,
        xxt_scaling=xxt_scaling, block_rows=32)   # 32-row tiles -> grid=(2,)
    jax.block_until_ready(out)
    assert out.shape == (batch, output_dim)

    # Pure-JAX reference mirroring the PyTorch forward.
    hi = jax.lax.Precision.HIGHEST
    xxt = ((x[:, None, :] == x[:, :, None]).reshape(batch, -1)
           .astype(jnp.float32) * xxt_scaling)
    e = emb[x].reshape(batch, -1)
    h = jnp.concatenate([e, xxt], axis=1)
    h = jnp.maximum(jnp.dot(h, w1, precision=hi) + b1, 0.0)
    h = jnp.maximum(jnp.dot(h, w2, precision=hi) + b2, 0.0)
    ref = jnp.dot(h, wo, precision=hi) + bo

    err = jnp.max(jnp.abs(out - ref))
    assert jnp.allclose(out, ref, atol=5e-3, rtol=5e-3), \
        f"mismatch vs reference, max_abs_err={err}"
    print("KERNEL_OK")
</pallas_src>

<mosaic_0001>
module attributes {stable_mosaic.version = 11 : i64} {
  func.func @_tm_mlp_kernel(%arg0: i32, %arg1: memref<32x128xi32, #tpu.memory_space<vmem>>, %arg2: memref<128x128xf32, #tpu.memory_space<vmem>>, %arg3: memref<8x128x128xf32, #tpu.memory_space<vmem>>, %arg4: memref<8x128x128xf32, #tpu.memory_space<vmem>>, %arg5: memref<1x128xf32, #tpu.memory_space<vmem>>, %arg6: memref<1x128x128xf32, #tpu.memory_space<vmem>>, %arg7: memref<1x1x128xf32, #tpu.memory_space<vmem>>, %arg8: memref<128x128xf32, #tpu.memory_space<vmem>>, %arg9: memref<1x128xf32, #tpu.memory_space<vmem>>, %arg10: memref<32x128xf32, #tpu.memory_space<vmem>>) attributes {dimension_semantics = [#tpu.dimension_semantics<parallel>], iteration_bounds = array<i64: 2>, scalar_prefetch = 0 : i64, scratch_operands = 0 : i64, tpu.core_type = #tpu.core_type<tc>, window_params = [{transform_indices = @transform_0, window_bounds = array<i64: 32, 128>}, {pipeline_mode = #tpu.pipeline_mode<synchronous>, transform_indices = @transform_1, window_bounds = array<i64: 128, 128>}, {pipeline_mode = #tpu.pipeline_mode<synchronous>, transform_indices = @transform_2, window_bounds = array<i64: 8, 128, 128>}, {pipeline_mode = #tpu.pipeline_mode<synchronous>, transform_indices = @transform_3, window_bounds = array<i64: 8, 128, 128>}, {pipeline_mode = #tpu.pipeline_mode<synchronous>, transform_indices = @transform_4, window_bounds = array<i64: 1, 128>}, {pipeline_mode = #tpu.pipeline_mode<synchronous>, transform_indices = @transform_5, window_bounds = array<i64: 1, 128, 128>}, {pipeline_mode = #tpu.pipeline_mode<synchronous>, transform_indices = @transform_6, window_bounds = array<i64: 1, 1, 128>}, {pipeline_mode = #tpu.pipeline_mode<synchronous>, transform_indices = @transform_7, window_bounds = array<i64: 128, 128>}, {pipeline_mode = #tpu.pipeline_mode<synchronous>, transform_indices = @transform_8, window_bounds = array<i64: 1, 128>}, {transform_indices = @transform_9, window_bounds = array<i64: 32, 128>}]} {
    %c0 = arith.constant 0 : index
    %c0_0 = arith.constant 0 : index
    %0 = vector.load %arg1[%c0, %c0_0] : memref<32x128xi32, #tpu.memory_space<vmem>>, vector<32x128xi32>
    %c0_1 = arith.constant 0 : index
    %c0_2 = arith.constant 0 : index
    %1 = vector.load %arg2[%c0_1, %c0_2] : memref<128x128xf32, #tpu.memory_space<vmem>>, vector<128x128xf32>
    %cst = arith.constant 0.000000e+00 : f32
    %2 = vector.broadcast %cst : f32 to vector<32x128xf32>
    %3 = tpu.iota {dimensions = array<i32: 1>} : vector<32x128xi32>
    %4 = vector.extract_strided_slice %0 {offsets = [0, 0], sizes = [32, 1], strides = [1, 1]} : vector<32x128xi32> to vector<32x1xi32>
    %5 = vector.broadcast %4 : vector<32x1xi32> to vector<32x128xi32>
    %6 = arith.cmpi eq, %3, %5 : vector<32x128xi32>
    %7 = arith.extui %6 : vector<32x128xi1> to vector<32x128xi32>
    %8 = arith.sitofp %7 : vector<32x128xi32> to vector<32x128xf32>
    %cst_3 = arith.constant dense<0.000000e+00> : vector<32x128xf32>
    %9 = tpu.matmul %8, %1, %cst_3 {dimension_numbers = #tpu.dot_dimension_numbers<[1], [0], [0], [1], [0, 0, 1, 1], [], []>} : vector<32x128xf32>, vector<128x128xf32>, vector<32x128xf32> -> vector<32x128xf32>
    %c0_4 = arith.constant 0 : index
    %c0_5 = arith.constant 0 : index
    %c0_6 = arith.constant 0 : index
    %10 = vector.load %arg3[%c0_4, %c0_5, %c0_6] : memref<8x128x128xf32, #tpu.memory_space<vmem>>, vector<1x128x128xf32>
    %11 = vector.shape_cast %10 : vector<1x128x128xf32> to vector<128x128xf32>
    %cst_7 = arith.constant dense<0.000000e+00> : vector<32x128xf32>
    %12 = tpu.matmul %9, %11, %cst_7 {dimension_numbers = #tpu.dot_dimension_numbers<[1], [0], [0], [1], [0, 0, 1, 1], [], []>} : vector<32x128xf32>, vector<128x128xf32>, vector<32x128xf32> -> vector<32x128xf32>
    %13 = arith.addf %2, %12 : vector<32x128xf32>
    %14 = vector.extract_strided_slice %0 {offsets = [0, 1], sizes = [32, 1], strides = [1, 1]} : vector<32x128xi32> to vector<32x1xi32>
    %15 = vector.broadcast %14 : vector<32x1xi32> to vector<32x128xi32>
    %16 = arith.cmpi eq, %3, %15 : vector<32x128xi32>
    %17 = arith.extui %16 : vector<32x128xi1> to vector<32x128xi32>
    %18 = arith.sitofp %17 : vector<32x128xi32> to vector<32x128xf32>
    %cst_8 = arith.constant dense<0.000000e+00> : vector<32x128xf32>
    %19 = tpu.matmul %18, %1, %cst_8 {dimension_numbers = #tpu.dot_dimension_numbers<[1], [0], [0], [1], [0, 0, 1, 1], [], []>} : vector<32x128xf32>, vector<128x128xf32>, vector<32x128xf32> -> vector<32x128xf32>
    %c1 = arith.constant 1 : index
    %c0_9 = arith.constant 0 : index
    %c0_10 = arith.constant 0 : index
    %20 = vector.load %arg3[%c1, %c0_9, %c0_10] : memref<8x128x128xf32, #tpu.memory_space<vmem>>, vector<1x128x128xf32>
    %21 = vector.shape_cast %20 : vector<1x128x128xf32> to vector<128x128xf32>
    %cst_11 = arith.constant dense<0.000000e+00> : vector<32x128xf32>
    %22 = tpu.matmul %19, %21, %cst_11 {dimension_numbers = #tpu.dot_dimension_numbers<[1], [0], [0], [1], [0, 0, 1, 1], [], []>} : vector<32x128xf32>, vector<128x128xf32>, vector<32x128xf32> -> vector<32x128xf32>
    %23 = arith.addf %13, %22 : vector<32x128xf32>
    %24 = vector.extract_strided_slice %0 {offsets = [0, 2], sizes = [32, 1], strides = [1, 1]} : vector<32x128xi32> to vector<32x1xi32>
    %25 = vector.broadcast %24 : vector<32x1xi32> to vector<32x128xi32>
    %26 = arith.cmpi eq, %3, %25 : vector<32x128xi32>
    %27 = arith.extui %26 : vector<32x128xi1> to vector<32x128xi32>
    %28 = arith.sitofp %27 : vector<32x128xi32> to vector<32x128xf32>
    %cst_12 = arith.constant dense<0.000000e+00> : vector<32x128xf32>
    %29 = tpu.matmul %28, %1, %cst_12 {dimension_numbers = #tpu.dot_dimension_numbers<[1], [0], [0], [1], [0, 0, 1, 1], [], []>} : vector<32x128xf32>, vector<128x128xf32>, vector<32x128xf32> -> vector<32x128xf32>
    %c2 = arith.constant 2 : index
    %c0_13 = arith.constant 0 : index
    %c0_14 = arith.constant 0 : index
    %30 = vector.load %arg3[%c2, %c0_13, %c0_14] : memref<8x128x128xf32, #tpu.memory_space<vmem>>, vector<1x128x128xf32>
    %31 = vector.shape_cast %30 : vector<1x128x128xf32> to vector<128x128xf32>
    %cst_15 = arith.constant dense<0.000000e+00> : vector<32x128xf32>
    %32 = tpu.matmul %29, %31, %cst_15 {dimension_numbers = #tpu.dot_dimension_numbers<[1], [0], [0], [1], [0, 0, 1, 1], [], []>} : vector<32x128xf32>, vector<128x128xf32>, vector<32x128xf32> -> vector<32x128xf32>
    %33 = arith.addf %23, %32 : vector<32x128xf32>
    %34 = vector.extract_strided_slice %0 {offsets = [0, 3], sizes = [32, 1], strides = [1, 1]} : vector<32x128xi32> to vector<32x1xi32>
    %35 = vector.broadcast %34 : vector<32x1xi32> to vector<32x128xi32>
    %36 = arith.cmpi eq, %3, %35 : vector<32x128xi32>
    %37 = arith.extui %36 : vector<32x128xi1> to vector<32x128xi32>
    %38 = arith.sitofp %37 : vector<32x128xi32> to vector<32x128xf32>
    %cst_16 = arith.constant dense<0.000000e+00> : vector<32x128xf32>
    %39 = tpu.matmul %38, %1, %cst_16 {dimension_numbers = #tpu.dot_dimension_numbers<[1], [0], [0], [1], [0, 0, 1, 1], [], []>} : vector<32x128xf32>, vector<128x128xf32>, vector<32x128xf32> -> vector<32x128xf32>
    %c3 = arith.constant 3 : index
    %c0_17 = arith.constant 0 : index
    %c0_18 = arith.constant 0 : index
    %40 = vector.load %arg3[%c3, %c0_17, %c0_18] : memref<8x128x128xf32, #tpu.memory_space<vmem>>, vector<1x128x128xf32>
    %41 = vector.shape_cast %40 : vector<1x128x128xf32> to vector<128x128xf32>
    %cst_19 = arith.constant dense<0.000000e+00> : vector<32x128xf32>
    %42 = tpu.matmul %39, %41, %cst_19 {dimension_numbers = #tpu.dot_dimension_numbers<[1], [0], [0], [1], [0, 0, 1, 1], [], []>} : vector<32x128xf32>, vector<128x128xf32>, vector<32x128xf32> -> vector<32x128xf32>
    %43 = arith.addf %33, %42 : vector<32x128xf32>
    %44 = vector.extract_strided_slice %0 {offsets = [0, 4], sizes = [32, 1], strides = [1, 1]} : vector<32x128xi32> to vector<32x1xi32>
    %45 = vector.broadcast %44 : vector<32x1xi32> to vector<32x128xi32>
    %46 = arith.cmpi eq, %3, %45 : vector<32x128xi32>
    %47 = arith.extui %46 : vector<32x128xi1> to vector<32x128xi32>
    %48 = arith.sitofp %47 : vector<32x128xi32> to vector<32x128xf32>
    %cst_20 = arith.constant dense<0.000000e+00> : vector<32x128xf32>
    %49 = tpu.matmul %48, %1, %cst_20 {dimension_numbers = #tpu.dot_dimension_numbers<[1], [0], [0], [1], [0, 0, 1, 1], [], []>} : vector<32x128xf32>, vector<128x128xf32>, vector<32x128xf32> -> vector<32x128xf32>
    %c4 = arith.constant 4 : index
    %c0_21 = arith.constant 0 : index
    %c0_22 = arith.constant 0 : index
    %50 = vector.load %arg3[%c4, %c0_21, %c0_22] : memref<8x128x128xf32, #tpu.memory_space<vmem>>, vector<1x128x128xf32>
    %51 = vector.shape_cast %50 : vector<1x128x128xf32> to vector<128x128xf32>
    %cst_23 = arith.constant dense<0.000000e+00> : vector<32x128xf32>
    %52 = tpu.matmul %49, %51, %cst_23 {dimension_numbers = #tpu.dot_dimension_numbers<[1], [0], [0], [1], [0, 0, 1, 1], [], []>} : vector<32x128xf32>, vector<128x128xf32>, vector<32x128xf32> -> vector<32x128xf32>
    %53 = arith.addf %43, %52 : vector<32x128xf32>
    %54 = vector.extract_strided_slice %0 {offsets = [0, 5], sizes = [32, 1], strides = [1, 1]} : vector<32x128xi32> to vector<32x1xi32>
    %55 = vector.broadcast %54 : vector<32x1xi32> to vector<32x128xi32>
    %56 = arith.cmpi eq, %3, %55 : vector<32x128xi32>
    %57 = arith.extui %56 : vector<32x128xi1> to vector<32x128xi32>
    %58 = arith.sitofp %57 : vector<32x128xi32> to vector<32x128xf32>
    %cst_24 = arith.constant dense<0.000000e+00> : vector<32x128xf32>
    %59 = tpu.matmul %58, %1, %cst_24 {dimension_numbers = #tpu.dot_dimension_numbers<[1], [0], [0], [1], [0, 0, 1, 1], [], []>} : vector<32x128xf32>, vector<128x128xf32>, vector<32x128xf32> -> vector<32x128xf32>
    %c5 = arith.constant 5 : index
    %c0_25 = arith.constant 0 : index
    %c0_26 = arith.constant 0 : index
    %60 = vector.load %arg3[%c5, %c0_25, %c0_26] : memref<8x128x128xf32, #tpu.memory_space<vmem>>, vector<1x128x128xf32>
    %61 = vector.shape_cast %60 : vector<1x128x128xf32> to vector<128x128xf32>
    %cst_27 = arith.constant dense<0.000000e+00> : vector<32x128xf32>
    %62 = tpu.matmul %59, %61, %cst_27 {dimension_numbers = #tpu.dot_dimension_numbers<[1], [0], [0], [1], [0, 0, 1, 1], [], []>} : vector<32x128xf32>, vector<128x128xf32>, vector<32x128xf32> -> vector<32x128xf32>
    %63 = arith.addf %53, %62 : vector<32x128xf32>
    %64 = vector.extract_strided_slice %0 {offsets = [0, 6], sizes = [32, 1], strides = [1, 1]} : vector<32x128xi32> to vector<32x1xi32>
    %65 = vector.broadcast %64 : vector<32x1xi32> to vector<32x128xi32>
    %66 = arith.cmpi eq, %3, %65 : vector<32x128xi32>
    %67 = arith.extui %66 : vector<32x128xi1> to vector<32x128xi32>
    %68 = arith.sitofp %67 : vector<32x128xi32> to vector<32x128xf32>
    %cst_28 = arith.constant dense<0.000000e+00> : vector<32x128xf32>
    %69 = tpu.matmul %68, %1, %cst_28 {dimension_numbers = #tpu.dot_dimension_numbers<[1], [0], [0], [1], [0, 0, 1, 1], [], []>} : vector<32x128xf32>, vector<128x128xf32>, vector<32x128xf32> -> vector<32x128xf32>
    %c6 = arith.constant 6 : index
    %c0_29 = arith.constant 0 : index
    %c0_30 = arith.constant 0 : index
    %70 = vector.load %arg3[%c6, %c0_29, %c0_30] : memref<8x128x128xf32, #tpu.memory_space<vmem>>, vector<1x128x128xf32>
    %71 = vector.shape_cast %70 : vector<1x128x128xf32> to vector<128x128xf32>
    %cst_31 = arith.constant dense<0.000000e+00> : vector<32x128xf32>
    %72 = tpu.matmul %69, %71, %cst_31 {dimension_numbers = #tpu.dot_dimension_numbers<[1], [0], [0], [1], [0, 0, 1, 1], [], []>} : vector<32x128xf32>, vector<128x128xf32>, vector<32x128xf32> -> vector<32x128xf32>
    %73 = arith.addf %63, %72 : vector<32x128xf32>
    %74 = vector.extract_strided_slice %0 {offsets = [0, 7], sizes = [32, 1], strides = [1, 1]} : vector<32x128xi32> to vector<32x1xi32>
    %75 = vector.broadcast %74 : vector<32x1xi32> to vector<32x128xi32>
    %76 = arith.cmpi eq, %3, %75 : vector<32x128xi32>
    %77 = arith.extui %76 : vector<32x128xi1> to vector<32x128xi32>
    %78 = arith.sitofp %77 : vector<32x128xi32> to vector<32x128xf32>
    %cst_32 = arith.constant dense<0.000000e+00> : vector<32x128xf32>
    %79 = tpu.matmul %78, %1, %cst_32 {dimension_numbers = #tpu.dot_dimension_numbers<[1], [0], [0], [1], [0, 0, 1, 1], [], []>} : vector<32x128xf32>, vector<128x128xf32>, vector<32x128xf32> -> vector<32x128xf32>
    %c7 = arith.constant 7 : index
    %c0_33 = arith.constant 0 : index
    %c0_34 = arith.constant 0 : index
    %80 = vector.load %arg3[%c7, %c0_33, %c0_34] : memref<8x128x128xf32, #tpu.memory_space<vmem>>, vector<1x128x128xf32>
    %81 = vector.shape_cast %80 : vector<1x128x128xf32> to vector<128x128xf32>
    %cst_35 = arith.constant dense<0.000000e+00> : vector<32x128xf32>
    %82 = tpu.matmul %79, %81, %cst_35 {dimension_numbers = #tpu.dot_dimension_numbers<[1], [0], [0], [1], [0, 0, 1, 1], [], []>} : vector<32x128xf32>, vector<128x128xf32>, vector<32x128xf32> -> vector<32x128xf32>
    %83 = arith.addf %73, %82 : vector<32x128xf32>
    %84 = vector.extract_strided_slice %0 {offsets = [0, 0], sizes = [32, 1], strides = [1, 1]} : vector<32x128xi32> to vector<32x1xi32>
    %85 = vector.broadcast %84 : vector<32x1xi32> to vector<32x128xi32>
    %86 = arith.cmpi eq, %0, %85 : vector<32x128xi32>
    %87 = arith.extui %86 : vector<32x128xi1> to vector<32x128xi32>
    %88 = arith.sitofp %87 : vector<32x128xi32> to vector<32x128xf32>
    %cst_36 = arith.constant 5.000000e-01 : f32
    %89 = vector.broadcast %cst_36 : f32 to vector<32x128xf32>
    %90 = arith.mulf %88, %89 : vector<32x128xf32>
    %c0_37 = arith.constant 0 : index
    %c0_38 = arith.constant 0 : index
    %c0_39 = arith.constant 0 : index
    %91 = vector.load %arg4[%c0_37, %c0_38, %c0_39] : memref<8x128x128xf32, #tpu.memory_space<vmem>>, vector<1x128x128xf32>
    %92 = vector.shape_cast %91 : vector<1x128x128xf32> to vector<128x128xf32>
    %cst_40 = arith.constant dense<0.000000e+00> : vector<32x128xf32>
    %93 = tpu.matmul %90, %92, %cst_40 {dimension_numbers = #tpu.dot_dimension_numbers<[1], [0], [0], [1], [0, 0, 1, 1], [], []>} : vector<32x128xf32>, vector<128x128xf32>, vector<32x128xf32> -> vector<32x128xf32>
    %94 = arith.addf %83, %93 : vector<32x128xf32>
    %95 = vector.extract_strided_slice %0 {offsets = [0, 1], sizes = [32, 1], strides = [1, 1]} : vector<32x128xi32> to vector<32x1xi32>
    %96 = vector.broadcast %95 : vector<32x1xi32> to vector<32x128xi32>
    %97 = arith.cmpi eq, %0, %96 : vector<32x128xi32>
    %98 = arith.extui %97 : vector<32x128xi1> to vector<32x128xi32>
    %99 = arith.sitofp %98 : vector<32x128xi32> to vector<32x128xf32>
    %cst_41 = arith.constant 5.000000e-01 : f32
    %100 = vector.broadcast %cst_41 : f32 to vector<32x128xf32>
    %101 = arith.mulf %99, %100 : vector<32x128xf32>
    %c1_42 = arith.constant 1 : index
    %c0_43 = arith.constant 0 : index
    %c0_44 = arith.constant 0 : index
    %102 = vector.load %arg4[%c1_42, %c0_43, %c0_44] : memref<8x128x128xf32, #tpu.memory_space<vmem>>, vector<1x128x128xf32>
    %103 = vector.shape_cast %102 : vector<1x128x128xf32> to vector<128x128xf32>
    %cst_45 = arith.constant dense<0.000000e+00> : vector<32x128xf32>
    %104 = tpu.matmul %101, %103, %cst_45 {dimension_numbers = #tpu.dot_dimension_numbers<[1], [0], [0], [1], [0, 0, 1, 1], [], []>} : vector<32x128xf32>, vector<128x128xf32>, vector<32x128xf32> -> vector<32x128xf32>
    %105 = arith.addf %94, %104 : vector<32x128xf32>
    %106 = vector.extract_strided_slice %0 {offsets = [0, 2], sizes = [32, 1], strides = [1, 1]} : vector<32x128xi32> to vector<32x1xi32>
    %107 = vector.broadcast %106 : vector<32x1xi32> to vector<32x128xi32>
    %108 = arith.cmpi eq, %0, %107 : vector<32x128xi32>
    %109 = arith.extui %108 : vector<32x128xi1> to vector<32x128xi32>
    %110 = arith.sitofp %109 : vector<32x128xi32> to vector<32x128xf32>
    %cst_46 = arith.constant 5.000000e-01 : f32
    %111 = vector.broadcast %cst_46 : f32 to vector<32x128xf32>
    %112 = arith.mulf %110, %111 : vector<32x128xf32>
    %c2_47 = arith.constant 2 : index
    %c0_48 = arith.constant 0 : index
    %c0_49 = arith.constant 0 : index
    %113 = vector.load %arg4[%c2_47, %c0_48, %c0_49] : memref<8x128x128xf32, #tpu.memory_space<vmem>>, vector<1x128x128xf32>
    %114 = vector.shape_cast %113 : vector<1x128x128xf32> to vector<128x128xf32>
    %cst_50 = arith.constant dense<0.000000e+00> : vector<32x128xf32>
    %115 = tpu.matmul %112, %114, %cst_50 {dimension_numbers = #tpu.dot_dimension_numbers<[1], [0], [0], [1], [0, 0, 1, 1], [], []>} : vector<32x128xf32>, vector<128x128xf32>, vector<32x128xf32> -> vector<32x128xf32>
    %116 = arith.addf %105, %115 : vector<32x128xf32>
    %117 = vector.extract_strided_slice %0 {offsets = [0, 3], sizes = [32, 1], strides = [1, 1]} : vector<32x128xi32> to vector<32x1xi32>
    %118 = vector.broadcast %117 : vector<32x1xi32> to vector<32x128xi32>
    %119 = arith.cmpi eq, %0, %118 : vector<32x128xi32>
    %120 = arith.extui %119 : vector<32x128xi1> to vector<32x128xi32>
    %121 = arith.sitofp %120 : vector<32x128xi32> to vector<32x128xf32>
    %cst_51 = arith.constant 5.000000e-01 : f32
    %122 = vector.broadcast %cst_51 : f32 to vector<32x128xf32>
    %123 = arith.mulf %121, %122 : vector<32x128xf32>
    %c3_52 = arith.constant 3 : index
    %c0_53 = arith.constant 0 : index
    %c0_54 = arith.constant 0 : index
    %124 = vector.load %arg4[%c3_52, %c0_53, %c0_54] : memref<8x128x128xf32, #tpu.memory_space<vmem>>, vector<1x128x128xf32>
    %125 = vector.shape_cast %124 : vector<1x128x128xf32> to vector<128x128xf32>
    %cst_55 = arith.constant dense<0.000000e+00> : vector<32x128xf32>
    %126 = tpu.matmul %123, %125, %cst_55 {dimension_numbers = #tpu.dot_dimension_numbers<[1], [0], [0], [1], [0, 0, 1, 1], [], []>} : vector<32x128xf32>, vector<128x128xf32>, vector<32x128xf32> -> vector<32x128xf32>
    %127 = arith.addf %116, %126 : vector<32x128xf32>
    %128 = vector.extract_strided_slice %0 {offsets = [0, 4], sizes = [32, 1], strides = [1, 1]} : vector<32x128xi32> to vector<32x1xi32>
    %129 = vector.broadcast %128 : vector<32x1xi32> to vector<32x128xi32>
    %130 = arith.cmpi eq, %0, %129 : vector<32x128xi32>
    %131 = arith.extui %130 : vector<32x128xi1> to vector<32x128xi32>
    %132 = arith.sitofp %131 : vector<32x128xi32> to vector<32x128xf32>
    %cst_56 = arith.constant 5.000000e-01 : f32
    %133 = vector.broadcast %cst_56 : f32 to vector<32x128xf32>
    %134 = arith.mulf %132, %133 : vector<32x128xf32>
    %c4_57 = arith.constant 4 : index
    %c0_58 = arith.constant 0 : index
    %c0_59 = arith.constant 0 : index
    %135 = vector.load %arg4[%c4_57, %c0_58, %c0_59] : memref<8x128x128xf32, #tpu.memory_space<vmem>>, vector<1x128x128xf32>
    %136 = vector.shape_cast %135 : vector<1x128x128xf32> to vector<128x128xf32>
    %cst_60 = arith.constant dense<0.000000e+00> : vector<32x128xf32>
    %137 = tpu.matmul %134, %136, %cst_60 {dimension_numbers = #tpu.dot_dimension_numbers<[1], [0], [0], [1], [0, 0, 1, 1], [], []>} : vector<32x128xf32>, vector<128x128xf32>, vector<32x128xf32> -> vector<32x128xf32>
    %138 = arith.addf %127, %137 : vector<32x128xf32>
    %139 = vector.extract_strided_slice %0 {offsets = [0, 5], sizes = [32, 1], strides = [1, 1]} : vector<32x128xi32> to vector<32x1xi32>
    %140 = vector.broadcast %139 : vector<32x1xi32> to vector<32x128xi32>
    %141 = arith.cmpi eq, %0, %140 : vector<32x128xi32>
    %142 = arith.extui %141 : vector<32x128xi1> to vector<32x128xi32>
    %143 = arith.sitofp %142 : vector<32x128xi32> to vector<32x128xf32>
    %cst_61 = arith.constant 5.000000e-01 : f32
    %144 = vector.broadcast %cst_61 : f32 to vector<32x128xf32>
    %145 = arith.mulf %143, %144 : vector<32x128xf32>
    %c5_62 = arith.constant 5 : index
    %c0_63 = arith.constant 0 : index
    %c0_64 = arith.constant 0 : index
    %146 = vector.load %arg4[%c5_62, %c0_63, %c0_64] : memref<8x128x128xf32, #tpu.memory_space<vmem>>, vector<1x128x128xf32>
    %147 = vector.shape_cast %146 : vector<1x128x128xf32> to vector<128x128xf32>
    %cst_65 = arith.constant dense<0.000000e+00> : vector<32x128xf32>
    %148 = tpu.matmul %145, %147, %cst_65 {dimension_numbers = #tpu.dot_dimension_numbers<[1], [0], [0], [1], [0, 0, 1, 1], [], []>} : vector<32x128xf32>, vector<128x128xf32>, vector<32x128xf32> -> vector<32x128xf32>
    %149 = arith.addf %138, %148 : vector<32x128xf32>
    %150 = vector.extract_strided_slice %0 {offsets = [0, 6], sizes = [32, 1], strides = [1, 1]} : vector<32x128xi32> to vector<32x1xi32>
    %151 = vector.broadcast %150 : vector<32x1xi32> to vector<32x128xi32>
    %152 = arith.cmpi eq, %0, %151 : vector<32x128xi32>
    %153 = arith.extui %152 : vector<32x128xi1> to vector<32x128xi32>
    %154 = arith.sitofp %153 : vector<32x128xi32> to vector<32x128xf32>
    %cst_66 = arith.constant 5.000000e-01 : f32
    %155 = vector.broadcast %cst_66 : f32 to vector<32x128xf32>
    %156 = arith.mulf %154, %155 : vector<32x128xf32>
    %c6_67 = arith.constant 6 : index
    %c0_68 = arith.constant 0 : index
    %c0_69 = arith.constant 0 : index
    %157 = vector.load %arg4[%c6_67, %c0_68, %c0_69] : memref<8x128x128xf32, #tpu.memory_space<vmem>>, vector<1x128x128xf32>
    %158 = vector.shape_cast %157 : vector<1x128x128xf32> to vector<128x128xf32>
    %cst_70 = arith.constant dense<0.000000e+00> : vector<32x128xf32>
    %159 = tpu.matmul %156, %158, %cst_70 {dimension_numbers = #tpu.dot_dimension_numbers<[1], [0], [0], [1], [0, 0, 1, 1], [], []>} : vector<32x128xf32>, vector<128x128xf32>, vector<32x128xf32> -> vector<32x128xf32>
    %160 = arith.addf %149, %159 : vector<32x128xf32>
    %161 = vector.extract_strided_slice %0 {offsets = [0, 7], sizes = [32, 1], strides = [1, 1]} : vector<32x128xi32> to vector<32x1xi32>
    %162 = vector.broadcast %161 : vector<32x1xi32> to vector<32x128xi32>
    %163 = arith.cmpi eq, %0, %162 : vector<32x128xi32>
    %164 = arith.extui %163 : vector<32x128xi1> to vector<32x128xi32>
    %165 = arith.sitofp %164 : vector<32x128xi32> to vector<32x128xf32>
    %cst_71 = arith.constant 5.000000e-01 : f32
    %166 = vector.broadcast %cst_71 : f32 to vector<32x128xf32>
    %167 = arith.mulf %165, %166 : vector<32x128xf32>
    %c7_72 = arith.constant 7 : index
    %c0_73 = arith.constant 0 : index
    %c0_74 = arith.constant 0 : index
    %168 = vector.load %arg4[%c7_72, %c0_73, %c0_74] : memref<8x128x128xf32, #tpu.memory_space<vmem>>, vector<1x128x128xf32>
    %169 = vector.shape_cast %168 : vector<1x128x128xf32> to vector<128x128xf32>
    %cst_75 = arith.constant dense<0.000000e+00> : vector<32x128xf32>
    %170 = tpu.matmul %167, %169, %cst_75 {dimension_numbers = #tpu.dot_dimension_numbers<[1], [0], [0], [1], [0, 0, 1, 1], [], []>} : vector<32x128xf32>, vector<128x128xf32>, vector<32x128xf32> -> vector<32x128xf32>
    %171 = arith.addf %160, %170 : vector<32x128xf32>
    %c0_76 = arith.constant 0 : index
    %c0_77 = arith.constant 0 : index
    %172 = vector.load %arg5[%c0_76, %c0_77] : memref<1x128xf32, #tpu.memory_space<vmem>>, vector<1x128xf32>
    %173 = vector.broadcast %172 : vector<1x128xf32> to vector<32x128xf32>
    %174 = arith.addf %171, %173 : vector<32x128xf32>
    %cst_78 = arith.constant 0.000000e+00 : f32
    %175 = vector.broadcast %cst_78 : f32 to vector<32x128xf32>
    %176 = arith.maximumf %174, %175 : vector<32x128xf32>
    %c0_79 = arith.constant 0 : index
    %c0_80 = arith.constant 0 : index
    %c0_81 = arith.constant 0 : index
    %177 = vector.load %arg6[%c0_79, %c0_80, %c0_81] : memref<1x128x128xf32, #tpu.memory_space<vmem>>, vector<1x128x128xf32>
    %178 = vector.shape_cast %177 : vector<1x128x128xf32> to vector<128x128xf32>
    %cst_82 = arith.constant dense<0.000000e+00> : vector<32x128xf32>
    %179 = tpu.matmul %176, %178, %cst_82 {dimension_numbers = #tpu.dot_dimension_numbers<[1], [0], [0], [1], [0, 0, 1, 1], [], []>} : vector<32x128xf32>, vector<128x128xf32>, vector<32x128xf32> -> vector<32x128xf32>
    %c0_83 = arith.constant 0 : index
    %c0_84 = arith.constant 0 : index
    %c0_85 = arith.constant 0 : index
    %180 = vector.load %arg7[%c0_83, %c0_84, %c0_85] : memref<1x1x128xf32, #tpu.memory_space<vmem>>, vector<1x1x128xf32>
    %181 = vector.shape_cast %180 : vector<1x1x128xf32> to vector<1x128xf32>
    %182 = vector.broadcast %181 : vector<1x128xf32> to vector<32x128xf32>
    %183 = arith.addf %179, %182 : vector<32x128xf32>
    %cst_86 = arith.constant 0.000000e+00 : f32
    %184 = vector.broadcast %cst_86 : f32 to vector<32x128xf32>
    %185 = arith.maximumf %183, %184 : vector<32x128xf32>
    %c0_87 = arith.constant 0 : index
    %c0_88 = arith.constant 0 : index
    %186 = vector.load %arg8[%c0_87, %c0_88] : memref<128x128xf32, #tpu.memory_space<vmem>>, vector<128x128xf32>
    %cst_89 = arith.constant dense<0.000000e+00> : vector<32x128xf32>
    %187 = tpu.matmul %185, %186, %cst_89 {dimension_numbers = #tpu.dot_dimension_numbers<[1], [0], [0], [1], [0, 0, 1, 1], [], []>} : vector<32x128xf32>, vector<128x128xf32>, vector<32x128xf32> -> vector<32x128xf32>
    %c0_90 = arith.constant 0 : index
    %c0_91 = arith.constant 0 : index
    %188 = vector.load %arg9[%c0_90, %c0_91] : memref<1x128xf32, #tpu.memory_space<vmem>>, vector<1x128xf32>
    %189 = vector.broadcast %188 : vector<1x128xf32> to vector<32x128xf32>
    %190 = arith.addf %187, %189 : vector<32x128xf32>
    %c0_92 = arith.constant 0 : index
    %c0_93 = arith.constant 0 : index
    %191 = vector.load %arg10[%c0_92, %c0_93] : memref<32x128xf32, #tpu.memory_space<vmem>>, vector<32x128xf32>
    tpu.vector_store %arg10[%c0_92, %c0_93], %190 {strides = array<i32>} : memref<32x128xf32, #tpu.memory_space<vmem>>, vector<32x128xf32>,
    return
  }
  func.func @transform_0(%arg0: i32) -> (i32, i32) {
    %c0_i32 = arith.constant 0 : i32
    %c0_i32_0 = arith.constant 0 : i32
    return %arg0, %c0_i32 : i32, i32
  }
  func.func @transform_1(%arg0: i32) -> (i32, i32) {
    %c0_i32 = arith.constant 0 : i32
    %c0_i32_0 = arith.constant 0 : i32
    %c0_i32_1 = arith.constant 0 : i32
    return %c0_i32, %c0_i32_0 : i32, i32
  }
  func.func @transform_2(%arg0: i32) -> (i32, i32, i32) {
    %c0_i32 = arith.constant 0 : i32
    %c0_i32_0 = arith.constant 0 : i32
    %c0_i32_1 = arith.constant 0 : i32
    %c0_i32_2 = arith.constant 0 : i32
    return %c0_i32, %c0_i32_0, %c0_i32_1 : i32, i32, i32
  }
  func.func @transform_3(%arg0: i32) -> (i32, i32, i32) {
    %c0_i32 = arith.constant 0 : i32
    %c0_i32_0 = arith.constant 0 : i32
    %c0_i32_1 = arith.constant 0 : i32
    %c0_i32_2 = arith.constant 0 : i32
    return %c0_i32, %c0_i32_0, %c0_i32_1 : i32, i32, i32
  }
  func.func @transform_4(%arg0: i32) -> (i32, i32) {
    %c0_i32 = arith.constant 0 : i32
    %c0_i32_0 = arith.constant 0 : i32
    %c0_i32_1 = arith.constant 0 : i32
    return %c0_i32, %c0_i32_0 : i32, i32
  }
  func.func @transform_5(%arg0: i32) -> (i32, i32, i32) {
    %c0_i32 = arith.constant 0 : i32
    %c0_i32_0 = arith.constant 0 : i32
    %c0_i32_1 = arith.constant 0 : i32
    %c0_i32_2 = arith.constant 0 : i32
    return %c0_i32, %c0_i32_0, %c0_i32_1 : i32, i32, i32
  }
  func.func @transform_6(%arg0: i32) -> (i32, i32, i32) {
    %c0_i32 = arith.constant 0 : i32
    %c0_i32_0 = arith.constant 0 : i32
    %c0_i32_1 = arith.constant 0 : i32
    %c0_i32_2 = arith.constant 0 : i32
    return %c0_i32, %c0_i32_0, %c0_i32_1 : i32, i32, i32
  }
  func.func @transform_7(%arg0: i32) -> (i32, i32) {
    %c0_i32 = arith.constant 0 : i32
    %c0_i32_0 = arith.constant 0 : i32
    %c0_i32_1 = arith.constant 0 : i32
    return %c0_i32, %c0_i32_0 : i32, i32
  }
  func.func @transform_8(%arg0: i32) -> (i32, i32) {
    %c0_i32 = arith.constant 0 : i32
    %c0_i32_0 = arith.constant 0 : i32
    %c0_i32_1 = arith.constant 0 : i32
    return %c0_i32, %c0_i32_0 : i32, i32
  }
  func.func @transform_9(%arg0: i32) -> (i32, i32) {
    %c0_i32 = arith.constant 0 : i32
    %c0_i32_0 = arith.constant 0 : i32
    return %arg0, %c0_i32 : i32, i32
  }
}

</mosaic_0001>

<llo_original>
// kernel: tpu_custom_call.1
$region0: #{tpu_custom_call.1}
  #allocation0 [shape = 'u32[]', space=smem, size = 0x4, offset = 0x4, fixed_abs, tag = 'smem constant byte address 0x4 - core index']
  #allocation1 [shape = 'u32[144,128]{1,0:T(1,128)}', space=vmem, size = 0x12000, scoped, tag = 'internal scratch']
  %s0 = inlined_call_operand.hbm [shape: s32[64,128], index: 0, kind: input, shape index: {}]
  %s1 = inlined_call_operand.hbm [shape: f32[128,128], index: 1, kind: input, shape index: {}]
  %s2 = inlined_call_operand.hbm [shape: f32[8,128,128], index: 2, kind: input, shape index: {}]
  %s3 = inlined_call_operand.hbm [shape: f32[8,128,128], index: 3, kind: input, shape index: {}]
  %s4 = inlined_call_operand.vmem [shape: f32[1,128], index: 4, kind: input, shape index: {}]
  %s5 = inlined_call_operand.hbm [shape: f32[1,128,128], index: 5, kind: input, shape index: {}]
  %s6 = inlined_call_operand.vmem [shape: f32[1,1,128], index: 6, kind: input, shape index: {}]
  %s7 = inlined_call_operand.hbm [shape: f32[128,128], index: 7, kind: input, shape index: {}]
  %s8 = inlined_call_operand.vmem [shape: f32[1,128], index: 8, kind: input, shape index: {}]
  %s9 = inlined_call_operand.hbm [shape: f32[64,128], index: 9, kind: output, shape index: {}]
  %s10 = sld [smem:[#allocation0]]
  $region93: #{tpu_custom_call.1} parent=0
    _
  %s12 = ssub.s32 1, %s10
  %s13 = scalar_select 0, %s12, %s10
  $region1: #{tpu_custom_call.1} parent=0
    #allocation2 [shape = 'u8[32768]{0}', space=vmem, size = 0x8000, scoped, tag = 'input window, operand 0']
    #allocation3 [shape = 's32[2]{0}', space=sflag, size = 0x8, scoped, tag = 'scoped memory for tpu_custom_call.1']
    #allocation4 [shape = 's32[2]{0}', space=sflag, size = 0x8, scoped, tag = 'scoped memory for tpu_custom_call.1']
    #allocation5 [shape = 'u8[65536]{0}', space=vmem, size = 0x10000, scoped, tag = 'input window, operand 1, single buffered']
    #allocation6 [shape = 's32[1]{0}', space=sflag, size = 0x4, scoped, tag = 'scoped memory for tpu_custom_call.1']
    #allocation7 [shape = 'u8[524288]{0}', space=vmem, size = 0x80000, scoped, tag = 'input window, operand 2, single buffered']
    #allocation8 [shape = 'u8[524288]{0}', space=vmem, size = 0x80000, scoped, tag = 'input window, operand 3, single buffered']
    #allocation9 [shape = 's32[1]{0}', space=sflag, size = 0x4, scoped, tag = 'scoped memory for tpu_custom_call.1']
    #allocation10 [shape = 'u8[65536]{0}', space=vmem, size = 0x10000, scoped, tag = 'input window, operand 5, single buffered']
    #allocation11 [shape = 'u8[65536]{0}', space=vmem, size = 0x10000, scoped, tag = 'input window, operand 7, single buffered']
    #allocation12 [shape = 's32[1]{0}', space=sflag, size = 0x4, scoped, tag = 'scoped memory for tpu_custom_call.1']
    #allocation13 [shape = 'u8[32768]{0}', space=vmem, size = 0x8000, scoped, tag = 'output window, operand 0']
    %14 = vsyncpa [#allocation3], 0
    %s15 = scalar_lea.sflag [#allocation3], 1
    %16 = vsyncpa %s15, 0
    %17 = vsyncpa [#allocation6], 0
    %18 = vsyncpa [#allocation9], 0
    %19 = vsyncpa [#allocation12], 0
    %20 = vsyncpa [#allocation4], 0
    %s21 = scalar_lea.sflag [#allocation4], 1
    %22 = vsyncpa %s21, 0
    loop: start=0, step=1, limit=4
    $region2: #{tpu_custom_call.1} parent=1 // loop_pre_header
      _
    $region3: #{tpu_custom_call.1} parent=1 // loop_header
      %s24 = sphi 0, %s28
      %p25 = scmp.ge.s32.totalorder %s24, 4
      %s34 = sphi 0, %s36
      %s37 = sphi 0, %s34
      %s38 = sphi 0, %s37
      %s54 = sphi 0, %s38
      %s58 = sphi 0, %s58
      %s60 = sphi 0, %s58
      %s61 = sphi 0, %s60
      %s75 = sphi 0, %s61
      %s79 = sphi 0, %s79
      %s81 = sphi 0, %s79
      %s82 = sphi 0, %s81
      %s96 = sphi 0, %s82
      %s100 = sphi 0, %s100
      %s102 = sphi 0, %s100
      %s103 = sphi 0, %s102
      %s117 = sphi 0, %s103
      %s121 = sphi 0, %s121
      %s123 = sphi 0, %s121
      %s124 = sphi 0, %s123
      %s138 = sphi 0, %s124
      %s142 = sphi 0, %s142
      %s144 = sphi 0, %s142
      %s145 = sphi 0, %s144
      %s159 = sphi 0, %s145
      %s163 = sphi 0, %s163
      %s165 = sphi 0, %s163
      %s166 = sphi 0, %s165
      %s180 = sphi 0, %s166
      %s184 = sphi 0, %s184
      %s186 = sphi 0, %s184
      %s187 = sphi 0, %s186
      %s201 = sphi 0, %s187
      %s205 = sphi 0, %s205
      %s207 = sphi 0, %s205
      %s208 = sphi 0, %s207
      %s222 = sphi 0, %s208
      %s228 = sphi 0, %s230
      %s231 = sphi 0, %s228
      %s232 = sphi 0, %s231
      %s248 = sphi 0, %s232
    $region4: #{tpu_custom_call.1} parent=1 // loop_header_branch
      %27 = sbr.rel (%p25) target = $region8
    $region5: #{tpu_custom_call.1} parent=1 // loop_body
      %s29 = ssub.s32 %s24, 1
      %s30 = ssub.s32 %s24, 2
      %s31 = sadd.s32 %s24, 1
      %s32 = ssub.s32 %s24, %s31
      %p33 = scmp.eq.s32.totalorder %s32, 0
      %s35 = sadd.s32 %s34, 1
      %s36 = scalar_select %p33, %s34, %s35
      %p39 = pneg %p33
      %p40 = scmp.eq.s32.totalorder %s24, 1
      %p41 = por %p39, %p40
      %p42 = scmp.ne.s32.totalorder %s34, %s37
      %p43 = scmp.eq.s32.totalorder %s24, 0
      %p44 = por %p42, %p43
      %p45 = scmp.ne.s32.totalorder %s34, %s37
      %p46 = scmp.eq.s32.totalorder %s29, 1
      %p47 = por %p45, %p46
      %p48 = scmp.ne.s32.totalorder %s37, %s38
      %p49 = scmp.eq.s32.totalorder %s29, 0
      %p50 = por %p48, %p49
      %p51 = scmp.ne.s32.totalorder %s37, %s38
      %p52 = scmp.eq.s32.totalorder %s30, 1
      %p53 = por %p51, %p52
      %p55 = scmp.ne.s32.totalorder %s38, %s54
      %p56 = scmp.eq.s32.totalorder %s30, 0
      %p57 = por %p55, %p56
      %s59 = sadd.s32 %s58, 1
      %p62 = scmp.eq.s32.totalorder %s24, 1
      %p63 = scmp.ne.s32.totalorder %s58, %s60
      %p64 = scmp.eq.s32.totalorder %s24, 0
      %p65 = por %p63, %p64
      %p66 = scmp.ne.s32.totalorder %s58, %s60
      %p67 = scmp.eq.s32.totalorder %s29, 1
      %p68 = por %p66, %p67
      %p69 = scmp.ne.s32.totalorder %s60, %s61
      %p70 = scmp.eq.s32.totalorder %s29, 0
      %p71 = por %p69, %p70
      %p72 = scmp.ne.s32.totalorder %s60, %s61
      %p73 = scmp.eq.s32.totalorder %s30, 1
      %p74 = por %p72, %p73
      %p76 = scmp.ne.s32.totalorder %s61, %s75
      %p77 = scmp.eq.s32.totalorder %s30, 0
      %p78 = por %p76, %p77
      %s80 = sadd.s32 %s79, 1
      %p83 = scmp.eq.s32.totalorder %s24, 1
      %p84 = scmp.ne.s32.totalorder %s79, %s81
      %p85 = scmp.eq.s32.totalorder %s24, 0
      %p86 = por %p84, %p85
      %p87 = scmp.ne.s32.totalorder %s79, %s81
      %p88 = scmp.eq.s32.totalorder %s29, 1
      %p89 = por %p87, %p88
      %p90 = scmp.ne.s32.totalorder %s81, %s82
      %p91 = scmp.eq.s32.totalorder %s29, 0
      %p92 = por %p90, %p91
      %p93 = scmp.ne.s32.totalorder %s81, %s82
      %p94 = scmp.eq.s32.totalorder %s30, 1
      %p95 = por %p93, %p94
      %p97 = scmp.ne.s32.totalorder %s82, %s96
      %p98 = scmp.eq.s32.totalorder %s30, 0
      %p99 = por %p97, %p98
      %s101 = sadd.s32 %s100, 1
      %p104 = scmp.eq.s32.totalorder %s24, 1
      %p105 = scmp.ne.s32.totalorder %s100, %s102
      %p106 = scmp.eq.s32.totalorder %s24, 0
      %p107 = por %p105, %p106
      %p108 = scmp.ne.s32.totalorder %s100, %s102
      %p109 = scmp.eq.s32.totalorder %s29, 1
      %p110 = por %p108, %p109
      %p111 = scmp.ne.s32.totalorder %s102, %s103
      %p112 = scmp.eq.s32.totalorder %s29, 0
      %p113 = por %p111, %p112
      %p114 = scmp.ne.s32.totalorder %s102, %s103
      %p115 = scmp.eq.s32.totalorder %s30, 1
      %p116 = por %p114, %p115
      %p118 = scmp.ne.s32.totalorder %s103, %s117
      %p119 = scmp.eq.s32.totalorder %s30, 0
      %p120 = por %p118, %p119
      %s122 = sadd.s32 %s121, 1
      %p125 = scmp.eq.s32.totalorder %s24, 1
      %p126 = scmp.ne.s32.totalorder %s121, %s123
      %p127 = scmp.eq.s32.totalorder %s24, 0
      %p128 = por %p126, %p127
      %p129 = scmp.ne.s32.totalorder %s121, %s123
      %p130 = scmp.eq.s32.totalorder %s29, 1
      %p131 = por %p129, %p130
      %p132 = scmp.ne.s32.totalorder %s123, %s124
      %p133 = scmp.eq.s32.totalorder %s29, 0
      %p134 = por %p132, %p133
      %p135 = scmp.ne.s32.totalorder %s123, %s124
      %p136 = scmp.eq.s32.totalorder %s30, 1
      %p137 = por %p135, %p136
      %p139 = scmp.ne.s32.totalorder %s124, %s138
      %p140 = scmp.eq.s32.totalorder %s30, 0
      %p141 = por %p139, %p140
      %s143 = sadd.s32 %s142, 1
      %p146 = scmp.eq.s32.totalorder %s24, 1
      %p147 = scmp.ne.s32.totalorder %s142, %s144
      %p148 = scmp.eq.s32.totalorder %s24, 0
      %p149 = por %p147, %p148
      %p150 = scmp.ne.s32.totalorder %s142, %s144
      %p151 = scmp.eq.s32.totalorder %s29, 1
      %p152 = por %p150, %p151
      %p153 = scmp.ne.s32.totalorder %s144, %s145
      %p154 = scmp.eq.s32.totalorder %s29, 0
      %p155 = por %p153, %p154
      %p156 = scmp.ne.s32.totalorder %s144, %s145
      %p157 = scmp.eq.s32.totalorder %s30, 1
      %p158 = por %p156, %p157
      %p160 = scmp.ne.s32.totalorder %s145, %s159
      %p161 = scmp.eq.s32.totalorder %s30, 0
      %p162 = por %p160, %p161
      %s164 = sadd.s32 %s163, 1
      %p167 = scmp.eq.s32.totalorder %s24, 1
      %p168 = scmp.ne.s32.totalorder %s163, %s165
      %p169 = scmp.eq.s32.totalorder %s24, 0
      %p170 = por %p168, %p169
      %p171 = scmp.ne.s32.totalorder %s163, %s165
      %p172 = scmp.eq.s32.totalorder %s29, 1
      %p173 = por %p171, %p172
      %p174 = scmp.ne.s32.totalorder %s165, %s166
      %p175 = scmp.eq.s32.totalorder %s29, 0
      %p176 = por %p174, %p175
      %p177 = scmp.ne.s32.totalorder %s165, %s166
      %p178 = scmp.eq.s32.totalorder %s30, 1
      %p179 = por %p177, %p178
      %p181 = scmp.ne.s32.totalorder %s166, %s180
      %p182 = scmp.eq.s32.totalorder %s30, 0
      %p183 = por %p181, %p182
      %s185 = sadd.s32 %s184, 1
      %p188 = scmp.eq.s32.totalorder %s24, 1
      %p189 = scmp.ne.s32.totalorder %s184, %s186
      %p190 = scmp.eq.s32.totalorder %s24, 0
      %p191 = por %p189, %p190
      %p192 = scmp.ne.s32.totalorder %s184, %s186
      %p193 = scmp.eq.s32.totalorder %s29, 1
      %p194 = por %p192, %p193
      %p195 = scmp.ne.s32.totalorder %s186, %s187
      %p196 = scmp.eq.s32.totalorder %s29, 0
      %p197 = por %p195, %p196
      %p198 = scmp.ne.s32.totalorder %s186, %s187
      %p199 = scmp.eq.s32.totalorder %s30, 1
      %p200 = por %p198, %p199
      %p202 = scmp.ne.s32.totalorder %s187, %s201
      %p203 = scmp.eq.s32.totalorder %s30, 0
      %p204 = por %p202, %p203
      %s206 = sadd.s32 %s205, 1
      %p209 = scmp.eq.s32.totalorder %s24, 1
      %p210 = scmp.ne.s32.totalorder %s205, %s207
      %p211 = scmp.eq.s32.totalorder %s24, 0
      %p212 = por %p210, %p211
      %p213 = scmp.ne.s32.totalorder %s205, %s207
      %p214 = scmp.eq.s32.totalorder %s29, 1
      %p215 = por %p213, %p214
      %p216 = scmp.ne.s32.totalorder %s207, %s208
      %p217 = scmp.eq.s32.totalorder %s29, 0
      %p218 = por %p216, %p217
      %p219 = scmp.ne.s32.totalorder %s207, %s208
      %p220 = scmp.eq.s32.totalorder %s30, 1
      %p221 = por %p219, %p220
      %p223 = scmp.ne.s32.totalorder %s208, %s222
      %p224 = scmp.eq.s32.totalorder %s30, 0
      %p225 = por %p223, %p224
      %s226 = ssub.s32 %s24, %s31
      %p227 = scmp.eq.s32.totalorder %s226, 0
      %s229 = sadd.s32 %s228, 1
      %s230 = scalar_select %p227, %s228, %s229
      %p233 = pneg %p227
      %p234 = scmp.eq.s32.totalorder %s24, 1
      %p235 = por %p233, %p234
      %p236 = scmp.ne.s32.totalorder %s228, %s231
      %p237 = scmp.eq.s32.totalorder %s24, 0
      %p238 = por %p236, %p237
      %p239 = scmp.ne.s32.totalorder %s228, %s231
      %p240 = scmp.eq.s32.totalorder %s29, 1
      %p241 = por %p239, %p240
      %p242 = scmp.ne.s32.totalorder %s231, %s232
      %p243 = scmp.eq.s32.totalorder %s29, 0
      %p244 = por %p242, %p243
      %p245 = scmp.ne.s32.totalorder %s231, %s232
      %p246 = scmp.eq.s32.totalorder %s30, 1
      %p247 = por %p245, %p246
      %p249 = scmp.ne.s32.totalorder %s232, %s248
      %p250 = scmp.eq.s32.totalorder %s30, 0
      %p251 = por %p249, %p250
      %p252 = scmp.le.s32.totalorder 1, %s24
      %p253 = scmp.lt.s32.totalorder %s24, 3
      %p254 = pnand %p252, %p253
      %p255 = pneg %p254
      // Predicated region
      $region9: #{tpu_custom_call.1} parent=5 // pred_check
        _
      $region10: #{tpu_custom_call.1} parent=5 // pred_check_branch
        %257 = sbr.rel (%p254) target = $region12
      $region11: #{tpu_custom_call.1} parent=5 // pred_region
        %s258 = ssub.s32 %s24, 1
        // Predicated region
        $region13: #{tpu_custom_call.1} parent=11 // pred_check
          %p259 = pneg %p71
        $region14: #{tpu_custom_call.1} parent=11 // pred_check_branch
          %261 = sbr.rel (%p259) target = $region16
        $region15: #{tpu_custom_call.1} parent=11 // pred_region
          %s263 = ssub.s32 2048, 2048
          %264 = vsyncadd [#allocation6], %s263
          %s265 = sshll.u32 [#allocation5], 4
          %s266 = int_to_ptr.vmem [resolvable:$true] %s265
          %271 = dma.hbm_to_vmem [thread:$0]  %s1, 2048, %s266, [#allocation6], 128, 128, 8
        $region16: #{tpu_custom_call.1} parent=11 // pred_fallthru
          _
        // Predicated region
        $region17: #{tpu_custom_call.1} parent=11 // pred_check
          %p272 = pneg %p92
        $region18: #{tpu_custom_call.1} parent=11 // pred_check_branch
          %274 = sbr.rel (%p272) target = $region20
        $region19: #{tpu_custom_call.1} parent=11 // pred_region
          %s276 = ssub.s32 16384, 16384
          %277 = vsyncadd [#allocation6], %s276
          %s278 = sshll.u32 [#allocation7], 4
          %s279 = int_to_ptr.vmem [resolvable:$true] %s278
          %284 = dma.hbm_to_vmem [thread:$0]  %s2, 16384, %s279, [#allocation6], 128, 128, 8
        $region20: #{tpu_custom_call.1} parent=11 // pred_fallthru
          _
        // Predicated region
        $region21: #{tpu_custom_call.1} parent=11 // pred_check
          %p285 = pneg %p113
        $region22: #{tpu_custom_call.1} parent=11 // pred_check_branch
          %287 = sbr.rel (%p285) target = $region24
        $region23: #{tpu_custom_call.1} parent=11 // pred_region
          %s289 = ssub.s32 16384, 16384
          %290 = vsyncadd [#allocation9], %s289
          %s291 = sshll.u32 [#allocation8], 4
          %s292 = int_to_ptr.vmem [resolvable:$true] %s291
          %297 = dma.hbm_to_vmem [thread:$0]  %s3, 16384, %s292, [#allocation9], 128, 128, 8
        $region24: #{tpu_custom_call.1} parent=11 // pred_fallthru
          _
        // Predicated region
        $region25: #{tpu_custom_call.1} parent=11 // pred_check
          %p298 = pneg %p134
        $region26: #{tpu_custom_call.1} parent=11 // pred_check_branch
          %300 = sbr.rel (%p298) target = $region28
        $region27: #{tpu_custom_call.1} parent=11 // pred_region
          _
        $region28: #{tpu_custom_call.1} parent=11 // pred_fallthru
          _
        // Predicated region
        $region29: #{tpu_custom_call.1} parent=11 // pred_check
          %p301 = pneg %p155
        $region30: #{tpu_custom_call.1} parent=11 // pred_check_branch
          %303 = sbr.rel (%p301) target = $region32
        $region31: #{tpu_custom_call.1} parent=11 // pred_region
          %s305 = ssub.s32 2048, 2048
          %306 = vsyncadd [#allocation9], %s305
          %s307 = sshll.u32 [#allocation10], 4
          %s308 = int_to_ptr.vmem [resolvable:$true] %s307
          %313 = dma.hbm_to_vmem [thread:$0]  %s5, 2048, %s308, [#allocation9], 128, 128, 8
        $region32: #{tpu_custom_call.1} parent=11 // pred_fallthru
          _
        // Predicated region
        $region33: #{tpu_custom_call.1} parent=11 // pred_check
          %p314 = pneg %p176
        $region34: #{tpu_custom_call.1} parent=11 // pred_check_branch
          %316 = sbr.rel (%p314) target = $region36
        $region35: #{tpu_custom_call.1} parent=11 // pred_region
          _
        $region36: #{tpu_custom_call.1} parent=11 // pred_fallthru
          _
        // Predicated region
        $region37: #{tpu_custom_call.1} parent=11 // pred_check
          %p317 = pneg %p197
        $region38: #{tpu_custom_call.1} parent=11 // pred_check_branch
          %319 = sbr.rel (%p317) target = $region40
        $region39: #{tpu_custom_call.1} parent=11 // pred_region
          %s321 = ssub.s32 2048, 2048
          %322 = vsyncadd [#allocation12], %s321
          %s323 = sshll.u32 [#allocation11], 4
          %s324 = int_to_ptr.vmem [resolvable:$true] %s323
          %329 = dma.hbm_to_vmem [thread:$0]  %s7, 2048, %s324, [#allocation12], 128, 128, 8
        $region40: #{tpu_custom_call.1} parent=11 // pred_fallthru
          _
        // Predicated region
        $region41: #{tpu_custom_call.1} parent=11 // pred_check
          %p330 = pneg %p218
        $region42: #{tpu_custom_call.1} parent=11 // pred_check_branch
          %332 = sbr.rel (%p330) target = $region44
        $region43: #{tpu_custom_call.1} parent=11 // pred_region
          _
        $region44: #{tpu_custom_call.1} parent=11 // pred_fallthru
          _
      $region12: #{tpu_custom_call.1} parent=5 // pred_fallthru
        _
      %p333 = scmp.lt.s32.totalorder %s24, 2
      // Predicated region
      $region45: #{tpu_custom_call.1} parent=5 // pred_check
        %p334 = pneg %p333
      $region46: #{tpu_custom_call.1} parent=5 // pred_check_branch
        %336 = sbr.rel (%p334) target = $region48
      $region47: #{tpu_custom_call.1} parent=5 // pred_region
        // Predicated region
        $region49: #{tpu_custom_call.1} parent=47 // pred_check
          %p337 = pneg %p44
        $region50: #{tpu_custom_call.1} parent=47 // pred_check_branch
          %339 = sbr.rel (%p337) target = $region52
        $region51: #{tpu_custom_call.1} parent=47 // pred_region
          %s340 = sand.u32 %s34, 1
          %s341 = scalar_lea.sflag [#allocation3], %s340
          %s342 = sand.u32 %s34, 1
          %s343 = smul.addr %s342, 32
          %s344 = scalar_lea.vmem [#allocation2], %s343
          %s345 = smul.u32 4, %s24
          %s347 = ssub.s32 512, 512
          %348 = vsyncadd %s341, %s347
          %s349 = smul.addr %s345, 128
          %s350 = scalar_lea.hbm %s0, %s349
          %s351 = sshll.u32 %s344, 4
          %s352 = int_to_ptr.vmem [resolvable:$true] %s351
          %357 = dma.hbm_to_vmem [thread:$0]  %s350, 512, %s352, %s341, 128, 128, 8
        $region52: #{tpu_custom_call.1} parent=47 // pred_fallthru
          _
      $region48: #{tpu_custom_call.1} parent=5 // pred_fallthru
        _
      %p358 = scmp.le.s32.totalorder 1, %s24
      %p359 = scmp.lt.s32.totalorder %s24, 3
      %p360 = pnand %p358, %p359
      %p361 = pneg %p360
      // Predicated region
      $region53: #{tpu_custom_call.1} parent=5 // pred_check
        _
      $region54: #{tpu_custom_call.1} parent=5 // pred_check_branch
        %363 = sbr.rel (%p360) target = $region56
      $region55: #{tpu_custom_call.1} parent=5 // pred_region
        %s364 = ssub.s32 %s24, 1
        %s365 = sand.u32 %s37, 1
        %s366 = scalar_lea.sflag [#allocation3], %s365
        %s367 = sand.u32 %s37, 1
        %s368 = smul.addr %s367, 32
        %s369 = scalar_lea.vmem [#allocation2], %s368
        // Predicated region
        $region57: #{tpu_custom_call.1} parent=55 // pred_check
          %p370 = pneg %p50
        $region58: #{tpu_custom_call.1} parent=55 // pred_check_branch
          %372 = sbr.rel (%p370) target = $region60
        $region59: #{tpu_custom_call.1} parent=55 // pred_region
          %373 = dma.done %s366, 512
        $region60: #{tpu_custom_call.1} parent=55 // pred_fallthru
          _
        // Predicated region
        $region61: #{tpu_custom_call.1} parent=55 // pred_check
          %p374 = pneg %p71
        $region62: #{tpu_custom_call.1} parent=55 // pred_check_branch
          %376 = sbr.rel (%p374) target = $region64
        $region63: #{tpu_custom_call.1} parent=55 // pred_region
          %377 = dma.done [#allocation6], 2048
        $region64: #{tpu_custom_call.1} parent=55 // pred_fallthru
          _
        // Predicated region
        $region65: #{tpu_custom_call.1} parent=55 // pred_check
          %p378 = pneg %p92
        $region66: #{tpu_custom_call.1} parent=55 // pred_check_branch
          %380 = sbr.rel (%p378) target = $region68
        $region67: #{tpu_custom_call.1} parent=55 // pred_region
          %381 = dma.done [#allocation6], 16384
        $region68: #{tpu_custom_call.1} parent=55 // pred_fallthru
          _
        // Predicated region
        $region69: #{tpu_custom_call.1} parent=55 // pred_check
          %p382 = pneg %p113
        $region70: #{tpu_custom_call.1} parent=55 // pred_check_branch
          %384 = sbr.rel (%p382) target = $region72
        $region71: #{tpu_custom_call.1} parent=55 // pred_region
          %385 = dma.done [#allocation9], 16384
        $region72: #{tpu_custom_call.1} parent=55 // pred_fallthru
          _
        // Predicated region
        $region73: #{tpu_custom_call.1} parent=55 // pred_check
          %p386 = pneg %p155
        $region74: #{tpu_custom_call.1} parent=55 // pred_check_branch
          %388 = sbr.rel (%p386) target = $region76
        $region75: #{tpu_custom_call.1} parent=55 // pred_region
          %389 = dma.done [#allocation9], 2048
        $region76: #{tpu_custom_call.1} parent=55 // pred_fallthru
          _
        // Predicated region
        $region77: #{tpu_custom_call.1} parent=55 // pred_check
          %p390 = pneg %p197
        $region78: #{tpu_custom_call.1} parent=55 // pred_check_branch
          %392 = sbr.rel (%p390) target = $region80
        $region79: #{tpu_custom_call.1} parent=55 // pred_region
          %393 = dma.done [#allocation12], 2048
        $region80: #{tpu_custom_call.1} parent=55 // pred_fallthru
          _
        %s394 = sand.u32 %s37, 1
        %s395 = scalar_lea.sflag [#allocation3], %s394
        %s396 = sand.u32 %s37, 1
        %s397 = smul.addr %s396, 32
        %s398 = scalar_lea.vmem [#allocation2], %s397
        %p399 = pneg %p50
        %p400 = pneg %p47
        %p401 = pneg %p71
        %p402 = pneg %p68
        %p403 = pneg %p92
        %p404 = pneg %p89
        %p405 = pneg %p113
        %p406 = pneg %p110
        %p407 = pneg %p134
        %p408 = pneg %p131
        %p409 = pneg %p155
        %p410 = pneg %p152
        %p411 = pneg %p176
        %p412 = pneg %p173
        %p413 = pneg %p197
        %p414 = pneg %p194
        %p415 = pneg %p218
        %p416 = pneg %p215
        %p417 = pneg %p244
        %p418 = pneg %p241
        %s419 = sand.u32 %s231, 1
        %s420 = scalar_lea.sflag [#allocation4], %s419
        %s421 = sand.u32 %s231, 1
        %s422 = smul.addr %s421, 32
        %s423 = scalar_lea.vmem [#allocation13], %s422
        %s424 = smul.u32 4, %s29
        %s425 = smul.u32 4, %s29
        %v426 = vld [vmem:[%s369] sm:$0xff]
        %v427 = vld [vmem:[%s369 + $0x8] sm:$0xff]
        %v428 = vld [vmem:[%s369 + $0x10] sm:$0xff]
        %v429 = vld [vmem:[%s369 + $0x18] sm:$0xff]
        %v430 = vld [vmem:[#allocation5] sm:$0xff]
        %v431 = vld [vmem:[#allocation5 + $0x8] sm:$0xff]
        %v432 = vld [vmem:[#allocation5 + $0x10] sm:$0xff]
        %v433 = vld [vmem:[#allocation5 + $0x18] sm:$0xff]
        %v434 = vld [vmem:[#allocation5 + $0x20] sm:$0xff]
        %v435 = vld [vmem:[#allocation5 + $0x28] sm:$0xff]
        %v436 = vld [vmem:[#allocation5 + $0x30] sm:$0xff]
        %v437 = vld [vmem:[#allocation5 + $0x38] sm:$0xff]
        %v438 = vld [vmem:[#allocation5 + $0x40] sm:$0xff]
        %v439 = vld [vmem:[#allocation5 + $0x48] sm:$0xff]
        %v440 = vld [vmem:[#allocation5 + $0x50] sm:$0xff]
        %v441 = vld [vmem:[#allocation5 + $0x58] sm:$0xff]
        %v442 = vld [vmem:[#allocation5 + $0x60] sm:$0xff]
        %v443 = vld [vmem:[#allocation5 + $0x68] sm:$0xff]
        %v444 = vld [vmem:[#allocation5 + $0x70] sm:$0xff]
        %v445 = vld [vmem:[#allocation5 + $0x78] sm:$0xff]
        %v446 = vlaneseq
        %v447 = vand.u32 %v446, 127
        %448 = vset.pattern.permute.xlu0 0
        %449 = vperm.xlu0 %448, %v426
        %v450 = vpop.permute.xlu0 %449
        %451 = vset.pattern.permute.xlu0 0
        %452 = vperm.xlu0 %451, %v427
        %v453 = vpop.permute.xlu0 %452
        %454 = vset.pattern.permute.xlu0 0
        %455 = vperm.xlu0 %454, %v428
        %v456 = vpop.permute.xlu0 %455
        %457 = vset.pattern.permute.xlu0 0
        %458 = vperm.xlu0 %457, %v429
        %v459 = vpop.permute.xlu0 %458
        %vm460 = vcmp.eq.s32.totalorder %v447, %v450
        %vm461 = vcmp.eq.s32.totalorder %v447, %v453
        %vm462 = vcmp.eq.s32.totalorder %v447, %v456
        %vm463 = vcmp.eq.s32.totalorder %v447, %v459
        %v464 = vsel %vm460, 1, 0
        %v465 = vsel %vm461, 1, 0
        %v466 = vsel %vm462, 1, 0
        %v467 = vsel %vm463, 1, 0
        %v468 = vcvt.s32.f32 %v464
        %v469 = vcvt.s32.f32 %v465
        %v470 = vcvt.s32.f32 %v466
        %v471 = vcvt.s32.f32 %v467
        %472 = vmatprep.subr.mxu0 0.0
        %473 = vmatpush1.msra.mxu0 %v430
        %474 = vmatprep.subr.mxu0 0.0
        %475 = vmatpush1.msra.mxu0 %v431
        %476 = vmatprep.subr.mxu0 0.0
        %477 = vmatpush1.msra.mxu0 %v432
        %478 = vmatprep.subr.mxu0 0.0
        %479 = vmatpush1.msra.mxu0 %v433
        %480 = vmatprep.subr.mxu0 0.0
        %481 = vmatpush1.msra.mxu0 %v434
        %482 = vmatprep.subr.mxu0 0.0
        %483 = vmatpush1.msra.mxu0 %v435
        %484 = vmatprep.subr.mxu0 0.0
        %485 = vmatpush1.msra.mxu0 %v436
        %486 = vmatprep.subr.mxu0 0.0
        %487 = vmatpush1.msra.mxu0 %v437
        %488 = vmatprep.subr.mxu0 0.0
        %489 = vmatpush1.msra.mxu0 %v438
        %490 = vmatprep.subr.mxu0 0.0
        %491 = vmatpush1.msra.mxu0 %v439
        %492 = vmatprep.subr.mxu0 0.0
        %493 = vmatpush1.msra.mxu0 %v440
        %494 = vmatprep.subr.mxu0 0.0
        %495 = vmatpush1.msra.mxu0 %v441
        %496 = vmatprep.subr.mxu0 0.0
        %497 = vmatpush1.msra.mxu0 %v442
        %498 = vmatprep.subr.mxu0 0.0
        %499 = vmatpush1.msra.mxu0 %v443
        %500 = vmatprep.subr.mxu0 0.0
        %501 = vmatpush1.msra.mxu0 %v444
        %502 = vmatprep.subr.mxu0 0.0
        %503 = vmatpush1.msra.mxu0 %v445
        %504 = vmatprep.subr.mxu0 0.0
        %505 = vmatpush1.msra.mxu0 0.0
        %506 = vmatprep.subr.mxu0 0.0
        %507 = vmatpush1.msra.mxu0 0.0
        %508 = vmatprep.subr.mxu0 0.0
        %509 = vmatpush1.msra.mxu0 0.0
        %510 = vmatprep.subr.mxu0 0.0
        %511 = vmatpush1.msra.mxu0 0.0
        %512 = vmatprep.subr.mxu0 0.0
        %513 = vmatpush1.msra.mxu0 0.0
        %514 = vmatprep.subr.mxu0 0.0
        %515 = vmatpush1.msra.mxu0 0.0
        %516 = vmatprep.subr.mxu0 0.0
        %517 = vmatpush1.msra.mxu0 0.0
        %518 = vmatprep.subr.mxu0 0.0
        %519 = vmatpush1.msra.mxu0 0.0
        %520 = vmatprep.subr.mxu0 0.0
        %521 = vmatpush1.msra.mxu0 0.0
        %522 = vmatprep.subr.mxu0 0.0
        %523 = vmatpush1.msra.mxu0 0.0
        %524 = vmatprep.subr.mxu0 0.0
        %525 = vmatpush1.msra.mxu0 0.0
        %526 = vmatprep.subr.mxu0 0.0
        %527 = vmatpush1.msra.mxu0 0.0
        %528 = vmatprep.subr.mxu0 0.0
        %529 = vmatpush1.msra.mxu0 0.0
        %530 = vmatprep.subr.mxu0 0.0
        %531 = vmatpush1.msra.mxu0 0.0
        %532 = vmatprep.subr.mxu0 0.0
        %533 = vmatpush1.msra.mxu0 0.0
        %534 = vmatprep.subr.mxu0 0.0
        %535 = vmatpush1.msra.mxu0 0.0
        %536 = vmatprep.mubr.f32.mxu0 0.0
        %537 = vmatmul.mubr.f32.gmra.mrb[0].mxu0 %v468
        %v538 = vpop.f32.mrb[0].mxu0
        %v539 = vadd.f32 0.0, %v538
        %v540 = vpop.f32.mrb[0].mxu0
        %541 = vmatprep.mubr.f32.mxu0 0.0
        %542 = vmatmul.mubr.f32.gmra.mrb[0].mxu0 %v469
        %v543 = vpop.f32.mrb[0].mxu0
        %v544 = vadd.f32 0.0, %v543
        %v545 = vpop.f32.mrb[0].mxu0
        %546 = vmatprep.mubr.f32.mxu0 0.0
        %547 = vmatmul.mubr.f32.gmra.mrb[0].mxu0 %v470
        %v548 = vpop.f32.mrb[0].mxu0
        %v549 = vadd.f32 0.0, %v548
        %v550 = vpop.f32.mrb[0].mxu0
        %551 = vmatprep.mubr.f32.mxu0 0.0
        %552 = vmatmul.mubr.f32.gmra.mrb[0].mxu0 %v471
        %v553 = vpop.f32.mrb[0].mxu0
        %v554 = vadd.f32 0.0, %v553
        %v555 = vpop.f32.mrb[0].mxu0
        %556 = vdwg.mxu0
        %v557 = vld [vmem:[#allocation7] sm:$0xff]
        %v558 = vld [vmem:[#allocation7 + $0x8] sm:$0xff]
        %v559 = vld [vmem:[#allocation7 + $0x10] sm:$0xff]
        %v560 = vld [vmem:[#allocation7 + $0x18] sm:$0xff]
        %v561 = vld [vmem:[#allocation7 + $0x20] sm:$0xff]
        %v562 = vld [vmem:[#allocation7 + $0x28] sm:$0xff]
        %v563 = vld [vmem:[#allocation7 + $0x30] sm:$0xff]
        %v564 = vld [vmem:[#allocation7 + $0x38] sm:$0xff]
        %v565 = vld [vmem:[#allocation7 + $0x40] sm:$0xff]
        %v566 = vld [vmem:[#allocation7 + $0x48] sm:$0xff]
        %v567 = vld [vmem:[#allocation7 + $0x50] sm:$0xff]
        %v568 = vld [vmem:[#allocation7 + $0x58] sm:$0xff]
        %v569 = vld [vmem:[#allocation7 + $0x60] sm:$0xff]
        %v570 = vld [vmem:[#allocation7 + $0x68] sm:$0xff]
        %v571 = vld [vmem:[#allocation7 + $0x70] sm:$0xff]
        %v572 = vld [vmem:[#allocation7 + $0x78] sm:$0xff]
        %573 = vset.pattern.permute.xlu0 1
        %574 = vperm.xlu0 %573, %v426
        %v575 = vpop.permute.xlu0 %574
        %576 = vset.pattern.permute.xlu0 1
        %577 = vperm.xlu0 %576, %v427
        %v578 = vpop.permute.xlu0 %577
        %579 = vset.pattern.permute.xlu0 1
        %580 = vperm.xlu0 %579, %v428
        %v581 = vpop.permute.xlu0 %580
        %582 = vset.pattern.permute.xlu0 1
        %583 = vperm.xlu0 %582, %v429
        %v584 = vpop.permute.xlu0 %583
        %vm585 = vcmp.eq.s32.totalorder %v447, %v575
        %vm586 = vcmp.eq.s32.totalorder %v447, %v578
        %vm587 = vcmp.eq.s32.totalorder %v447, %v581
        %vm588 = vcmp.eq.s32.totalorder %v447, %v584
        %v589 = vsel %vm585, 1, 0
        %v590 = vsel %vm586, 1, 0
        %v591 = vsel %vm587, 1, 0
        %v592 = vsel %vm588, 1, 0
        %v593 = vcvt.s32.f32 %v589
        %v594 = vcvt.s32.f32 %v590
        %v595 = vcvt.s32.f32 %v591
        %v596 = vcvt.s32.f32 %v592
        %597 = vmatprep.subr.mxu0 0.0
        %598 = vmatpush1.msra.mxu0 %v430
        %599 = vmatprep.subr.mxu0 0.0
        %600 = vmatpush1.msra.mxu0 %v431
        %601 = vmatprep.subr.mxu0 0.0
        %602 = vmatpush1.msra.mxu0 %v432
        %603 = vmatprep.subr.mxu0 0.0
        %604 = vmatpush1.msra.mxu0 %v433
        %605 = vmatprep.subr.mxu0 0.0
        %606 = vmatpush1.msra.mxu0 %v434
        %607 = vmatprep.subr.mxu0 0.0
        %608 = vmatpush1.msra.mxu0 %v435
        %609 = vmatprep.subr.mxu0 0.0
        %610 = vmatpush1.msra.mxu0 %v436
        %611 = vmatprep.subr.mxu0 0.0
        %612 = vmatpush1.msra.mxu0 %v437
        %613 = vmatprep.subr.mxu0 0.0
        %614 = vmatpush1.msra.mxu0 %v438
        %615 = vmatprep.subr.mxu0 0.0
        %616 = vmatpush1.msra.mxu0 %v439
        %617 = vmatprep.subr.mxu0 0.0
        %618 = vmatpush1.msra.mxu0 %v440
        %619 = vmatprep.subr.mxu0 0.0
        %620 = vmatpush1.msra.mxu0 %v441
        %621 = vmatprep.subr.mxu0 0.0
        %622 = vmatpush1.msra.mxu0 %v442
        %623 = vmatprep.subr.mxu0 0.0
        %624 = vmatpush1.msra.mxu0 %v443
        %625 = vmatprep.subr.mxu0 0.0
        %626 = vmatpush1.msra.mxu0 %v444
        %627 = vmatprep.subr.mxu0 0.0
        %628 = vmatpush1.msra.mxu0 %v445
        %629 = vmatprep.subr.mxu0 0.0
        %630 = vmatpush1.msra.mxu0 0.0
        %631 = vmatprep.subr.mxu0 0.0
        %632 = vmatpush1.msra.mxu0 0.0
        %633 = vmatprep.subr.mxu0 0.0
        %634 = vmatpush1.msra.mxu0 0.0
        %635 = vmatprep.subr.mxu0 0.0
        %636 = vmatpush1.msra.mxu0 0.0
        %637 = vmatprep.subr.mxu0 0.0
        %638 = vmatpush1.msra.mxu0 0.0
        %639 = vmatprep.subr.mxu0 0.0
        %640 = vmatpush1.msra.mxu0 0.0
        %641 = vmatprep.subr.mxu0 0.0
        %642 = vmatpush1.msra.mxu0 0.0
        %643 = vmatprep.subr.mxu0 0.0
        %644 = vmatpush1.msra.mxu0 0.0
        %645 = vmatprep.subr.mxu0 0.0
        %646 = vmatpush1.msra.mxu0 0.0
        %647 = vmatprep.subr.mxu0 0.0
        %648 = vmatpush1.msra.mxu0 0.0
        %649 = vmatprep.subr.mxu0 0.0
        %650 = vmatpush1.msra.mxu0 0.0
        %651 = vmatprep.subr.mxu0 0.0
        %652 = vmatpush1.msra.mxu0 0.0
        %653 = vmatprep.subr.mxu0 0.0
        %654 = vmatpush1.msra.mxu0 0.0
        %655 = vmatprep.subr.mxu0 0.0
        %656 = vmatpush1.msra.mxu0 0.0
        %657 = vmatprep.subr.mxu0 0.0
        %658 = vmatpush1.msra.mxu0 0.0
        %659 = vmatprep.subr.mxu0 0.0
        %660 = vmatpush1.msra.mxu0 0.0
        %661 = vmatprep.mubr.f32.mxu0 0.0
        %662 = vmatmul.mubr.f32.gmra.mrb[0].mxu0 %v593
        %v663 = vpop.f32.mrb[0].mxu0
        %v664 = vadd.f32 0.0, %v663
        %v665 = vpop.f32.mrb[0].mxu0
        %666 = vmatprep.mubr.f32.mxu0 0.0
        %667 = vmatmul.mubr.f32.gmra.mrb[0].mxu0 %v594
        %v668 = vpop.f32.mrb[0].mxu0
        %v669 = vadd.f32 0.0, %v668
        %v670 = vpop.f32.mrb[0].mxu0
        %671 = vmatprep.mubr.f32.mxu0 0.0
        %672 = vmatmul.mubr.f32.gmra.mrb[0].mxu0 %v595
        %v673 = vpop.f32.mrb[0].mxu0
        %v674 = vadd.f32 0.0, %v673
        %v675 = vpop.f32.mrb[0].mxu0
        %676 = vmatprep.mubr.f32.mxu0 0.0
        %677 = vmatmul.mubr.f32.gmra.mrb[0].mxu0 %v596
        %v678 = vpop.f32.mrb[0].mxu0
        %v679 = vadd.f32 0.0, %v678
        %v680 = vpop.f32.mrb[0].mxu0
        %681 = vdwg.mxu0
        %s682 = scalar_lea.vmem [#allocation7], 128
        %v683 = vld [vmem:[%s682] sm:$0xff]
        %v684 = vld [vmem:[%s682 + $0x8] sm:$0xff]
        %v685 = vld [vmem:[%s682 + $0x10] sm:$0xff]
        %v686 = vld [vmem:[%s682 + $0x18] sm:$0xff]
        %v687 = vld [vmem:[%s682 + $0x20] sm:$0xff]
        %v688 = vld [vmem:[%s682 + $0x28] sm:$0xff]
        %v689 = vld [vmem:[%s682 + $0x30] sm:$0xff]
        %v690 = vld [vmem:[%s682 + $0x38] sm:$0xff]
        %v691 = vld [vmem:[%s682 + $0x40] sm:$0xff]
        %v692 = vld [vmem:[%s682 + $0x48] sm:$0xff]
        %v693 = vld [vmem:[%s682 + $0x50] sm:$0xff]
        %v694 = vld [vmem:[%s682 + $0x58] sm:$0xff]
        %v695 = vld [vmem:[%s682 + $0x60] sm:$0xff]
        %v696 = vld [vmem:[%s682 + $0x68] sm:$0xff]
        %v697 = vld [vmem:[%s682 + $0x70] sm:$0xff]
        %v698 = vld [vmem:[%s682 + $0x78] sm:$0xff]
        %699 = vmatprep.subr.mxu0 0.0
        %700 = vmatpush1.msra.mxu0 %v683
        %701 = vmatprep.subr.mxu0 0.0
        %702 = vmatpush1.msra.mxu0 %v684
        %703 = vmatprep.subr.mxu0 0.0
        %704 = vmatpush1.msra.mxu0 %v685
        %705 = vmatprep.subr.mxu0 0.0
        %706 = vmatpush1.msra.mxu0 %v686
        %707 = vmatprep.subr.mxu0 0.0
        %708 = vmatpush1.msra.mxu0 %v687
        %709 = vmatprep.subr.mxu0 0.0
        %710 = vmatpush1.msra.mxu0 %v688
        %711 = vmatprep.subr.mxu0 0.0
        %712 = vmatpush1.msra.mxu0 %v689
        %713 = vmatprep.subr.mxu0 0.0
        %714 = vmatpush1.msra.mxu0 %v690
        %715 = vmatprep.subr.mxu0 0.0
        %716 = vmatpush1.msra.mxu0 %v691
        %717 = vmatprep.subr.mxu0 0.0
        %718 = vmatpush1.msra.mxu0 %v692
        %719 = vmatprep.subr.mxu0 0.0
        %720 = vmatpush1.msra.mxu0 %v693
        %721 = vmatprep.subr.mxu0 0.0
        %722 = vmatpush1.msra.mxu0 %v694
        %723 = vmatprep.subr.mxu0 0.0
        %724 = vmatpush1.msra.mxu0 %v695
        %725 = vmatprep.subr.mxu0 0.0
        %726 = vmatpush1.msra.mxu0 %v696
        %727 = vmatprep.subr.mxu0 0.0
        %728 = vmatpush1.msra.mxu0 %v697
        %729 = vmatprep.subr.mxu0 0.0
        %730 = vmatpush1.msra.mxu0 %v698
        %731 = vmatprep.subr.mxu0 0.0
        %732 = vmatpush1.msra.mxu0 0.0
        %733 = vmatprep.subr.mxu0 0.0
        %734 = vmatpush1.msra.mxu0 0.0
        %735 = vmatprep.subr.mxu0 0.0
        %736 = vmatpush1.msra.mxu0 0.0
        %737 = vmatprep.subr.mxu0 0.0
        %738 = vmatpush1.msra.mxu0 0.0
        %739 = vmatprep.subr.mxu0 0.0
        %740 = vmatpush1.msra.mxu0 0.0
        %741 = vmatprep.subr.mxu0 0.0
        %742 = vmatpush1.msra.mxu0 0.0
        %743 = vmatprep.subr.mxu0 0.0
        %744 = vmatpush1.msra.mxu0 0.0
        %745 = vmatprep.subr.mxu0 0.0
        %746 = vmatpush1.msra.mxu0 0.0
        %747 = vmatprep.subr.mxu0 0.0
        %748 = vmatpush1.msra.mxu0 0.0
        %749 = vmatprep.subr.mxu0 0.0
        %750 = vmatpush1.msra.mxu0 0.0
        %751 = vmatprep.subr.mxu0 0.0
        %752 = vmatpush1.msra.mxu0 0.0
        %753 = vmatprep.subr.mxu0 0.0
        %754 = vmatpush1.msra.mxu0 0.0
        %755 = vmatprep.subr.mxu0 0.0
        %756 = vmatpush1.msra.mxu0 0.0
        %757 = vmatprep.subr.mxu0 0.0
        %758 = vmatpush1.msra.mxu0 0.0
        %759 = vmatprep.subr.mxu0 0.0
        %760 = vmatpush1.msra.mxu0 0.0
        %761 = vmatprep.subr.mxu0 0.0
        %762 = vmatpush1.msra.mxu0 0.0
        %763 = vmatprep.mubr.f32.mxu0 0.0
        %764 = vmatmul.mubr.f32.gmra.mrb[0].mxu0 %v664
        %v765 = vpop.f32.mrb[0].mxu0
        %v766 = vadd.f32 0.0, %v765
        %v767 = vpop.f32.mrb[0].mxu0
        %768 = vmatprep.mubr.f32.mxu0 0.0
        %769 = vmatmul.mubr.f32.gmra.mrb[0].mxu0 %v669
        %v770 = vpop.f32.mrb[0].mxu0
        %v771 = vadd.f32 0.0, %v770
        %v772 = vpop.f32.mrb[0].mxu0
        %773 = vmatprep.mubr.f32.mxu0 0.0
        %774 = vmatmul.mubr.f32.gmra.mrb[0].mxu0 %v674
        %v775 = vpop.f32.mrb[0].mxu0
        %v776 = vadd.f32 0.0, %v775
        %v777 = vpop.f32.mrb[0].mxu0
        %778 = vmatprep.mubr.f32.mxu0 0.0
        %779 = vmatmul.mubr.f32.gmra.mrb[0].mxu0 %v679
        %v780 = vpop.f32.mrb[0].mxu0
        %v781 = vadd.f32 0.0, %v780
        %v782 = vpop.f32.mrb[0].mxu0
        %783 = vdwg.mxu0
        %784 = vmatprep.subr.mxu0 0.0
        %785 = vmatpush1.msra.mxu0 %v557
        %786 = vmatprep.subr.mxu0 0.0
        %787 = vmatpush1.msra.mxu0 %v558
        %788 = vmatprep.subr.mxu0 0.0
        %789 = vmatpush1.msra.mxu0 %v559
        %790 = vmatprep.subr.mxu0 0.0
        %791 = vmatpush1.msra.mxu0 %v560
        %792 = vmatprep.subr.mxu0 0.0
        %793 = vmatpush1.msra.mxu0 %v561
        %794 = vmatprep.subr.mxu0 0.0
        %795 = vmatpush1.msra.mxu0 %v562
        %796 = vmatprep.subr.mxu0 0.0
        %797 = vmatpush1.msra.mxu0 %v563
        %798 = vmatprep.subr.mxu0 0.0
        %799 = vmatpush1.msra.mxu0 %v564
        %800 = vmatprep.subr.mxu0 0.0
        %801 = vmatpush1.msra.mxu0 %v565
        %802 = vmatprep.subr.mxu0 0.0
        %803 = vmatpush1.msra.mxu0 %v566
        %804 = vmatprep.subr.mxu0 0.0
        %805 = vmatpush1.msra.mxu0 %v567
        %806 = vmatprep.subr.mxu0 0.0
        %807 = vmatpush1.msra.mxu0 %v568
        %808 = vmatprep.subr.mxu0 0.0
        %809 = vmatpush1.msra.mxu0 %v569
        %810 = vmatprep.subr.mxu0 0.0
        %811 = vmatpush1.msra.mxu0 %v570
        %812 = vmatprep.subr.mxu0 0.0
        %813 = vmatpush1.msra.mxu0 %v571
        %814 = vmatprep.subr.mxu0 0.0
        %815 = vmatpush1.msra.mxu0 %v572
        %816 = vmatprep.subr.mxu0 0.0
        %817 = vmatpush1.msra.mxu0 0.0
        %818 = vmatprep.subr.mxu0 0.0
        %819 = vmatpush1.msra.mxu0 0.0
        %820 = vmatprep.subr.mxu0 0.0
        %821 = vmatpush1.msra.mxu0 0.0
        %822 = vmatprep.subr.mxu0 0.0
        %823 = vmatpush1.msra.mxu0 0.0
        %824 = vmatprep.subr.mxu0 0.0
        %825 = vmatpush1.msra.mxu0 0.0
        %826 = vmatprep.subr.mxu0 0.0
        %827 = vmatpush1.msra.mxu0 0.0
        %828 = vmatprep.subr.mxu0 0.0
        %829 = vmatpush1.msra.mxu0 0.0
        %830 = vmatprep.subr.mxu0 0.0
        %831 = vmatpush1.msra.mxu0 0.0
        %832 = vmatprep.subr.mxu0 0.0
        %833 = vmatpush1.msra.mxu0 0.0
        %834 = vmatprep.subr.mxu0 0.0
        %835 = vmatpush1.msra.mxu0 0.0
        %836 = vmatprep.subr.mxu0 0.0
        %837 = vmatpush1.msra.mxu0 0.0
        %838 = vmatprep.subr.mxu0 0.0
        %839 = vmatpush1.msra.mxu0 0.0
        %840 = vmatprep.subr.mxu0 0.0
        %841 = vmatpush1.msra.mxu0 0.0
        %842 = vmatprep.subr.mxu0 0.0
        %843 = vmatpush1.msra.mxu0 0.0
        %844 = vmatprep.subr.mxu0 0.0
        %845 = vmatpush1.msra.mxu0 0.0
        %846 = vmatprep.subr.mxu0 0.0
        %847 = vmatpush1.msra.mxu0 0.0
        %848 = vmatprep.mubr.f32.mxu0 0.0
        %849 = vmatmul.mubr.f32.gmra.mrb[0].mxu0 %v539
        %v850 = vpop.f32.mrb[0].mxu0
        %v851 = vadd.f32 %v766, %v850
        %v852 = vpop.f32.mrb[0].mxu0
        %853 = vmatprep.mubr.f32.mxu0 0.0
        %854 = vmatmul.mubr.f32.gmra.mrb[0].mxu0 %v544
        %v855 = vpop.f32.mrb[0].mxu0
        %v856 = vadd.f32 %v771, %v855
        %v857 = vpop.f32.mrb[0].mxu0
        %858 = vmatprep.mubr.f32.mxu0 0.0
        %859 = vmatmul.mubr.f32.gmra.mrb[0].mxu0 %v549
        %v860 = vpop.f32.mrb[0].mxu0
        %v861 = vadd.f32 %v776, %v860
        %v862 = vpop.f32.mrb[0].mxu0
        %863 = vmatprep.mubr.f32.mxu0 0.0
        %864 = vmatmul.mubr.f32.gmra.mrb[0].mxu0 %v554
        %v865 = vpop.f32.mrb[0].mxu0
        %v866 = vadd.f32 %v781, %v865
        %v867 = vpop.f32.mrb[0].mxu0
        %868 = vdwg.mxu0
        %869 = vset.pattern.permute.xlu0 2
        %870 = vperm.xlu0 %869, %v426
        %v871 = vpop.permute.xlu0 %870
        %872 = vset.pattern.permute.xlu0 2
        %873 = vperm.xlu0 %872, %v427
        %v874 = vpop.permute.xlu0 %873
        %875 = vset.pattern.permute.xlu0 2
        %876 = vperm.xlu0 %875, %v428
        %v877 = vpop.permute.xlu0 %876
        %878 = vset.pattern.permute.xlu0 2
        %879 = vperm.xlu0 %878, %v429
        %v880 = vpop.permute.xlu0 %879
        %vm881 = vcmp.eq.s32.totalorder %v447, %v871
        %vm882 = vcmp.eq.s32.totalorder %v447, %v874
        %vm883 = vcmp.eq.s32.totalorder %v447, %v877
        %vm884 = vcmp.eq.s32.totalorder %v447, %v880
        %v885 = vsel %vm881, 1, 0
        %v886 = vsel %vm882, 1, 0
        %v887 = vsel %vm883, 1, 0
        %v888 = vsel %vm884, 1, 0
        %v889 = vcvt.s32.f32 %v885
        %v890 = vcvt.s32.f32 %v886
        %v891 = vcvt.s32.f32 %v887
        %v892 = vcvt.s32.f32 %v888
        %893 = vmatprep.subr.mxu0 0.0
        %894 = vmatpush1.msra.mxu0 %v430
        %895 = vmatprep.subr.mxu0 0.0
        %896 = vmatpush1.msra.mxu0 %v431
        %897 = vmatprep.subr.mxu0 0.0
        %898 = vmatpush1.msra.mxu0 %v432
        %899 = vmatprep.subr.mxu0 0.0
        %900 = vmatpush1.msra.mxu0 %v433
        %901 = vmatprep.subr.mxu0 0.0
        %902 = vmatpush1.msra.mxu0 %v434
        %903 = vmatprep.subr.mxu0 0.0
        %904 = vmatpush1.msra.mxu0 %v435
        %905 = vmatprep.subr.mxu0 0.0
        %906 = vmatpush1.msra.mxu0 %v436
        %907 = vmatprep.subr.mxu0 0.0
        %908 = vmatpush1.msra.mxu0 %v437
        %909 = vmatprep.subr.mxu0 0.0
        %910 = vmatpush1.msra.mxu0 %v438
        %911 = vmatprep.subr.mxu0 0.0
        %912 = vmatpush1.msra.mxu0 %v439
        %913 = vmatprep.subr.mxu0 0.0
        %914 = vmatpush1.msra.mxu0 %v440
        %915 = vmatprep.subr.mxu0 0.0
        %916 = vmatpush1.msra.mxu0 %v441
        %917 = vmatprep.subr.mxu0 0.0
        %918 = vmatpush1.msra.mxu0 %v442
        %919 = vmatprep.subr.mxu0 0.0
        %920 = vmatpush1.msra.mxu0 %v443
        %921 = vmatprep.subr.mxu0 0.0
        %922 = vmatpush1.msra.mxu0 %v444
        %923 = vmatprep.subr.mxu0 0.0
        %924 = vmatpush1.msra.mxu0 %v445
        %925 = vmatprep.subr.mxu0 0.0
        %926 = vmatpush1.msra.mxu0 0.0
        %927 = vmatprep.subr.mxu0 0.0
        %928 = vmatpush1.msra.mxu0 0.0
        %929 = vmatprep.subr.mxu0 0.0
        %930 = vmatpush1.msra.mxu0 0.0
        %931 = vmatprep.subr.mxu0 0.0
        %932 = vmatpush1.msra.mxu0 0.0
        %933 = vmatprep.subr.mxu0 0.0
        %934 = vmatpush1.msra.mxu0 0.0
        %935 = vmatprep.subr.mxu0 0.0
        %936 = vmatpush1.msra.mxu0 0.0
        %937 = vmatprep.subr.mxu0 0.0
        %938 = vmatpush1.msra.mxu0 0.0
        %939 = vmatprep.subr.mxu0 0.0
        %940 = vmatpush1.msra.mxu0 0.0
        %941 = vmatprep.subr.mxu0 0.0
        %942 = vmatpush1.msra.mxu0 0.0
        %943 = vmatprep.subr.mxu0 0.0
        %944 = vmatpush1.msra.mxu0 0.0
        %945 = vmatprep.subr.mxu0 0.0
        %946 = vmatpush1.msra.mxu0 0.0
        %947 = vmatprep.subr.mxu0 0.0
        %948 = vmatpush1.msra.mxu0 0.0
        %949 = vmatprep.subr.mxu0 0.0
        %950 = vmatpush1.msra.mxu0 0.0
        %951 = vmatprep.subr.mxu0 0.0
        %952 = vmatpush1.msra.mxu0 0.0
        %953 = vmatprep.subr.mxu0 0.0
        %954 = vmatpush1.msra.mxu0 0.0
        %955 = vmatprep.subr.mxu0 0.0
        %956 = vmatpush1.msra.mxu0 0.0
        %957 = vmatprep.mubr.f32.mxu0 0.0
        %958 = vmatmul.mubr.f32.gmra.mrb[0].mxu0 %v889
        %v959 = vpop.f32.mrb[0].mxu0
        %v960 = vadd.f32 0.0, %v959
        %v961 = vpop.f32.mrb[0].mxu0
        %962 = vmatprep.mubr.f32.mxu0 0.0
        %963 = vmatmul.mubr.f32.gmra.mrb[0].mxu0 %v890
        %v964 = vpop.f32.mrb[0].mxu0
        %v965 = vadd.f32 0.0, %v964
        %v966 = vpop.f32.mrb[0].mxu0
        %967 = vmatprep.mubr.f32.mxu0 0.0
        %968 = vmatmul.mubr.f32.gmra.mrb[0].mxu0 %v891
        %v969 = vpop.f32.mrb[0].mxu0
        %v970 = vadd.f32 0.0, %v969
        %v971 = vpop.f32.mrb[0].mxu0
        %972 = vmatprep.mubr.f32.mxu0 0.0
        %973 = vmatmul.mubr.f32.gmra.mrb[0].mxu0 %v892
        %v974 = vpop.f32.mrb[0].mxu0
        %v975 = vadd.f32 0.0, %v974
        %v976 = vpop.f32.mrb[0].mxu0
        %977 = vdwg.mxu0
        %s978 = scalar_lea.vmem [#allocation7], 256
        %v979 = vld [vmem:[%s978] sm:$0xff]
        %v980 = vld [vmem:[%s978 + $0x8] sm:$0xff]
        %v981 = vld [vmem:[%s978 + $0x10] sm:$0xff]
        %v982 = vld [vmem:[%s978 + $0x18] sm:$0xff]
        %v983 = vld [vmem:[%s978 + $0x20] sm:$0xff]
        %v984 = vld [vmem:[%s978 + $0x28] sm:$0xff]
        %v985 = vld [vmem:[%s978 + $0x30] sm:$0xff]
        %v986 = vld [vmem:[%s978 + $0x38] sm:$0xff]
        %v987 = vld [vmem:[%s978 + $0x40] sm:$0xff]
        %v988 = vld [vmem:[%s978 + $0x48] sm:$0xff]
        %v989 = vld [vmem:[%s978 + $0x50] sm:$0xff]
        %v990 = vld [vmem:[%s978 + $0x58] sm:$0xff]
        %v991 = vld [vmem:[%s978 + $0x60] sm:$0xff]
        %v992 = vld [vmem:[%s978 + $0x68] sm:$0xff]
        %v993 = vld [vmem:[%s978 + $0x70] sm:$0xff]
        %v994 = vld [vmem:[%s978 + $0x78] sm:$0xff]
        %995 = vmatprep.subr.mxu0 0.0
        %996 = vmatpush1.msra.mxu0 %v979
        %997 = vmatprep.subr.mxu0 0.0
        %998 = vmatpush1.msra.mxu0 %v980
        %999 = vmatprep.subr.mxu0 0.0
        %1000 = vmatpush1.msra.mxu0 %v981
        %1001 = vmatprep.subr.mxu0 0.0
        %1002 = vmatpush1.msra.mxu0 %v982
        %1003 = vmatprep.subr.mxu0 0.0
        %1004 = vmatpush1.msra.mxu0 %v983
        %1005 = vmatprep.subr.mxu0 0.0
        %1006 = vmatpush1.msra.mxu0 %v984
        %1007 = vmatprep.subr.mxu0 0.0
        %1008 = vmatpush1.msra.mxu0 %v985
        %1009 = vmatprep.subr.mxu0 0.0
        %1010 = vmatpush1.msra.mxu0 %v986
        %1011 = vmatprep.subr.mxu0 0.0
        %1012 = vmatpush1.msra.mxu0 %v987
        %1013 = vmatprep.subr.mxu0 0.0
        %1014 = vmatpush1.msra.mxu0 %v988
        %1015 = vmatprep.subr.mxu0 0.0
        %1016 = vmatpush1.msra.mxu0 %v989
        %1017 = vmatprep.subr.mxu0 0.0
        %1018 = vmatpush1.msra.mxu0 %v990
        %1019 = vmatprep.subr.mxu0 0.0
        %1020 = vmatpush1.msra.mxu0 %v991
        %1021 = vmatprep.subr.mxu0 0.0
        %1022 = vmatpush1.msra.mxu0 %v992
        %1023 = vmatprep.subr.mxu0 0.0
        %1024 = vmatpush1.msra.mxu0 %v993
        %1025 = vmatprep.subr.mxu0 0.0
        %1026 = vmatpush1.msra.mxu0 %v994
        %1027 = vmatprep.subr.mxu0 0.0
        %1028 = vmatpush1.msra.mxu0 0.0
        %1029 = vmatprep.subr.mxu0 0.0
        %1030 = vmatpush1.msra.mxu0 0.0
        %1031 = vmatprep.subr.mxu0 0.0
        %1032 = vmatpush1.msra.mxu0 0.0
        %1033 = vmatprep.subr.mxu0 0.0
        %1034 = vmatpush1.msra.mxu0 0.0
        %1035 = vmatprep.subr.mxu0 0.0
        %1036 = vmatpush1.msra.mxu0 0.0
        %1037 = vmatprep.subr.mxu0 0.0
        %1038 = vmatpush1.msra.mxu0 0.0
        %1039 = vmatprep.subr.mxu0 0.0
        %1040 = vmatpush1.msra.mxu0 0.0
        %1041 = vmatprep.subr.mxu0 0.0
        %1042 = vmatpush1.msra.mxu0 0.0
        %1043 = vmatprep.subr.mxu0 0.0
        %1044 = vmatpush1.msra.mxu0 0.0
        %1045 = vmatprep.subr.mxu0 0.0
        %1046 = vmatpush1.msra.mxu0 0.0
        %1047 = vmatprep.subr.mxu0 0.0
        %1048 = vmatpush1.msra.mxu0 0.0
        %1049 = vmatprep.subr.mxu0 0.0
        %1050 = vmatpush1.msra.mxu0 0.0
        %1051 = vmatprep.subr.mxu0 0.0
        %1052 = vmatpush1.msra.mxu0 0.0
        %1053 = vmatprep.subr.mxu0 0.0
        %1054 = vmatpush1.msra.mxu0 0.0
        %1055 = vmatprep.subr.mxu0 0.0
        %1056 = vmatpush1.msra.mxu0 0.0
        %1057 = vmatprep.subr.mxu0 0.0
        %1058 = vmatpush1.msra.mxu0 0.0
        %1059 = vmatprep.mubr.f32.mxu0 0.0
        %1060 = vmatmul.mubr.f32.gmra.mrb[0].mxu0 %v960
        %v1061 = vpop.f32.mrb[0].mxu0
        %v1062 = vadd.f32 0.0, %v1061
        %v1063 = vpop.f32.mrb[0].mxu0
        %1064 = vmatprep.mubr.f32.mxu0 0.0
        %1065 = vmatmul.mubr.f32.gmra.mrb[0].mxu0 %v965
        %v1066 = vpop.f32.mrb[0].mxu0
        %v1067 = vadd.f32 0.0, %v1066
        %v1068 = vpop.f32.mrb[0].mxu0
        %1069 = vmatprep.mubr.f32.mxu0 0.0
        %1070 = vmatmul.mubr.f32.gmra.mrb[0].mxu0 %v970
        %v1071 = vpop.f32.mrb[0].mxu0
        %v1072 = vadd.f32 0.0, %v1071
        %v1073 = vpop.f32.mrb[0].mxu0
        %1074 = vmatprep.mubr.f32.mxu0 0.0
        %1075 = vmatmul.mubr.f32.gmra.mrb[0].mxu0 %v975
        %v1076 = vpop.f32.mrb[0].mxu0
        %v1077 = vadd.f32 0.0, %v1076
        %v1078 = vpop.f32.mrb[0].mxu0
        %1079 = vdwg.mxu0
        %v1080 = vadd.f32 %v851, %v1062
        %v1081 = vadd.f32 %v856, %v1067
        %v1082 = vadd.f32 %v861, %v1072
        %v1083 = vadd.f32 %v866, %v1077
        %1084 = vset.pattern.permute.xlu0 3
        %1085 = vperm.xlu0 %1084, %v426
        %v1086 = vpop.permute.xlu0 %1085
        %1087 = vset.pattern.permute.xlu0 3
        %1088 = vperm.xlu0 %1087, %v427
        %v1089 = vpop.permute.xlu0 %1088
        %1090 = vset.pattern.permute.xlu0 3
        %1091 = vperm.xlu0 %1090, %v428
        %v1092 = vpop.permute.xlu0 %1091
        %1093 = vset.pattern.permute.xlu0 3
        %1094 = vperm.xlu0 %1093, %v429
        %v1095 = vpop.permute.xlu0 %1094
        %vm1096 = vcmp.eq.s32.totalorder %v447, %v1086
        %vm1097 = vcmp.eq.s32.totalorder %v447, %v1089
        %vm1098 = vcmp.eq.s32.totalorder %v447, %v1092
        %vm1099 = vcmp.eq.s32.totalorder %v447, %v1095
        %v1100 = vsel %vm1096, 1, 0
        %v1101 = vsel %vm1097, 1, 0
        %v1102 = vsel %vm1098, 1, 0
        %v1103 = vsel %vm1099, 1, 0
        %v1104 = vcvt.s32.f32 %v1100
        %v1105 = vcvt.s32.f32 %v1101
        %v1106 = vcvt.s32.f32 %v1102
        %v1107 = vcvt.s32.f32 %v1103
        %1108 = vmatprep.subr.mxu0 0.0
        %1109 = vmatpush1.msra.mxu0 %v430
        %1110 = vmatprep.subr.mxu0 0.0
        %1111 = vmatpush1.msra.mxu0 %v431
        %1112 = vmatprep.subr.mxu0 0.0
        %1113 = vmatpush1.msra.mxu0 %v432
        %1114 = vmatprep.subr.mxu0 0.0
        %1115 = vmatpush1.msra.mxu0 %v433
        %1116 = vmatprep.subr.mxu0 0.0
        %1117 = vmatpush1.msra.mxu0 %v434
        %1118 = vmatprep.subr.mxu0 0.0
        %1119 = vmatpush1.msra.mxu0 %v435
        %1120 = vmatprep.subr.mxu0 0.0
        %1121 = vmatpush1.msra.mxu0 %v436
        %1122 = vmatprep.subr.mxu0 0.0
        %1123 = vmatpush1.msra.mxu0 %v437
        %1124 = vmatprep.subr.mxu0 0.0
        %1125 = vmatpush1.msra.mxu0 %v438
        %1126 = vmatprep.subr.mxu0 0.0
        %1127 = vmatpush1.msra.mxu0 %v439
        %1128 = vmatprep.subr.mxu0 0.0
        %1129 = vmatpush1.msra.mxu0 %v440
        %1130 = vmatprep.subr.mxu0 0.0
        %1131 = vmatpush1.msra.mxu0 %v441
        %1132 = vmatprep.subr.mxu0 0.0
        %1133 = vmatpush1.msra.mxu0 %v442
        %1134 = vmatprep.subr.mxu0 0.0
        %1135 = vmatpush1.msra.mxu0 %v443
        %1136 = vmatprep.subr.mxu0 0.0
        %1137 = vmatpush1.msra.mxu0 %v444
        %1138 = vmatprep.subr.mxu0 0.0
        %1139 = vmatpush1.msra.mxu0 %v445
        %1140 = vmatprep.subr.mxu0 0.0
        %1141 = vmatpush1.msra.mxu0 0.0
        %1142 = vmatprep.subr.mxu0 0.0
        %1143 = vmatpush1.msra.mxu0 0.0
        %1144 = vmatprep.subr.mxu0 0.0
        %1145 = vmatpush1.msra.mxu0 0.0
        %1146 = vmatprep.subr.mxu0 0.0
        %1147 = vmatpush1.msra.mxu0 0.0
        %1148 = vmatprep.subr.mxu0 0.0
        %1149 = vmatpush1.msra.mxu0 0.0
        %1150 = vmatprep.subr.mxu0 0.0
        %1151 = vmatpush1.msra.mxu0 0.0
        %1152 = vmatprep.subr.mxu0 0.0
        %1153 = vmatpush1.msra.mxu0 0.0
        %1154 = vmatprep.subr.mxu0 0.0
        %1155 = vmatpush1.msra.mxu0 0.0
        %1156 = vmatprep.subr.mxu0 0.0
        %1157 = vmatpush1.msra.mxu0 0.0
        %1158 = vmatprep.subr.mxu0 0.0
        %1159 = vmatpush1.msra.mxu0 0.0
        %1160 = vmatprep.subr.mxu0 0.0
        %1161 = vmatpush1.msra.mxu0 0.0
        %1162 = vmatprep.subr.mxu0 0.0
        %1163 = vmatpush1.msra.mxu0 0.0
        %1164 = vmatprep.subr.mxu0 0.0
        %1165 = vmatpush1.msra.mxu0 0.0
        %1166 = vmatprep.subr.mxu0 0.0
        %1167 = vmatpush1.msra.mxu0 0.0
        %1168 = vmatprep.subr.mxu0 0.0
        %1169 = vmatpush1.msra.mxu0 0.0
        %1170 = vmatprep.subr.mxu0 0.0
        %1171 = vmatpush1.msra.mxu0 0.0
        %1172 = vmatprep.mubr.f32.mxu0 0.0
        %1173 = vmatmul.mubr.f32.gmra.mrb[0].mxu0 %v1104
        %v1174 = vpop.f32.mrb[0].mxu0
        %v1175 = vadd.f32 0.0, %v1174
        %v1176 = vpop.f32.mrb[0].mxu0
        %1177 = vmatprep.mubr.f32.mxu0 0.0
        %1178 = vmatmul.mubr.f32.gmra.mrb[0].mxu0 %v1105
        %v1179 = vpop.f32.mrb[0].mxu0
        %v1180 = vadd.f32 0.0, %v1179
        %v1181 = vpop.f32.mrb[0].mxu0
        %1182 = vmatprep.mubr.f32.mxu0 0.0
        %1183 = vmatmul.mubr.f32.gmra.mrb[0].mxu0 %v1106
        %v1184 = vpop.f32.mrb[0].mxu0
        %v1185 = vadd.f32 0.0, %v1184
        %v1186 = vpop.f32.mrb[0].mxu0
        %1187 = vmatprep.mubr.f32.mxu0 0.0
        %1188 = vmatmul.mubr.f32.gmra.mrb[0].mxu0 %v1107
        %v1189 = vpop.f32.mrb[0].mxu0
        %v1190 = vadd.f32 0.0, %v1189
        %v1191 = vpop.f32.mrb[0].mxu0
        %1192 = vdwg.mxu0
        %s1193 = scalar_lea.vmem [#allocation7], 384
        %v1194 = vld [vmem:[%s1193] sm:$0xff]
        %v1195 = vld [vmem:[%s1193 + $0x8] sm:$0xff]
        %v1196 = vld [vmem:[%s1193 + $0x10] sm:$0xff]
        %v1197 = vld [vmem:[%s1193 + $0x18] sm:$0xff]
        %v1198 = vld [vmem:[%s1193 + $0x20] sm:$0xff]
        %v1199 = vld [vmem:[%s1193 + $0x28] sm:$0xff]
        %v1200 = vld [vmem:[%s1193 + $0x30] sm:$0xff]
        %v1201 = vld [vmem:[%s1193 + $0x38] sm:$0xff]
        %v1202 = vld [vmem:[%s1193 + $0x40] sm:$0xff]
        %v1203 = vld [vmem:[%s1193 + $0x48] sm:$0xff]
        %v1204 = vld [vmem:[%s1193 + $0x50] sm:$0xff]
        %v1205 = vld [vmem:[%s1193 + $0x58] sm:$0xff]
        %v1206 = vld [vmem:[%s1193 + $0x60] sm:$0xff]
        %v1207 = vld [vmem:[%s1193 + $0x68] sm:$0xff]
        %v1208 = vld [vmem:[%s1193 + $0x70] sm:$0xff]
        %v1209 = vld [vmem:[%s1193 + $0x78] sm:$0xff]
        %1210 = vmatprep.subr.mxu0 0.0
        %1211 = vmatpush1.msra.mxu0 %v1194
        %1212 = vmatprep.subr.mxu0 0.0
        %1213 = vmatpush1.msra.mxu0 %v1195
        %1214 = vmatprep.subr.mxu0 0.0
        %1215 = vmatpush1.msra.mxu0 %v1196
        %1216 = vmatprep.subr.mxu0 0.0
        %1217 = vmatpush1.msra.mxu0 %v1197
        %1218 = vmatprep.subr.mxu0 0.0
        %1219 = vmatpush1.msra.mxu0 %v1198
        %1220 = vmatprep.subr.mxu0 0.0
        %1221 = vmatpush1.msra.mxu0 %v1199
        %1222 = vmatprep.subr.mxu0 0.0
        %1223 = vmatpush1.msra.mxu0 %v1200
        %1224 = vmatprep.subr.mxu0 0.0
        %1225 = vmatpush1.msra.mxu0 %v1201
        %1226 = vmatprep.subr.mxu0 0.0
        %1227 = vmatpush1.msra.mxu0 %v1202
        %1228 = vmatprep.subr.mxu0 0.0
        %1229 = vmatpush1.msra.mxu0 %v1203
        %1230 = vmatprep.subr.mxu0 0.0
        %1231 = vmatpush1.msra.mxu0 %v1204
        %1232 = vmatprep.subr.mxu0 0.0
        %1233 = vmatpush1.msra.mxu0 %v1205
        %1234 = vmatprep.subr.mxu0 0.0
        %1235 = vmatpush1.msra.mxu0 %v1206
        %1236 = vmatprep.subr.mxu0 0.0
        %1237 = vmatpush1.msra.mxu0 %v1207
        %1238 = vmatprep.subr.mxu0 0.0
        %1239 = vmatpush1.msra.mxu0 %v1208
        %1240 = vmatprep.subr.mxu0 0.0
        %1241 = vmatpush1.msra.mxu0 %v1209
        %1242 = vmatprep.subr.mxu0 0.0
        %1243 = vmatpush1.msra.mxu0 0.0
        %1244 = vmatprep.subr.mxu0 0.0
        %1245 = vmatpush1.msra.mxu0 0.0
        %1246 = vmatprep.subr.mxu0 0.0
        %1247 = vmatpush1.msra.mxu0 0.0
        %1248 = vmatprep.subr.mxu0 0.0
        %1249 = vmatpush1.msra.mxu0 0.0
        %1250 = vmatprep.subr.mxu0 0.0
        %1251 = vmatpush1.msra.mxu0 0.0
        %1252 = vmatprep.subr.mxu0 0.0
        %1253 = vmatpush1.msra.mxu0 0.0
        %1254 = vmatprep.subr.mxu0 0.0
        %1255 = vmatpush1.msra.mxu0 0.0
        %1256 = vmatprep.subr.mxu0 0.0
        %1257 = vmatpush1.msra.mxu0 0.0
        %1258 = vmatprep.subr.mxu0 0.0
        %1259 = vmatpush1.msra.mxu0 0.0
        %1260 = vmatprep.subr.mxu0 0.0
        %1261 = vmatpush1.msra.mxu0 0.0
        %1262 = vmatprep.subr.mxu0 0.0
        %1263 = vmatpush1.msra.mxu0 0.0
        %1264 = vmatprep.subr.mxu0 0.0
        %1265 = vmatpush1.msra.mxu0 0.0
        %1266 = vmatprep.subr.mxu0 0.0
        %1267 = vmatpush1.msra.mxu0 0.0
        %1268 = vmatprep.subr.mxu0 0.0
        %1269 = vmatpush1.msra.mxu0 0.0
        %1270 = vmatprep.subr.mxu0 0.0
        %1271 = vmatpush1.msra.mxu0 0.0
        %1272 = vmatprep.subr.mxu0 0.0
        %1273 = vmatpush1.msra.mxu0 0.0
        %1274 = vmatprep.mubr.f32.mxu0 0.0
        %1275 = vmatmul.mubr.f32.gmra.mrb[0].mxu0 %v1175
        %v1276 = vpop.f32.mrb[0].mxu0
        %v1277 = vadd.f32 0.0, %v1276
        %v1278 = vpop.f32.mrb[0].mxu0
        %1279 = vmatprep.mubr.f32.mxu0 0.0
        %1280 = vmatmul.mubr.f32.gmra.mrb[0].mxu0 %v1180
        %v1281 = vpop.f32.mrb[0].mxu0
        %v1282 = vadd.f32 0.0, %v1281
        %v1283 = vpop.f32.mrb[0].mxu0
        %1284 = vmatprep.mubr.f32.mxu0 0.0
        %1285 = vmatmul.mubr.f32.gmra.mrb[0].mxu0 %v1185
        %v1286 = vpop.f32.mrb[0].mxu0
        %v1287 = vadd.f32 0.0, %v1286
        %v1288 = vpop.f32.mrb[0].mxu0
        %1289 = vmatprep.mubr.f32.mxu0 0.0
        %1290 = vmatmul.mubr.f32.gmra.mrb[0].mxu0 %v1190
        %v1291 = vpop.f32.mrb[0].mxu0
        %v1292 = vadd.f32 0.0, %v1291
        %v1293 = vpop.f32.mrb[0].mxu0
        %1294 = vdwg.mxu0
        %v1295 = vadd.f32 %v1080, %v1277
        %v1296 = vadd.f32 %v1081, %v1282
        %v1297 = vadd.f32 %v1082, %v1287
        %v1298 = vadd.f32 %v1083, %v1292
        %1299 = vset.pattern.permute.xlu0 4
        %1300 = vperm.xlu0 %1299, %v426
        %v1301 = vpop.permute.xlu0 %1300
        %1302 = vset.pattern.permute.xlu0 4
        %1303 = vperm.xlu0 %1302, %v427
        %v1304 = vpop.permute.xlu0 %1303
        %1305 = vset.pattern.permute.xlu0 4
        %1306 = vperm.xlu0 %1305, %v428
        %v1307 = vpop.permute.xlu0 %1306
        %1308 = vset.pattern.permute.xlu0 4
        %1309 = vperm.xlu0 %1308, %v429
        %v1310 = vpop.permute.xlu0 %1309
        %vm1311 = vcmp.eq.s32.totalorder %v447, %v1301
        %vm1312 = vcmp.eq.s32.totalorder %v447, %v1304
        %vm1313 = vcmp.eq.s32.totalorder %v447, %v1307
        %vm1314 = vcmp.eq.s32.totalorder %v447, %v1310
        %v1315 = vsel %vm1311, 1, 0
        %v1316 = vsel %vm1312, 1, 0
        %v1317 = vsel %vm1313, 1, 0
        %v1318 = vsel %vm1314, 1, 0
        %v1319 = vcvt.s32.f32 %v1315
        %v1320 = vcvt.s32.f32 %v1316
        %v1321 = vcvt.s32.f32 %v1317
        %v1322 = vcvt.s32.f32 %v1318
        %1323 = vmatprep.subr.mxu0 0.0
        %1324 = vmatpush1.msra.mxu0 %v430
        %1325 = vmatprep.subr.mxu0 0.0
        %1326 = vmatpush1.msra.mxu0 %v431
        %1327 = vmatprep.subr.mxu0 0.0
        %1328 = vmatpush1.msra.mxu0 %v432
        %1329 = vmatprep.subr.mxu0 0.0
        %1330 = vmatpush1.msra.mxu0 %v433
        %1331 = vmatprep.subr.mxu0 0.0
        %1332 = vmatpush1.msra.mxu0 %v434
        %1333 = vmatprep.subr.mxu0 0.0
        %1334 = vmatpush1.msra.mxu0 %v435
        %1335 = vmatprep.subr.mxu0 0.0
        %1336 = vmatpush1.msra.mxu0 %v436
        %1337 = vmatprep.subr.mxu0 0.0
        %1338 = vmatpush1.msra.mxu0 %v437
        %1339 = vmatprep.subr.mxu0 0.0
        %1340 = vmatpush1.msra.mxu0 %v438
        %1341 = vmatprep.subr.mxu0 0.0
        %1342 = vmatpush1.msra.mxu0 %v439
        %1343 = vmatprep.subr.mxu0 0.0
        %1344 = vmatpush1.msra.mxu0 %v440
        %1345 = vmatprep.subr.mxu0 0.0
        %1346 = vmatpush1.msra.mxu0 %v441
        %1347 = vmatprep.subr.mxu0 0.0
        %1348 = vmatpush1.msra.mxu0 %v442
        %1349 = vmatprep.subr.mxu0 0.0
        %1350 = vmatpush1.msra.mxu0 %v443
        %1351 = vmatprep.subr.mxu0 0.0
        %1352 = vmatpush1.msra.mxu0 %v444
        %1353 = vmatprep.subr.mxu0 0.0
        %1354 = vmatpush1.msra.mxu0 %v445
        %1355 = vmatprep.subr.mxu0 0.0
        %1356 = vmatpush1.msra.mxu0 0.0
        %1357 = vmatprep.subr.mxu0 0.0
        %1358 = vmatpush1.msra.mxu0 0.0
        %1359 = vmatprep.subr.mxu0 0.0
        %1360 = vmatpush1.msra.mxu0 0.0
        %1361 = vmatprep.subr.mxu0 0.0
        %1362 = vmatpush1.msra.mxu0 0.0
        %1363 = vmatprep.subr.mxu0 0.0
        %1364 = vmatpush1.msra.mxu0 0.0
        %1365 = vmatprep.subr.mxu0 0.0
        %1366 = vmatpush1.msra.mxu0 0.0
        %1367 = vmatprep.subr.mxu0 0.0
        %1368 = vmatpush1.msra.mxu0 0.0
        %1369 = vmatprep.subr.mxu0 0.0
        %1370 = vmatpush1.msra.mxu0 0.0
        %1371 = vmatprep.subr.mxu0 0.0
        %1372 = vmatpush1.msra.mxu0 0.0
        %1373 = vmatprep.subr.mxu0 0.0
        %1374 = vmatpush1.msra.mxu0 0.0
        %1375 = vmatprep.subr.mxu0 0.0
        %1376 = vmatpush1.msra.mxu0 0.0
        %1377 = vmatprep.subr.mxu0 0.0
        %1378 = vmatpush1.msra.mxu0 0.0
        %1379 = vmatprep.subr.mxu0 0.0
        %1380 = vmatpush1.msra.mxu0 0.0
        %1381 = vmatprep.subr.mxu0 0.0
        %1382 = vmatpush1.msra.mxu0 0.0
        %1383 = vmatprep.subr.mxu0 0.0
        %1384 = vmatpush1.msra.mxu0 0.0
        %1385 = vmatprep.subr.mxu0 0.0
        %1386 = vmatpush1.msra.mxu0 0.0
        %1387 = vmatprep.mubr.f32.mxu0 0.0
        %1388 = vmatmul.mubr.f32.gmra.mrb[0].mxu0 %v1319
        %v1389 = vpop.f32.mrb[0].mxu0
        %v1390 = vadd.f32 0.0, %v1389
        %v1391 = vpop.f32.mrb[0].mxu0
        %1392 = vmatprep.mubr.f32.mxu0 0.0
        %1393 = vmatmul.mubr.f32.gmra.mrb[0].mxu0 %v1320
        %v1394 = vpop.f32.mrb[0].mxu0
        %v1395 = vadd.f32 0.0, %v1394
        %v1396 = vpop.f32.mrb[0].mxu0
        %1397 = vmatprep.mubr.f32.mxu0 0.0
        %1398 = vmatmul.mubr.f32.gmra.mrb[0].mxu0 %v1321
        %v1399 = vpop.f32.mrb[0].mxu0
        %v1400 = vadd.f32 0.0, %v1399
        %v1401 = vpop.f32.mrb[0].mxu0
        %1402 = vmatprep.mubr.f32.mxu0 0.0
        %1403 = vmatmul.mubr.f32.gmra.mrb[0].mxu0 %v1322
        %v1404 = vpop.f32.mrb[0].mxu0
        %v1405 = vadd.f32 0.0, %v1404
        %v1406 = vpop.f32.mrb[0].mxu0
        %1407 = vdwg.mxu0
        %s1408 = scalar_lea.vmem [#allocation7], 512
        %v1409 = vld [vmem:[%s1408] sm:$0xff]
        %v1410 = vld [vmem:[%s1408 + $0x8] sm:$0xff]
        %v1411 = vld [vmem:[%s1408 + $0x10] sm:$0xff]
        %v1412 = vld [vmem:[%s1408 + $0x18] sm:$0xff]
        %v1413 = vld [vmem:[%s1408 + $0x20] sm:$0xff]
        %v1414 = vld [vmem:[%s1408 + $0x28] sm:$0xff]
        %v1415 = vld [vmem:[%s1408 + $0x30] sm:$0xff]
        %v1416 = vld [vmem:[%s1408 + $0x38] sm:$0xff]
        %v1417 = vld [vmem:[%s1408 + $0x40] sm:$0xff]
        %v1418 = vld [vmem:[%s1408 + $0x48] sm:$0xff]
        %v1419 = vld [vmem:[%s1408 + $0x50] sm:$0xff]
        %v1420 = vld [vmem:[%s1408 + $0x58] sm:$0xff]
        %v1421 = vld [vmem:[%s1408 + $0x60] sm:$0xff]
        %v1422 = vld [vmem:[%s1408 + $0x68] sm:$0xff]
        %v1423 = vld [vmem:[%s1408 + $0x70] sm:$0xff]
        %v1424 = vld [vmem:[%s1408 + $0x78] sm:$0xff]
        %1425 = vmatprep.subr.mxu0 0.0
        %1426 = vmatpush1.msra.mxu0 %v1409
        %1427 = vmatprep.subr.mxu0 0.0
        %1428 = vmatpush1.msra.mxu0 %v1410
        %1429 = vmatprep.subr.mxu0 0.0
        %1430 = vmatpush1.msra.mxu0 %v1411
        %1431 = vmatprep.subr.mxu0 0.0
        %1432 = vmatpush1.msra.mxu0 %v1412
        %1433 = vmatprep.subr.mxu0 0.0
        %1434 = vmatpush1.msra.mxu0 %v1413
        %1435 = vmatprep.subr.mxu0 0.0
        %1436 = vmatpush1.msra.mxu0 %v1414
        %1437 = vmatprep.subr.mxu0 0.0
        %1438 = vmatpush1.msra.mxu0 %v1415
        %1439 = vmatprep.subr.mxu0 0.0
        %1440 = vmatpush1.msra.mxu0 %v1416
        %1441 = vmatprep.subr.mxu0 0.0
        %1442 = vmatpush1.msra.mxu0 %v1417
        %1443 = vmatprep.subr.mxu0 0.0
        %1444 = vmatpush1.msra.mxu0 %v1418
        %1445 = vmatprep.subr.mxu0 0.0
        %1446 = vmatpush1.msra.mxu0 %v1419
        %1447 = vmatprep.subr.mxu0 0.0
        %1448 = vmatpush1.msra.mxu0 %v1420
        %1449 = vmatprep.subr.mxu0 0.0
        %1450 = vmatpush1.msra.mxu0 %v1421
        %1451 = vmatprep.subr.mxu0 0.0
        %1452 = vmatpush1.msra.mxu0 %v1422
        %1453 = vmatprep.subr.mxu0 0.0
        %1454 = vmatpush1.msra.mxu0 %v1423
        %1455 = vmatprep.subr.mxu0 0.0
        %1456 = vmatpush1.msra.mxu0 %v1424
        %1457 = vmatprep.subr.mxu0 0.0
        %1458 = vmatpush1.msra.mxu0 0.0
        %1459 = vmatprep.subr.mxu0 0.0
        %1460 = vmatpush1.msra.mxu0 0.0
        %1461 = vmatprep.subr.mxu0 0.0
        %1462 = vmatpush1.msra.mxu0 0.0
        %1463 = vmatprep.subr.mxu0 0.0
        %1464 = vmatpush1.msra.mxu0 0.0
        %1465 = vmatprep.subr.mxu0 0.0
        %1466 = vmatpush1.msra.mxu0 0.0
        %1467 = vmatprep.subr.mxu0 0.0
        %1468 = vmatpush1.msra.mxu0 0.0
        %1469 = vmatprep.subr.mxu0 0.0
        %1470 = vmatpush1.msra.mxu0 0.0
        %1471 = vmatprep.subr.mxu0 0.0
        %1472 = vmatpush1.msra.mxu0 0.0
        %1473 = vmatprep.subr.mxu0 0.0
        %1474 = vmatpush1.msra.mxu0 0.0
        %1475 = vmatprep.subr.mxu0 0.0
        %1476 = vmatpush1.msra.mxu0 0.0
        %1477 = vmatprep.subr.mxu0 0.0
        %1478 = vmatpush1.msra.mxu0 0.0
        %1479 = vmatprep.subr.mxu0 0.0
        %1480 = vmatpush1.msra.mxu0 0.0
        %1481 = vmatprep.subr.mxu0 0.0
        %1482 = vmatpush1.msra.mxu0 0.0
        %1483 = vmatprep.subr.mxu0 0.0
        %1484 = vmatpush1.msra.mxu0 0.0
        %1485 = vmatprep.subr.mxu0 0.0
        %1486 = vmatpush1.msra.mxu0 0.0
        %1487 = vmatprep.subr.mxu0 0.0
        %1488 = vmatpush1.msra.mxu0 0.0
        %1489 = vmatprep.mubr.f32.mxu0 0.0
        %1490 = vmatmul.mubr.f32.gmra.mrb[0].mxu0 %v1390
        %v1491 = vpop.f32.mrb[0].mxu0
        %v1492 = vadd.f32 0.0, %v1491
        %v1493 = vpop.f32.mrb[0].mxu0
        %1494 = vmatprep.mubr.f32.mxu0 0.0
        %1495 = vmatmul.mubr.f32.gmra.mrb[0].mxu0 %v1395
        %v1496 = vpop.f32.mrb[0].mxu0
        %v1497 = vadd.f32 0.0, %v1496
        %v1498 = vpop.f32.mrb[0].mxu0
        %1499 = vmatprep.mubr.f32.mxu0 0.0
        %1500 = vmatmul.mubr.f32.gmra.mrb[0].mxu0 %v1400
        %v1501 = vpop.f32.mrb[0].mxu0
        %v1502 = vadd.f32 0.0, %v1501
        %v1503 = vpop.f32.mrb[0].mxu0
        %1504 = vmatprep.mubr.f32.mxu0 0.0
        %1505 = vmatmul.mubr.f32.gmra.mrb[0].mxu0 %v1405
        %v1506 = vpop.f32.mrb[0].mxu0
        %v1507 = vadd.f32 0.0, %v1506
        %v1508 = vpop.f32.mrb[0].mxu0
        %1509 = vdwg.mxu0
        %v1510 = vadd.f32 %v1295, %v1492
        %v1511 = vadd.f32 %v1296, %v1497
        %v1512 = vadd.f32 %v1297, %v1502
        %v1513 = vadd.f32 %v1298, %v1507
        %1514 = vset.pattern.permute.xlu0 5
        %1515 = vperm.xlu0 %1514, %v426
        %v1516 = vpop.permute.xlu0 %1515
        %1517 = vset.pattern.permute.xlu0 5
        %1518 = vperm.xlu0 %1517, %v427
        %v1519 = vpop.permute.xlu0 %1518
        %1520 = vset.pattern.permute.xlu0 5
        %1521 = vperm.xlu0 %1520, %v428
        %v1522 = vpop.permute.xlu0 %1521
        %1523 = vset.pattern.permute.xlu0 5
        %1524 = vperm.xlu0 %1523, %v429
        %v1525 = vpop.permute.xlu0 %1524
        %vm1526 = vcmp.eq.s32.totalorder %v447, %v1516
        %vm1527 = vcmp.eq.s32.totalorder %v447, %v1519
        %vm1528 = vcmp.eq.s32.totalorder %v447, %v1522
        %vm1529 = vcmp.eq.s32.totalorder %v447, %v1525
        %v1530 = vsel %vm1526, 1, 0
        %v1531 = vsel %vm1527, 1, 0
        %v1532 = vsel %vm1528, 1, 0
        %v1533 = vsel %vm1529, 1, 0
        %v1534 = vcvt.s32.f32 %v1530
        %v1535 = vcvt.s32.f32 %v1531
        %v1536 = vcvt.s32.f32 %v1532
        %v1537 = vcvt.s32.f32 %v1533
        %1538 = vmatprep.subr.mxu0 0.0
        %1539 = vmatpush1.msra.mxu0 %v430
        %1540 = vmatprep.subr.mxu0 0.0
        %1541 = vmatpush1.msra.mxu0 %v431
        %1542 = vmatprep.subr.mxu0 0.0
        %1543 = vmatpush1.msra.mxu0 %v432
        %1544 = vmatprep.subr.mxu0 0.0
        %1545 = vmatpush1.msra.mxu0 %v433
        %1546 = vmatprep.subr.mxu0 0.0
        %1547 = vmatpush1.msra.mxu0 %v434
        %1548 = vmatprep.subr.mxu0 0.0
        %1549 = vmatpush1.msra.mxu0 %v435
        %1550 = vmatprep.subr.mxu0 0.0
        %1551 = vmatpush1.msra.mxu0 %v436
        %1552 = vmatprep.subr.mxu0 0.0
        %1553 = vmatpush1.msra.mxu0 %v437
        %1554 = vmatprep.subr.mxu0 0.0
        %1555 = vmatpush1.msra.mxu0 %v438
        %1556 = vmatprep.subr.mxu0 0.0
        %1557 = vmatpush1.msra.mxu0 %v439
        %1558 = vmatprep.subr.mxu0 0.0
        %1559 = vmatpush1.msra.mxu0 %v440
        %1560 = vmatprep.subr.mxu0 0.0
        %1561 = vmatpush1.msra.mxu0 %v441
        %1562 = vmatprep.subr.mxu0 0.0
        %1563 = vmatpush1.msra.mxu0 %v442
        %1564 = vmatprep.subr.mxu0 0.0
        %1565 = vmatpush1.msra.mxu0 %v443
        %1566 = vmatprep.subr.mxu0 0.0
        %1567 = vmatpush1.msra.mxu0 %v444
        %1568 = vmatprep.subr.mxu0 0.0
        %1569 = vmatpush1.msra.mxu0 %v445
        %1570 = vmatprep.subr.mxu0 0.0
        %1571 = vmatpush1.msra.mxu0 0.0
        %1572 = vmatprep.subr.mxu0 0.0
        %1573 = vmatpush1.msra.mxu0 0.0
        %1574 = vmatprep.subr.mxu0 0.0
        %1575 = vmatpush1.msra.mxu0 0.0
        %1576 = vmatprep.subr.mxu0 0.0
        %1577 = vmatpush1.msra.mxu0 0.0
        %1578 = vmatprep.subr.mxu0 0.0
        %1579 = vmatpush1.msra.mxu0 0.0
        %1580 = vmatprep.subr.mxu0 0.0
        %1581 = vmatpush1.msra.mxu0 0.0
        %1582 = vmatprep.subr.mxu0 0.0
        %1583 = vmatpush1.msra.mxu0 0.0
        %1584 = vmatprep.subr.mxu0 0.0
        %1585 = vmatpush1.msra.mxu0 0.0
        %1586 = vmatprep.subr.mxu0 0.0
        %1587 = vmatpush1.msra.mxu0 0.0
        %1588 = vmatprep.subr.mxu0 0.0
        %1589 = vmatpush1.msra.mxu0 0.0
        %1590 = vmatprep.subr.mxu0 0.0
        %1591 = vmatpush1.msra.mxu0 0.0
        %1592 = vmatprep.subr.mxu0 0.0
        %1593 = vmatpush1.msra.mxu0 0.0
        %1594 = vmatprep.subr.mxu0 0.0
        %1595 = vmatpush1.msra.mxu0 0.0
        %1596 = vmatprep.subr.mxu0 0.0
        %1597 = vmatpush1.msra.mxu0 0.0
        %1598 = vmatprep.subr.mxu0 0.0
        %1599 = vmatpush1.msra.mxu0 0.0
        %1600 = vmatprep.subr.mxu0 0.0
        %1601 = vmatpush1.msra.mxu0 0.0
        %1602 = vmatprep.mubr.f32.mxu0 0.0
        %1603 = vmatmul.mubr.f32.gmra.mrb[0].mxu0 %v1534
        %v1604 = vpop.f32.mrb[0].mxu0
        %v1605 = vadd.f32 0.0, %v1604
        %v1606 = vpop.f32.mrb[0].mxu0
        %1607 = vmatprep.mubr.f32.mxu0 0.0
        %1608 = vmatmul.mubr.f32.gmra.mrb[0].mxu0 %v1535
        %v1609 = vpop.f32.mrb[0].mxu0
        %v1610 = vadd.f32 0.0, %v1609
        %v1611 = vpop.f32.mrb[0].mxu0
        %1612 = vmatprep.mubr.f32.mxu0 0.0
        %1613 = vmatmul.mubr.f32.gmra.mrb[0].mxu0 %v1536
        %v1614 = vpop.f32.mrb[0].mxu0
        %v1615 = vadd.f32 0.0, %v1614
        %v1616 = vpop.f32.mrb[0].mxu0
        %1617 = vmatprep.mubr.f32.mxu0 0.0
        %1618 = vmatmul.mubr.f32.gmra.mrb[0].mxu0 %v1537
        %v1619 = vpop.f32.mrb[0].mxu0
        %v1620 = vadd.f32 0.0, %v1619
        %v1621 = vpop.f32.mrb[0].mxu0
        %1622 = vdwg.mxu0
        %s1623 = scalar_lea.vmem [#allocation7], 640
        %v1624 = vld [vmem:[%s1623] sm:$0xff]
        %v1625 = vld [vmem:[%s1623 + $0x8] sm:$0xff]
        %v1626 = vld [vmem:[%s1623 + $0x10] sm:$0xff]
        %v1627 = vld [vmem:[%s1623 + $0x18] sm:$0xff]
        %v1628 = vld [vmem:[%s1623 + $0x20] sm:$0xff]
        %v1629 = vld [vmem:[%s1623 + $0x28] sm:$0xff]
        %v1630 = vld [vmem:[%s1623 + $0x30] sm:$0xff]
        %v1631 = vld [vmem:[%s1623 + $0x38] sm:$0xff]
        %v1632 = vld [vmem:[%s1623 + $0x40] sm:$0xff]
        %v1633 = vld [vmem:[%s1623 + $0x48] sm:$0xff]
        %v1634 = vld [vmem:[%s1623 + $0x50] sm:$0xff]
        %v1635 = vld [vmem:[%s1623 + $0x58] sm:$0xff]
        %v1636 = vld [vmem:[%s1623 + $0x60] sm:$0xff]
        %v1637 = vld [vmem:[%s1623 + $0x68] sm:$0xff]
        %v1638 = vld [vmem:[%s1623 + $0x70] sm:$0xff]
        %v1639 = vld [vmem:[%s1623 + $0x78] sm:$0xff]
        %1640 = vmatprep.subr.mxu0 0.0
        %1641 = vmatpush1.msra.mxu0 %v1624
        %1642 = vmatprep.subr.mxu0 0.0
        %1643 = vmatpush1.msra.mxu0 %v1625
        %1644 = vmatprep.subr.mxu0 0.0
        %1645 = vmatpush1.msra.mxu0 %v1626
        %1646 = vmatprep.subr.mxu0 0.0
        %1647 = vmatpush1.msra.mxu0 %v1627
        %1648 = vmatprep.subr.mxu0 0.0
        %1649 = vmatpush1.msra.mxu0 %v1628
        %1650 = vmatprep.subr.mxu0 0.0
        %1651 = vmatpush1.msra.mxu0 %v1629
        %1652 = vmatprep.subr.mxu0 0.0
        %1653 = vmatpush1.msra.mxu0 %v1630
        %1654 = vmatprep.subr.mxu0 0.0
        %1655 = vmatpush1.msra.mxu0 %v1631
        %1656 = vmatprep.subr.mxu0 0.0
        %1657 = vmatpush1.msra.mxu0 %v1632
        %1658 = vmatprep.subr.mxu0 0.0
        %1659 = vmatpush1.msra.mxu0 %v1633
        %1660 = vmatprep.subr.mxu0 0.0
        %1661 = vmatpush1.msra.mxu0 %v1634
        %1662 = vmatprep.subr.mxu0 0.0
        %1663 = vmatpush1.msra.mxu0 %v1635
        %1664 = vmatprep.subr.mxu0 0.0
        %1665 = vmatpush1.msra.mxu0 %v1636
        %1666 = vmatprep.subr.mxu0 0.0
        %1667 = vmatpush1.msra.mxu0 %v1637
        %1668 = vmatprep.subr.mxu0 0.0
        %1669 = vmatpush1.msra.mxu0 %v1638
        %1670 = vmatprep.subr.mxu0 0.0
        %1671 = vmatpush1.msra.mxu0 %v1639
        %1672 = vmatprep.subr.mxu0 0.0
        %1673 = vmatpush1.msra.mxu0 0.0
        %1674 = vmatprep.subr.mxu0 0.0
        %1675 = vmatpush1.msra.mxu0 0.0
        %1676 = vmatprep.subr.mxu0 0.0
        %1677 = vmatpush1.msra.mxu0 0.0
        %1678 = vmatprep.subr.mxu0 0.0
        %1679 = vmatpush1.msra.mxu0 0.0
        %1680 = vmatprep.subr.mxu0 0.0
        %1681 = vmatpush1.msra.mxu0 0.0
        %1682 = vmatprep.subr.mxu0 0.0
        %1683 = vmatpush1.msra.mxu0 0.0
        %1684 = vmatprep.subr.mxu0 0.0
        %1685 = vmatpush1.msra.mxu0 0.0
        %1686 = vmatprep.subr.mxu0 0.0
        %1687 = vmatpush1.msra.mxu0 0.0
        %1688 = vmatprep.subr.mxu0 0.0
        %1689 = vmatpush1.msra.mxu0 0.0
        %1690 = vmatprep.subr.mxu0 0.0
        %1691 = vmatpush1.msra.mxu0 0.0
        %1692 = vmatprep.subr.mxu0 0.0
        %1693 = vmatpush1.msra.mxu0 0.0
        %1694 = vmatprep.subr.mxu0 0.0
        %1695 = vmatpush1.msra.mxu0 0.0
        %1696 = vmatprep.subr.mxu0 0.0
        %1697 = vmatpush1.msra.mxu0 0.0
        %1698 = vmatprep.subr.mxu0 0.0
        %1699 = vmatpush1.msra.mxu0 0.0
        %1700 = vmatprep.subr.mxu0 0.0
        %1701 = vmatpush1.msra.mxu0 0.0
        %1702 = vmatprep.subr.mxu0 0.0
        %1703 = vmatpush1.msra.mxu0 0.0
        %1704 = vmatprep.mubr.f32.mxu0 0.0
        %1705 = vmatmul.mubr.f32.gmra.mrb[0].mxu0 %v1605
        %v1706 = vpop.f32.mrb[0].mxu0
        %v1707 = vadd.f32 0.0, %v1706
        %v1708 = vpop.f32.mrb[0].mxu0
        %1709 = vmatprep.mubr.f32.mxu0 0.0
        %1710 = vmatmul.mubr.f32.gmra.mrb[0].mxu0 %v1610
        %v1711 = vpop.f32.mrb[0].mxu0
        %v1712 = vadd.f32 0.0, %v1711
        %v1713 = vpop.f32.mrb[0].mxu0
        %1714 = vmatprep.mubr.f32.mxu0 0.0
        %1715 = vmatmul.mubr.f32.gmra.mrb[0].mxu0 %v1615
        %v1716 = vpop.f32.mrb[0].mxu0
        %v1717 = vadd.f32 0.0, %v1716
        %v1718 = vpop.f32.mrb[0].mxu0
        %1719 = vmatprep.mubr.f32.mxu0 0.0
        %1720 = vmatmul.mubr.f32.gmra.mrb[0].mxu0 %v1620
        %v1721 = vpop.f32.mrb[0].mxu0
        %v1722 = vadd.f32 0.0, %v1721
        %v1723 = vpop.f32.mrb[0].mxu0
        %1724 = vdwg.mxu0
        %v1725 = vadd.f32 %v1510, %v1707
        %v1726 = vadd.f32 %v1511, %v1712
        %v1727 = vadd.f32 %v1512, %v1717
        %v1728 = vadd.f32 %v1513, %v1722
        %1729 = vset.pattern.permute.xlu0 6
        %1730 = vperm.xlu0 %1729, %v426
        %v1731 = vpop.permute.xlu0 %1730
        %1732 = vset.pattern.permute.xlu0 6
        %1733 = vperm.xlu0 %1732, %v427
        %v1734 = vpop.permute.xlu0 %1733
        %1735 = vset.pattern.permute.xlu0 6
        %1736 = vperm.xlu0 %1735, %v428
        %v1737 = vpop.permute.xlu0 %1736
        %1738 = vset.pattern.permute.xlu0 6
        %1739 = vperm.xlu0 %1738, %v429
        %v1740 = vpop.permute.xlu0 %1739
        %vm1741 = vcmp.eq.s32.totalorder %v447, %v1731
        %vm1742 = vcmp.eq.s32.totalorder %v447, %v1734
        %vm1743 = vcmp.eq.s32.totalorder %v447, %v1737
        %vm1744 = vcmp.eq.s32.totalorder %v447, %v1740
        %v1745 = vsel %vm1741, 1, 0
        %v1746 = vsel %vm1742, 1, 0
        %v1747 = vsel %vm1743, 1, 0
        %v1748 = vsel %vm1744, 1, 0
        %v1749 = vcvt.s32.f32 %v1745
        %v1750 = vcvt.s32.f32 %v1746
        %v1751 = vcvt.s32.f32 %v1747
        %v1752 = vcvt.s32.f32 %v1748
        %1753 = vmatprep.subr.mxu0 0.0
        %1754 = vmatpush1.msra.mxu0 %v430
        %1755 = vmatprep.subr.mxu0 0.0
        %1756 = vmatpush1.msra.mxu0 %v431
        %1757 = vmatprep.subr.mxu0 0.0
        %1758 = vmatpush1.msra.mxu0 %v432
        %1759 = vmatprep.subr.mxu0 0.0
        %1760 = vmatpush1.msra.mxu0 %v433
        %1761 = vmatprep.subr.mxu0 0.0
        %1762 = vmatpush1.msra.mxu0 %v434
        %1763 = vmatprep.subr.mxu0 0.0
        %1764 = vmatpush1.msra.mxu0 %v435
        %1765 = vmatprep.subr.mxu0 0.0
        %1766 = vmatpush1.msra.mxu0 %v436
        %1767 = vmatprep.subr.mxu0 0.0
        %1768 = vmatpush1.msra.mxu0 %v437
        %1769 = vmatprep.subr.mxu0 0.0
        %1770 = vmatpush1.msra.mxu0 %v438
        %1771 = vmatprep.subr.mxu0 0.0
        %1772 = vmatpush1.msra.mxu0 %v439
        %1773 = vmatprep.subr.mxu0 0.0
        %1774 = vmatpush1.msra.mxu0 %v440
        %1775 = vmatprep.subr.mxu0 0.0
        %1776 = vmatpush1.msra.mxu0 %v441
        %1777 = vmatprep.subr.mxu0 0.0
        %1778 = vmatpush1.msra.mxu0 %v442
        %1779 = vmatprep.subr.mxu0 0.0
        %1780 = vmatpush1.msra.mxu0 %v443
        %1781 = vmatprep.subr.mxu0 0.0
        %1782 = vmatpush1.msra.mxu0 %v444
        %1783 = vmatprep.subr.mxu0 0.0
        %1784 = vmatpush1.msra.mxu0 %v445
        %1785 = vmatprep.subr.mxu0 0.0
        %1786 = vmatpush1.msra.mxu0 0.0
        %1787 = vmatprep.subr.mxu0 0.0
        %1788 = vmatpush1.msra.mxu0 0.0
        %1789 = vmatprep.subr.mxu0 0.0
        %1790 = vmatpush1.msra.mxu0 0.0
        %1791 = vmatprep.subr.mxu0 0.0
        %1792 = vmatpush1.msra.mxu0 0.0
        %1793 = vmatprep.subr.mxu0 0.0
        %1794 = vmatpush1.msra.mxu0 0.0
        %1795 = vmatprep.subr.mxu0 0.0
        %1796 = vmatpush1.msra.mxu0 0.0
        %1797 = vmatprep.subr.mxu0 0.0
        %1798 = vmatpush1.msra.mxu0 0.0
        %1799 = vmatprep.subr.mxu0 0.0
        %1800 = vmatpush1.msra.mxu0 0.0
        %1801 = vmatprep.subr.mxu0 0.0
        %1802 = vmatpush1.msra.mxu0 0.0
        %1803 = vmatprep.subr.mxu0 0.0
        %1804 = vmatpush1.msra.mxu0 0.0
        %1805 = vmatprep.subr.mxu0 0.0
        %1806 = vmatpush1.msra.mxu0 0.0
        %1807 = vmatprep.subr.mxu0 0.0
        %1808 = vmatpush1.msra.mxu0 0.0
        %1809 = vmatprep.subr.mxu0 0.0
        %1810 = vmatpush1.msra.mxu0 0.0
        %1811 = vmatprep.subr.mxu0 0.0
        %1812 = vmatpush1.msra.mxu0 0.0
        %1813 = vmatprep.subr.mxu0 0.0
        %1814 = vmatpush1.msra.mxu0 0.0
        %1815 = vmatprep.subr.mxu0 0.0
        %1816 = vmatpush1.msra.mxu0 0.0
        %1817 = vmatprep.mubr.f32.mxu0 0.0
        %1818 = vmatmul.mubr.f32.gmra.mrb[0].mxu0 %v1749
        %v1819 = vpop.f32.mrb[0].mxu0
        %v1820 = vadd.f32 0.0, %v1819
        %v1821 = vpop.f32.mrb[0].mxu0
        %1822 = vmatprep.mubr.f32.mxu0 0.0
        %1823 = vmatmul.mubr.f32.gmra.mrb[0].mxu0 %v1750
        %v1824 = vpop.f32.mrb[0].mxu0
        %v1825 = vadd.f32 0.0, %v1824
        %v1826 = vpop.f32.mrb[0].mxu0
        %1827 = vmatprep.mubr.f32.mxu0 0.0
        %1828 = vmatmul.mubr.f32.gmra.mrb[0].mxu0 %v1751
        %v1829 = vpop.f32.mrb[0].mxu0
        %v1830 = vadd.f32 0.0, %v1829
        %v1831 = vpop.f32.mrb[0].mxu0
        %1832 = vmatprep.mubr.f32.mxu0 0.0
        %1833 = vmatmul.mubr.f32.gmra.mrb[0].mxu0 %v1752
        %v1834 = vpop.f32.mrb[0].mxu0
        %v1835 = vadd.f32 0.0, %v1834
        %v1836 = vpop.f32.mrb[0].mxu0
        %1837 = vdwg.mxu0
        %s1838 = scalar_lea.vmem [#allocation7], 768
        %v1839 = vld [vmem:[%s1838] sm:$0xff]
        %v1840 = vld [vmem:[%s1838 + $0x8] sm:$0xff]
        %v1841 = vld [vmem:[%s1838 + $0x10] sm:$0xff]
        %v1842 = vld [vmem:[%s1838 + $0x18] sm:$0xff]
        %v1843 = vld [vmem:[%s1838 + $0x20] sm:$0xff]
        %v1844 = vld [vmem:[%s1838 + $0x28] sm:$0xff]
        %v1845 = vld [vmem:[%s1838 + $0x30] sm:$0xff]
        %v1846 = vld [vmem:[%s1838 + $0x38] sm:$0xff]
        %v1847 = vld [vmem:[%s1838 + $0x40] sm:$0xff]
        %v1848 = vld [vmem:[%s1838 + $0x48] sm:$0xff]
        %v1849 = vld [vmem:[%s1838 + $0x50] sm:$0xff]
        %v1850 = vld [vmem:[%s1838 + $0x58] sm:$0xff]
        %v1851 = vld [vmem:[%s1838 + $0x60] sm:$0xff]
        %v1852 = vld [vmem:[%s1838 + $0x68] sm:$0xff]
        %v1853 = vld [vmem:[%s1838 + $0x70] sm:$0xff]
        %v1854 = vld [vmem:[%s1838 + $0x78] sm:$0xff]
        %1855 = vmatprep.subr.mxu0 0.0
        %1856 = vmatpush1.msra.mxu0 %v1839
        %1857 = vmatprep.subr.mxu0 0.0
        %1858 = vmatpush1.msra.mxu0 %v1840
        %1859 = vmatprep.subr.mxu0 0.0
        %1860 = vmatpush1.msra.mxu0 %v1841
        %1861 = vmatprep.subr.mxu0 0.0
        %1862 = vmatpush1.msra.mxu0 %v1842
        %1863 = vmatprep.subr.mxu0 0.0
        %1864 = vmatpush1.msra.mxu0 %v1843
        %1865 = vmatprep.subr.mxu0 0.0
        %1866 = vmatpush1.msra.mxu0 %v1844
        %1867 = vmatprep.subr.mxu0 0.0
        %1868 = vmatpush1.msra.mxu0 %v1845
        %1869 = vmatprep.subr.mxu0 0.0
        %1870 = vmatpush1.msra.mxu0 %v1846
        %1871 = vmatprep.subr.mxu0 0.0
        %1872 = vmatpush1.msra.mxu0 %v1847
        %1873 = vmatprep.subr.mxu0 0.0
        %1874 = vmatpush1.msra.mxu0 %v1848
        %1875 = vmatprep.subr.mxu0 0.0
        %1876 = vmatpush1.msra.mxu0 %v1849
        %1877 = vmatprep.subr.mxu0 0.0
        %1878 = vmatpush1.msra.mxu0 %v1850
        %1879 = vmatprep.subr.mxu0 0.0
        %1880 = vmatpush1.msra.mxu0 %v1851
        %1881 = vmatprep.subr.mxu0 0.0
        %1882 = vmatpush1.msra.mxu0 %v1852
        %1883 = vmatprep.subr.mxu0 0.0
        %1884 = vmatpush1.msra.mxu0 %v1853
        %1885 = vmatprep.subr.mxu0 0.0
        %1886 = vmatpush1.msra.mxu0 %v1854
        %1887 = vmatprep.subr.mxu0 0.0
        %1888 = vmatpush1.msra.mxu0 0.0
        %1889 = vmatprep.subr.mxu0 0.0
        %1890 = vmatpush1.msra.mxu0 0.0
        %1891 = vmatprep.subr.mxu0 0.0
        %1892 = vmatpush1.msra.mxu0 0.0
        %1893 = vmatprep.subr.mxu0 0.0
        %1894 = vmatpush1.msra.mxu0 0.0
        %1895 = vmatprep.subr.mxu0 0.0
        %1896 = vmatpush1.msra.mxu0 0.0
        %1897 = vmatprep.subr.mxu0 0.0
        %1898 = vmatpush1.msra.mxu0 0.0
        %1899 = vmatprep.subr.mxu0 0.0
        %1900 = vmatpush1.msra.mxu0 0.0
        %1901 = vmatprep.subr.mxu0 0.0
        %1902 = vmatpush1.msra.mxu0 0.0
        %1903 = vmatprep.subr.mxu0 0.0
        %1904 = vmatpush1.msra.mxu0 0.0
        %1905 = vmatprep.subr.mxu0 0.0
        %1906 = vmatpush1.msra.mxu0 0.0
        %1907 = vmatprep.subr.mxu0 0.0
        %1908 = vmatpush1.msra.mxu0 0.0
        %1909 = vmatprep.subr.mxu0 0.0
        %1910 = vmatpush1.msra.mxu0 0.0
        %1911 = vmatprep.subr.mxu0 0.0
        %1912 = vmatpush1.msra.mxu0 0.0
        %1913 = vmatprep.subr.mxu0 0.0
        %1914 = vmatpush1.msra.mxu0 0.0
        %1915 = vmatprep.subr.mxu0 0.0
        %1916 = vmatpush1.msra.mxu0 0.0
        %1917 = vmatprep.subr.mxu0 0.0
        %1918 = vmatpush1.msra.mxu0 0.0
        %1919 = vmatprep.mubr.f32.mxu0 0.0
        %1920 = vmatmul.mubr.f32.gmra.mrb[0].mxu0 %v1820
        %v1921 = vpop.f32.mrb[0].mxu0
        %v1922 = vadd.f32 0.0, %v1921
        %v1923 = vpop.f32.mrb[0].mxu0
        %1924 = vmatprep.mubr.f32.mxu0 0.0
        %1925 = vmatmul.mubr.f32.gmra.mrb[0].mxu0 %v1825
        %v1926 = vpop.f32.mrb[0].mxu0
        %v1927 = vadd.f32 0.0, %v1926
        %v1928 = vpop.f32.mrb[0].mxu0
        %1929 = vmatprep.mubr.f32.mxu0 0.0
        %1930 = vmatmul.mubr.f32.gmra.mrb[0].mxu0 %v1830
        %v1931 = vpop.f32.mrb[0].mxu0
        %v1932 = vadd.f32 0.0, %v1931
        %v1933 = vpop.f32.mrb[0].mxu0
        %1934 = vmatprep.mubr.f32.mxu0 0.0
        %1935 = vmatmul.mubr.f32.gmra.mrb[0].mxu0 %v1835
        %v1936 = vpop.f32.mrb[0].mxu0
        %v1937 = vadd.f32 0.0, %v1936
        %v1938 = vpop.f32.mrb[0].mxu0
        %1939 = vdwg.mxu0
        %v1940 = vadd.f32 %v1725, %v1922
        %v1941 = vadd.f32 %v1726, %v1927
        %v1942 = vadd.f32 %v1727, %v1932
        %v1943 = vadd.f32 %v1728, %v1937
        %1944 = vset.pattern.permute.xlu0 7
        %1945 = vperm.xlu0 %1944, %v426
        %v1946 = vpop.permute.xlu0 %1945
        %1947 = vset.pattern.permute.xlu0 7
        %1948 = vperm.xlu0 %1947, %v427
        %v1949 = vpop.permute.xlu0 %1948
        %1950 = vset.pattern.permute.xlu0 7
        %1951 = vperm.xlu0 %1950, %v428
        %v1952 = vpop.permute.xlu0 %1951
        %1953 = vset.pattern.permute.xlu0 7
        %1954 = vperm.xlu0 %1953, %v429
        %v1955 = vpop.permute.xlu0 %1954
        %vm1956 = vcmp.eq.s32.totalorder %v447, %v1946
        %vm1957 = vcmp.eq.s32.totalorder %v447, %v1949
        %vm1958 = vcmp.eq.s32.totalorder %v447, %v1952
        %vm1959 = vcmp.eq.s32.totalorder %v447, %v1955
        %v1960 = vsel %vm1956, 1, 0
        %v1961 = vsel %vm1957, 1, 0
        %v1962 = vsel %vm1958, 1, 0
        %v1963 = vsel %vm1959, 1, 0
        %v1964 = vcvt.s32.f32 %v1960
        %v1965 = vcvt.s32.f32 %v1961
        %v1966 = vcvt.s32.f32 %v1962
        %v1967 = vcvt.s32.f32 %v1963
        %1968 = vmatprep.subr.mxu0 0.0
        %1969 = vmatpush1.msra.mxu0 %v430
        %1970 = vmatprep.subr.mxu0 0.0
        %1971 = vmatpush1.msra.mxu0 %v431
        %1972 = vmatprep.subr.mxu0 0.0
        %1973 = vmatpush1.msra.mxu0 %v432
        %1974 = vmatprep.subr.mxu0 0.0
        %1975 = vmatpush1.msra.mxu0 %v433
        %1976 = vmatprep.subr.mxu0 0.0
        %1977 = vmatpush1.msra.mxu0 %v434
        %1978 = vmatprep.subr.mxu0 0.0
        %1979 = vmatpush1.msra.mxu0 %v435
        %1980 = vmatprep.subr.mxu0 0.0
        %1981 = vmatpush1.msra.mxu0 %v436
        %1982 = vmatprep.subr.mxu0 0.0
        %1983 = vmatpush1.msra.mxu0 %v437
        %1984 = vmatprep.subr.mxu0 0.0
        %1985 = vmatpush1.msra.mxu0 %v438
        %1986 = vmatprep.subr.mxu0 0.0
        %1987 = vmatpush1.msra.mxu0 %v439
        %1988 = vmatprep.subr.mxu0 0.0
        %1989 = vmatpush1.msra.mxu0 %v440
        %1990 = vmatprep.subr.mxu0 0.0
        %1991 = vmatpush1.msra.mxu0 %v441
        %1992 = vmatprep.subr.mxu0 0.0
        %1993 = vmatpush1.msra.mxu0 %v442
        %1994 = vmatprep.subr.mxu0 0.0
        %1995 = vmatpush1.msra.mxu0 %v443
        %1996 = vmatprep.subr.mxu0 0.0
        %1997 = vmatpush1.msra.mxu0 %v444
        %1998 = vmatprep.subr.mxu0 0.0
        %1999 = vmatpush1.msra.mxu0 %v445
        %2000 = vmatprep.subr.mxu0 0.0
        %2001 = vmatpush1.msra.mxu0 0.0
        %2002 = vmatprep.subr.mxu0 0.0
        %2003 = vmatpush1.msra.mxu0 0.0
        %2004 = vmatprep.subr.mxu0 0.0
        %2005 = vmatpush1.msra.mxu0 0.0
        %2006 = vmatprep.subr.mxu0 0.0
        %2007 = vmatpush1.msra.mxu0 0.0
        %2008 = vmatprep.subr.mxu0 0.0
        %2009 = vmatpush1.msra.mxu0 0.0
        %2010 = vmatprep.subr.mxu0 0.0
        %2011 = vmatpush1.msra.mxu0 0.0
        %2012 = vmatprep.subr.mxu0 0.0
        %2013 = vmatpush1.msra.mxu0 0.0
        %2014 = vmatprep.subr.mxu0 0.0
        %2015 = vmatpush1.msra.mxu0 0.0
        %2016 = vmatprep.subr.mxu0 0.0
        %2017 = vmatpush1.msra.mxu0 0.0
        %2018 = vmatprep.subr.mxu0 0.0
        %2019 = vmatpush1.msra.mxu0 0.0
        %2020 = vmatprep.subr.mxu0 0.0
        %2021 = vmatpush1.msra.mxu0 0.0
        %2022 = vmatprep.subr.mxu0 0.0
        %2023 = vmatpush1.msra.mxu0 0.0
        %2024 = vmatprep.subr.mxu0 0.0
        %2025 = vmatpush1.msra.mxu0 0.0
        %2026 = vmatprep.subr.mxu0 0.0
        %2027 = vmatpush1.msra.mxu0 0.0
        %2028 = vmatprep.subr.mxu0 0.0
        %2029 = vmatpush1.msra.mxu0 0.0
        %2030 = vmatprep.subr.mxu0 0.0
        %2031 = vmatpush1.msra.mxu0 0.0
        %2032 = vmatprep.mubr.f32.mxu0 0.0
        %2033 = vmatmul.mubr.f32.gmra.mrb[0].mxu0 %v1964
        %v2034 = vpop.f32.mrb[0].mxu0
        %v2035 = vadd.f32 0.0, %v2034
        %v2036 = vpop.f32.mrb[0].mxu0
        %2037 = vmatprep.mubr.f32.mxu0 0.0
        %2038 = vmatmul.mubr.f32.gmra.mrb[0].mxu0 %v1965
        %v2039 = vpop.f32.mrb[0].mxu0
        %v2040 = vadd.f32 0.0, %v2039
        %v2041 = vpop.f32.mrb[0].mxu0
        %2042 = vmatprep.mubr.f32.mxu0 0.0
        %2043 = vmatmul.mubr.f32.gmra.mrb[0].mxu0 %v1966
        %v2044 = vpop.f32.mrb[0].mxu0
        %v2045 = vadd.f32 0.0, %v2044
        %v2046 = vpop.f32.mrb[0].mxu0
        %2047 = vmatprep.mubr.f32.mxu0 0.0
        %2048 = vmatmul.mubr.f32.gmra.mrb[0].mxu0 %v1967
        %v2049 = vpop.f32.mrb[0].mxu0
        %v2050 = vadd.f32 0.0, %v2049
        %v2051 = vpop.f32.mrb[0].mxu0
        %2052 = vdwg.mxu0
        %s2053 = scalar_lea.vmem [#allocation7], 896
        %v2054 = vld [vmem:[%s2053] sm:$0xff]
        %v2055 = vld [vmem:[%s2053 + $0x8] sm:$0xff]
        %v2056 = vld [vmem:[%s2053 + $0x10] sm:$0xff]
        %v2057 = vld [vmem:[%s2053 + $0x18] sm:$0xff]
        %v2058 = vld [vmem:[%s2053 + $0x20] sm:$0xff]
        %v2059 = vld [vmem:[%s2053 + $0x28] sm:$0xff]
        %v2060 = vld [vmem:[%s2053 + $0x30] sm:$0xff]
        %v2061 = vld [vmem:[%s2053 + $0x38] sm:$0xff]
        %v2062 = vld [vmem:[%s2053 + $0x40] sm:$0xff]
        %v2063 = vld [vmem:[%s2053 + $0x48] sm:$0xff]
        %v2064 = vld [vmem:[%s2053 + $0x50] sm:$0xff]
        %v2065 = vld [vmem:[%s2053 + $0x58] sm:$0xff]
        %v2066 = vld [vmem:[%s2053 + $0x60] sm:$0xff]
        %v2067 = vld [vmem:[%s2053 + $0x68] sm:$0xff]
        %v2068 = vld [vmem:[%s2053 + $0x70] sm:$0xff]
        %v2069 = vld [vmem:[%s2053 + $0x78] sm:$0xff]
        %2070 = vmatprep.subr.mxu0 0.0
        %2071 = vmatpush1.msra.mxu0 %v2054
        %2072 = vmatprep.subr.mxu0 0.0
        %2073 = vmatpush1.msra.mxu0 %v2055
        %2074 = vmatprep.subr.mxu0 0.0
        %2075 = vmatpush1.msra.mxu0 %v2056
        %2076 = vmatprep.subr.mxu0 0.0
        %2077 = vmatpush1.msra.mxu0 %v2057
        %2078 = vmatprep.subr.mxu0 0.0
        %2079 = vmatpush1.msra.mxu0 %v2058
        %2080 = vmatprep.subr.mxu0 0.0
        %2081 = vmatpush1.msra.mxu0 %v2059
        %2082 = vmatprep.subr.mxu0 0.0
        %2083 = vmatpush1.msra.mxu0 %v2060
        %2084 = vmatprep.subr.mxu0 0.0
        %2085 = vmatpush1.msra.mxu0 %v2061
        %2086 = vmatprep.subr.mxu0 0.0
        %2087 = vmatpush1.msra.mxu0 %v2062
        %2088 = vmatprep.subr.mxu0 0.0
        %2089 = vmatpush1.msra.mxu0 %v2063
        %2090 = vmatprep.subr.mxu0 0.0
        %2091 = vmatpush1.msra.mxu0 %v2064
        %2092 = vmatprep.subr.mxu0 0.0
        %2093 = vmatpush1.msra.mxu0 %v2065
        %2094 = vmatprep.subr.mxu0 0.0
        %2095 = vmatpush1.msra.mxu0 %v2066
        %2096 = vmatprep.subr.mxu0 0.0
        %2097 = vmatpush1.msra.mxu0 %v2067
        %2098 = vmatprep.subr.mxu0 0.0
        %2099 = vmatpush1.msra.mxu0 %v2068
        %2100 = vmatprep.subr.mxu0 0.0
        %2101 = vmatpush1.msra.mxu0 %v2069
        %2102 = vmatprep.subr.mxu0 0.0
        %2103 = vmatpush1.msra.mxu0 0.0
        %2104 = vmatprep.subr.mxu0 0.0
        %2105 = vmatpush1.msra.mxu0 0.0
        %2106 = vmatprep.subr.mxu0 0.0
        %2107 = vmatpush1.msra.mxu0 0.0
        %2108 = vmatprep.subr.mxu0 0.0
        %2109 = vmatpush1.msra.mxu0 0.0
        %2110 = vmatprep.subr.mxu0 0.0
        %2111 = vmatpush1.msra.mxu0 0.0
        %2112 = vmatprep.subr.mxu0 0.0
        %2113 = vmatpush1.msra.mxu0 0.0
        %2114 = vmatprep.subr.mxu0 0.0
        %2115 = vmatpush1.msra.mxu0 0.0
        %2116 = vmatprep.subr.mxu0 0.0
        %2117 = vmatpush1.msra.mxu0 0.0
        %2118 = vmatprep.subr.mxu0 0.0
        %2119 = vmatpush1.msra.mxu0 0.0
        %2120 = vmatprep.subr.mxu0 0.0
        %2121 = vmatpush1.msra.mxu0 0.0
        %2122 = vmatprep.subr.mxu0 0.0
        %2123 = vmatpush1.msra.mxu0 0.0
        %2124 = vmatprep.subr.mxu0 0.0
        %2125 = vmatpush1.msra.mxu0 0.0
        %2126 = vmatprep.subr.mxu0 0.0
        %2127 = vmatpush1.msra.mxu0 0.0
        %2128 = vmatprep.subr.mxu0 0.0
        %2129 = vmatpush1.msra.mxu0 0.0
        %2130 = vmatprep.subr.mxu0 0.0
        %2131 = vmatpush1.msra.mxu0 0.0
        %2132 = vmatprep.subr.mxu0 0.0
        %2133 = vmatpush1.msra.mxu0 0.0
        %2134 = vmatprep.mubr.f32.mxu0 0.0
        %2135 = vmatmul.mubr.f32.gmra.mrb[0].mxu0 %v2035
        %v2136 = vpop.f32.mrb[0].mxu0
        %v2137 = vadd.f32 0.0, %v2136
        %v2138 = vpop.f32.mrb[0].mxu0
        %2139 = vmatprep.mubr.f32.mxu0 0.0
        %2140 = vmatmul.mubr.f32.gmra.mrb[0].mxu0 %v2040
        %v2141 = vpop.f32.mrb[0].mxu0
        %v2142 = vadd.f32 0.0, %v2141
        %v2143 = vpop.f32.mrb[0].mxu0
        %2144 = vmatprep.mubr.f32.mxu0 0.0
        %2145 = vmatmul.mubr.f32.gmra.mrb[0].mxu0 %v2045
        %v2146 = vpop.f32.mrb[0].mxu0
        %v2147 = vadd.f32 0.0, %v2146
        %v2148 = vpop.f32.mrb[0].mxu0
        %2149 = vmatprep.mubr.f32.mxu0 0.0
        %2150 = vmatmul.mubr.f32.gmra.mrb[0].mxu0 %v2050
        %v2151 = vpop.f32.mrb[0].mxu0
        %v2152 = vadd.f32 0.0, %v2151
        %v2153 = vpop.f32.mrb[0].mxu0
        %2154 = vdwg.mxu0
        %v2155 = vadd.f32 %v1940, %v2137
        %v2156 = vadd.f32 %v1941, %v2142
        %v2157 = vadd.f32 %v1942, %v2147
        %v2158 = vadd.f32 %v1943, %v2152
        %vm2159 = vcmp.eq.s32.totalorder %v426, %v450
        %vm2160 = vcmp.eq.s32.totalorder %v427, %v453
        %vm2161 = vcmp.eq.s32.totalorder %v428, %v456
        %vm2162 = vcmp.eq.s32.totalorder %v429, %v459
        %v2163 = vsel %vm2159, 1, 0
        %v2164 = vsel %vm2160, 1, 0
        %v2165 = vsel %vm2161, 1, 0
        %v2166 = vsel %vm2162, 1, 0
        %v2167 = vcvt.s32.f32 %v2163
        %v2168 = vcvt.s32.f32 %v2164
        %v2169 = vcvt.s32.f32 %v2165
        %v2170 = vcvt.s32.f32 %v2166
        %v2171 = vmul.f32 %v2167, 0.5
        %v2172 = vmul.f32 %v2168, 0.5
        %v2173 = vmul.f32 %v2169, 0.5
        %v2174 = vmul.f32 %v2170, 0.5
        %v2175 = vld [vmem:[#allocation8] sm:$0xff]
        %v2176 = vld [vmem:[#allocation8 + $0x8] sm:$0xff]
        %v2177 = vld [vmem:[#allocation8 + $0x10] sm:$0xff]
        %v2178 = vld [vmem:[#allocation8 + $0x18] sm:$0xff]
        %v2179 = vld [vmem:[#allocation8 + $0x20] sm:$0xff]
        %v2180 = vld [vmem:[#allocation8 + $0x28] sm:$0xff]
        %v2181 = vld [vmem:[#allocation8 + $0x30] sm:$0xff]
        %v2182 = vld [vmem:[#allocation8 + $0x38] sm:$0xff]
        %v2183 = vld [vmem:[#allocation8 + $0x40] sm:$0xff]
        %v2184 = vld [vmem:[#allocation8 + $0x48] sm:$0xff]
        %v2185 = vld [vmem:[#allocation8 + $0x50] sm:$0xff]
        %v2186 = vld [vmem:[#allocation8 + $0x58] sm:$0xff]
        %v2187 = vld [vmem:[#allocation8 + $0x60] sm:$0xff]
        %v2188 = vld [vmem:[#allocation8 + $0x68] sm:$0xff]
        %v2189 = vld [vmem:[#allocation8 + $0x70] sm:$0xff]
        %v2190 = vld [vmem:[#allocation8 + $0x78] sm:$0xff]
        %2191 = vmatprep.subr.mxu0 0.0
        %2192 = vmatpush1.msra.mxu0 %v2175
        %2193 = vmatprep.subr.mxu0 0.0
        %2194 = vmatpush1.msra.mxu0 %v2176
        %2195 = vmatprep.subr.mxu0 0.0
        %2196 = vmatpush1.msra.mxu0 %v2177
        %2197 = vmatprep.subr.mxu0 0.0
        %2198 = vmatpush1.msra.mxu0 %v2178
        %2199 = vmatprep.subr.mxu0 0.0
        %2200 = vmatpush1.msra.mxu0 %v2179
        %2201 = vmatprep.subr.mxu0 0.0
        %2202 = vmatpush1.msra.mxu0 %v2180
        %2203 = vmatprep.subr.mxu0 0.0
        %2204 = vmatpush1.msra.mxu0 %v2181
        %2205 = vmatprep.subr.mxu0 0.0
        %2206 = vmatpush1.msra.mxu0 %v2182
        %2207 = vmatprep.subr.mxu0 0.0
        %2208 = vmatpush1.msra.mxu0 %v2183
        %2209 = vmatprep.subr.mxu0 0.0
        %2210 = vmatpush1.msra.mxu0 %v2184
        %2211 = vmatprep.subr.mxu0 0.0
        %2212 = vmatpush1.msra.mxu0 %v2185
        %2213 = vmatprep.subr.mxu0 0.0
        %2214 = vmatpush1.msra.mxu0 %v2186
        %2215 = vmatprep.subr.mxu0 0.0
        %2216 = vmatpush1.msra.mxu0 %v2187
        %2217 = vmatprep.subr.mxu0 0.0
        %2218 = vmatpush1.msra.mxu0 %v2188
        %2219 = vmatprep.subr.mxu0 0.0
        %2220 = vmatpush1.msra.mxu0 %v2189
        %2221 = vmatprep.subr.mxu0 0.0
        %2222 = vmatpush1.msra.mxu0 %v2190
        %2223 = vmatprep.subr.mxu0 0.0
        %2224 = vmatpush1.msra.mxu0 0.0
        %2225 = vmatprep.subr.mxu0 0.0
        %2226 = vmatpush1.msra.mxu0 0.0
        %2227 = vmatprep.subr.mxu0 0.0
        %2228 = vmatpush1.msra.mxu0 0.0
        %2229 = vmatprep.subr.mxu0 0.0
        %2230 = vmatpush1.msra.mxu0 0.0
        %2231 = vmatprep.subr.mxu0 0.0
        %2232 = vmatpush1.msra.mxu0 0.0
        %2233 = vmatprep.subr.mxu0 0.0
        %2234 = vmatpush1.msra.mxu0 0.0
        %2235 = vmatprep.subr.mxu0 0.0
        %2236 = vmatpush1.msra.mxu0 0.0
        %2237 = vmatprep.subr.mxu0 0.0
        %2238 = vmatpush1.msra.mxu0 0.0
        %2239 = vmatprep.subr.mxu0 0.0
        %2240 = vmatpush1.msra.mxu0 0.0
        %2241 = vmatprep.subr.mxu0 0.0
        %2242 = vmatpush1.msra.mxu0 0.0
        %2243 = vmatprep.subr.mxu0 0.0
        %2244 = vmatpush1.msra.mxu0 0.0
        %2245 = vmatprep.subr.mxu0 0.0
        %2246 = vmatpush1.msra.mxu0 0.0
        %2247 = vmatprep.subr.mxu0 0.0
        %2248 = vmatpush1.msra.mxu0 0.0
        %2249 = vmatprep.subr.mxu0 0.0
        %2250 = vmatpush1.msra.mxu0 0.0
        %2251 = vmatprep.subr.mxu0 0.0
        %2252 = vmatpush1.msra.mxu0 0.0
        %2253 = vmatprep.subr.mxu0 0.0
        %2254 = vmatpush1.msra.mxu0 0.0
        %2255 = vmatprep.mubr.f32.mxu0 0.0
        %2256 = vmatmul.mubr.f32.gmra.mrb[0].mxu0 %v2171
        %v2257 = vpop.f32.mrb[0].mxu0
        %v2258 = vadd.f32 0.0, %v2257
        %v2259 = vpop.f32.mrb[0].mxu0
        %2260 = vmatprep.mubr.f32.mxu0 0.0
        %2261 = vmatmul.mubr.f32.gmra.mrb[0].mxu0 %v2172
        %v2262 = vpop.f32.mrb[0].mxu0
        %v2263 = vadd.f32 0.0, %v2262
        %v2264 = vpop.f32.mrb[0].mxu0
        %2265 = vmatprep.mubr.f32.mxu0 0.0
        %2266 = vmatmul.mubr.f32.gmra.mrb[0].mxu0 %v2173
        %v2267 = vpop.f32.mrb[0].mxu0
        %v2268 = vadd.f32 0.0, %v2267
        %v2269 = vpop.f32.mrb[0].mxu0
        %2270 = vmatprep.mubr.f32.mxu0 0.0
        %2271 = vmatmul.mubr.f32.gmra.mrb[0].mxu0 %v2174
        %v2272 = vpop.f32.mrb[0].mxu0
        %v2273 = vadd.f32 0.0, %v2272
        %v2274 = vpop.f32.mrb[0].mxu0
        %2275 = vdwg.mxu0
        %v2276 = vadd.f32 %v2155, %v2258
        %v2277 = vadd.f32 %v2156, %v2263
        %v2278 = vadd.f32 %v2157, %v2268
        %v2279 = vadd.f32 %v2158, %v2273
        %vm2280 = vcmp.eq.s32.totalorder %v426, %v575
        %vm2281 = vcmp.eq.s32.totalorder %v427, %v578
        %vm2282 = vcmp.eq.s32.totalorder %v428, %v581
        %vm2283 = vcmp.eq.s32.totalorder %v429, %v584
        %v2284 = vsel %vm2280, 1, 0
        %v2285 = vsel %vm2281, 1, 0
        %v2286 = vsel %vm2282, 1, 0
        %v2287 = vsel %vm2283, 1, 0
        %v2288 = vcvt.s32.f32 %v2284
        %v2289 = vcvt.s32.f32 %v2285
        %v2290 = vcvt.s32.f32 %v2286
        %v2291 = vcvt.s32.f32 %v2287
        %v2292 = vmul.f32 %v2288, 0.5
        %v2293 = vmul.f32 %v2289, 0.5
        %v2294 = vmul.f32 %v2290, 0.5
        %v2295 = vmul.f32 %v2291, 0.5
        %s2296 = scalar_lea.vmem [#allocation8], 128
        %v2297 = vld [vmem:[%s2296] sm:$0xff]
        %v2298 = vld [vmem:[%s2296 + $0x8] sm:$0xff]
        %v2299 = vld [vmem:[%s2296 + $0x10] sm:$0xff]
        %v2300 = vld [vmem:[%s2296 + $0x18] sm:$0xff]
        %v2301 = vld [vmem:[%s2296 + $0x20] sm:$0xff]
        %v2302 = vld [vmem:[%s2296 + $0x28] sm:$0xff]
        %v2303 = vld [vmem:[%s2296 + $0x30] sm:$0xff]
        %v2304 = vld [vmem:[%s2296 + $0x38] sm:$0xff]
        %v2305 = vld [vmem:[%s2296 + $0x40] sm:$0xff]
        %v2306 = vld [vmem:[%s2296 + $0x48] sm:$0xff]
        %v2307 = vld [vmem:[%s2296 + $0x50] sm:$0xff]
        %v2308 = vld [vmem:[%s2296 + $0x58] sm:$0xff]
        %v2309 = vld [vmem:[%s2296 + $0x60] sm:$0xff]
        %v2310 = vld [vmem:[%s2296 + $0x68] sm:$0xff]
        %v2311 = vld [vmem:[%s2296 + $0x70] sm:$0xff]
        %v2312 = vld [vmem:[%s2296 + $0x78] sm:$0xff]
        %2313 = vmatprep.subr.mxu0 0.0
        %2314 = vmatpush1.msra.mxu0 %v2297
        %2315 = vmatprep.subr.mxu0 0.0
        %2316 = vmatpush1.msra.mxu0 %v2298
        %2317 = vmatprep.subr.mxu0 0.0
        %2318 = vmatpush1.msra.mxu0 %v2299
        %2319 = vmatprep.subr.mxu0 0.0
        %2320 = vmatpush1.msra.mxu0 %v2300
        %2321 = vmatprep.subr.mxu0 0.0
        %2322 = vmatpush1.msra.mxu0 %v2301
        %2323 = vmatprep.subr.mxu0 0.0
        %2324 = vmatpush1.msra.mxu0 %v2302
        %2325 = vmatprep.subr.mxu0 0.0
        %2326 = vmatpush1.msra.mxu0 %v2303
        %2327 = vmatprep.subr.mxu0 0.0
        %2328 = vmatpush1.msra.mxu0 %v2304
        %2329 = vmatprep.subr.mxu0 0.0
        %2330 = vmatpush1.msra.mxu0 %v2305
        %2331 = vmatprep.subr.mxu0 0.0
        %2332 = vmatpush1.msra.mxu0 %v2306
        %2333 = vmatprep.subr.mxu0 0.0
        %2334 = vmatpush1.msra.mxu0 %v2307
        %2335 = vmatprep.subr.mxu0 0.0
        %2336 = vmatpush1.msra.mxu0 %v2308
        %2337 = vmatprep.subr.mxu0 0.0
        %2338 = vmatpush1.msra.mxu0 %v2309
        %2339 = vmatprep.subr.mxu0 0.0
        %2340 = vmatpush1.msra.mxu0 %v2310
        %2341 = vmatprep.subr.mxu0 0.0
        %2342 = vmatpush1.msra.mxu0 %v2311
        %2343 = vmatprep.subr.mxu0 0.0
        %2344 = vmatpush1.msra.mxu0 %v2312
        %2345 = vmatprep.subr.mxu0 0.0
        %2346 = vmatpush1.msra.mxu0 0.0
        %2347 = vmatprep.subr.mxu0 0.0
        %2348 = vmatpush1.msra.mxu0 0.0
        %2349 = vmatprep.subr.mxu0 0.0
        %2350 = vmatpush1.msra.mxu0 0.0
        %2351 = vmatprep.subr.mxu0 0.0
        %2352 = vmatpush1.msra.mxu0 0.0
        %2353 = vmatprep.subr.mxu0 0.0
        %2354 = vmatpush1.msra.mxu0 0.0
        %2355 = vmatprep.subr.mxu0 0.0
        %2356 = vmatpush1.msra.mxu0 0.0
        %2357 = vmatprep.subr.mxu0 0.0
        %2358 = vmatpush1.msra.mxu0 0.0
        %2359 = vmatprep.subr.mxu0 0.0
        %2360 = vmatpush1.msra.mxu0 0.0
        %2361 = vmatprep.subr.mxu0 0.0
        %2362 = vmatpush1.msra.mxu0 0.0
        %2363 = vmatprep.subr.mxu0 0.0
        %2364 = vmatpush1.msra.mxu0 0.0
        %2365 = vmatprep.subr.mxu0 0.0
        %2366 = vmatpush1.msra.mxu0 0.0
        %2367 = vmatprep.subr.mxu0 0.0
        %2368 = vmatpush1.msra.mxu0 0.0
        %2369 = vmatprep.subr.mxu0 0.0
        %2370 = vmatpush1.msra.mxu0 0.0
        %2371 = vmatprep.subr.mxu0 0.0
        %2372 = vmatpush1.msra.mxu0 0.0
        %2373 = vmatprep.subr.mxu0 0.0
        %2374 = vmatpush1.msra.mxu0 0.0
        %2375 = vmatprep.subr.mxu0 0.0
        %2376 = vmatpush1.msra.mxu0 0.0
        %2377 = vmatprep.mubr.f32.mxu0 0.0
        %2378 = vmatmul.mubr.f32.gmra.mrb[0].mxu0 %v2292
        %v2379 = vpop.f32.mrb[0].mxu0
        %v2380 = vadd.f32 0.0, %v2379
        %v2381 = vpop.f32.mrb[0].mxu0
        %2382 = vmatprep.mubr.f32.mxu0 0.0
        %2383 = vmatmul.mubr.f32.gmra.mrb[0].mxu0 %v2293
        %v2384 = vpop.f32.mrb[0].mxu0
        %v2385 = vadd.f32 0.0, %v2384
        %v2386 = vpop.f32.mrb[0].mxu0
        %2387 = vmatprep.mubr.f32.mxu0 0.0
        %2388 = vmatmul.mubr.f32.gmra.mrb[0].mxu0 %v2294
        %v2389 = vpop.f32.mrb[0].mxu0
        %v2390 = vadd.f32 0.0, %v2389
        %v2391 = vpop.f32.mrb[0].mxu0
        %2392 = vmatprep.mubr.f32.mxu0 0.0
        %2393 = vmatmul.mubr.f32.gmra.mrb[0].mxu0 %v2295
        %v2394 = vpop.f32.mrb[0].mxu0
        %v2395 = vadd.f32 0.0, %v2394
        %v2396 = vpop.f32.mrb[0].mxu0
        %2397 = vdwg.mxu0
        %v2398 = vadd.f32 %v2276, %v2380
        %v2399 = vadd.f32 %v2277, %v2385
        %v2400 = vadd.f32 %v2278, %v2390
        %v2401 = vadd.f32 %v2279, %v2395
        %vm2402 = vcmp.eq.s32.totalorder %v426, %v871
        %vm2403 = vcmp.eq.s32.totalorder %v427, %v874
        %vm2404 = vcmp.eq.s32.totalorder %v428, %v877
        %vm2405 = vcmp.eq.s32.totalorder %v429, %v880
        %v2406 = vsel %vm2402, 1, 0
        %v2407 = vsel %vm2403, 1, 0
        %v2408 = vsel %vm2404, 1, 0
        %v2409 = vsel %vm2405, 1, 0
        %v2410 = vcvt.s32.f32 %v2406
        %v2411 = vcvt.s32.f32 %v2407
        %v2412 = vcvt.s32.f32 %v2408
        %v2413 = vcvt.s32.f32 %v2409
        %v2414 = vmul.f32 %v2410, 0.5
        %v2415 = vmul.f32 %v2411, 0.5
        %v2416 = vmul.f32 %v2412, 0.5
        %v2417 = vmul.f32 %v2413, 0.5
        %s2418 = scalar_lea.vmem [#allocation8], 256
        %v2419 = vld [vmem:[%s2418] sm:$0xff]
        %v2420 = vld [vmem:[%s2418 + $0x8] sm:$0xff]
        %v2421 = vld [vmem:[%s2418 + $0x10] sm:$0xff]
        %v2422 = vld [vmem:[%s2418 + $0x18] sm:$0xff]
        %v2423 = vld [vmem:[%s2418 + $0x20] sm:$0xff]
        %v2424 = vld [vmem:[%s2418 + $0x28] sm:$0xff]
        %v2425 = vld [vmem:[%s2418 + $0x30] sm:$0xff]
        %v2426 = vld [vmem:[%s2418 + $0x38] sm:$0xff]
        %v2427 = vld [vmem:[%s2418 + $0x40] sm:$0xff]
        %v2428 = vld [vmem:[%s2418 + $0x48] sm:$0xff]
        %v2429 = vld [vmem:[%s2418 + $0x50] sm:$0xff]
        %v2430 = vld [vmem:[%s2418 + $0x58] sm:$0xff]
        %v2431 = vld [vmem:[%s2418 + $0x60] sm:$0xff]
        %v2432 = vld [vmem:[%s2418 + $0x68] sm:$0xff]
        %v2433 = vld [vmem:[%s2418 + $0x70] sm:$0xff]
        %v2434 = vld [vmem:[%s2418 + $0x78] sm:$0xff]
        %2435 = vmatprep.subr.mxu0 0.0
        %2436 = vmatpush1.msra.mxu0 %v2419
        %2437 = vmatprep.subr.mxu0 0.0
        %2438 = vmatpush1.msra.mxu0 %v2420
        %2439 = vmatprep.subr.mxu0 0.0
        %2440 = vmatpush1.msra.mxu0 %v2421
        %2441 = vmatprep.subr.mxu0 0.0
        %2442 = vmatpush1.msra.mxu0 %v2422
        %2443 = vmatprep.subr.mxu0 0.0
        %2444 = vmatpush1.msra.mxu0 %v2423
        %2445 = vmatprep.subr.mxu0 0.0
        %2446 = vmatpush1.msra.mxu0 %v2424
        %2447 = vmatprep.subr.mxu0 0.0
        %2448 = vmatpush1.msra.mxu0 %v2425
        %2449 = vmatprep.subr.mxu0 0.0
        %2450 = vmatpush1.msra.mxu0 %v2426
        %2451 = vmatprep.subr.mxu0 0.0
        %2452 = vmatpush1.msra.mxu0 %v2427
        %2453 = vmatprep.subr.mxu0 0.0
        %2454 = vmatpush1.msra.mxu0 %v2428
        %2455 = vmatprep.subr.mxu0 0.0
        %2456 = vmatpush1.msra.mxu0 %v2429
        %2457 = vmatprep.subr.mxu0 0.0
        %2458 = vmatpush1.msra.mxu0 %v2430
        %2459 = vmatprep.subr.mxu0 0.0
        %2460 = vmatpush1.msra.mxu0 %v2431
        %2461 = vmatprep.subr.mxu0 0.0
        %2462 = vmatpush1.msra.mxu0 %v2432
        %2463 = vmatprep.subr.mxu0 0.0
        %2464 = vmatpush1.msra.mxu0 %v2433
        %2465 = vmatprep.subr.mxu0 0.0
        %2466 = vmatpush1.msra.mxu0 %v2434
        %2467 = vmatprep.subr.mxu0 0.0
        %2468 = vmatpush1.msra.mxu0 0.0
        %2469 = vmatprep.subr.mxu0 0.0
        %2470 = vmatpush1.msra.mxu0 0.0
        %2471 = vmatprep.subr.mxu0 0.0
        %2472 = vmatpush1.msra.mxu0 0.0
        %2473 = vmatprep.subr.mxu0 0.0
        %2474 = vmatpush1.msra.mxu0 0.0
        %2475 = vmatprep.subr.mxu0 0.0
        %2476 = vmatpush1.msra.mxu0 0.0
        %2477 = vmatprep.subr.mxu0 0.0
        %2478 = vmatpush1.msra.mxu0 0.0
        %2479 = vmatprep.subr.mxu0 0.0
        %2480 = vmatpush1.msra.mxu0 0.0
        %2481 = vmatprep.subr.mxu0 0.0
        %2482 = vmatpush1.msra.mxu0 0.0
        %2483 = vmatprep.subr.mxu0 0.0
        %2484 = vmatpush1.msra.mxu0 0.0
        %2485 = vmatprep.subr.mxu0 0.0
        %2486 = vmatpush1.msra.mxu0 0.0
        %2487 = vmatprep.subr.mxu0 0.0
        %2488 = vmatpush1.msra.mxu0 0.0
        %2489 = vmatprep.subr.mxu0 0.0
        %2490 = vmatpush1.msra.mxu0 0.0
        %2491 = vmatprep.subr.mxu0 0.0
        %2492 = vmatpush1.msra.mxu0 0.0
        %2493 = vmatprep.subr.mxu0 0.0
        %2494 = vmatpush1.msra.mxu0 0.0
        %2495 = vmatprep.subr.mxu0 0.0
        %2496 = vmatpush1.msra.mxu0 0.0
        %2497 = vmatprep.subr.mxu0 0.0
        %2498 = vmatpush1.msra.mxu0 0.0
        %2499 = vmatprep.mubr.f32.mxu0 0.0
        %2500 = vmatmul.mubr.f32.gmra.mrb[0].mxu0 %v2414
        %v2501 = vpop.f32.mrb[0].mxu0
        %v2502 = vadd.f32 0.0, %v2501
        %v2503 = vpop.f32.mrb[0].mxu0
        %2504 = vmatprep.mubr.f32.mxu0 0.0
        %2505 = vmatmul.mubr.f32.gmra.mrb[0].mxu0 %v2415
        %v2506 = vpop.f32.mrb[0].mxu0
        %v2507 = vadd.f32 0.0, %v2506
        %v2508 = vpop.f32.mrb[0].mxu0
        %2509 = vmatprep.mubr.f32.mxu0 0.0
        %2510 = vmatmul.mubr.f32.gmra.mrb[0].mxu0 %v2416
        %v2511 = vpop.f32.mrb[0].mxu0
        %v2512 = vadd.f32 0.0, %v2511
        %v2513 = vpop.f32.mrb[0].mxu0
        %2514 = vmatprep.mubr.f32.mxu0 0.0
        %2515 = vmatmul.mubr.f32.gmra.mrb[0].mxu0 %v2417
        %v2516 = vpop.f32.mrb[0].mxu0
        %v2517 = vadd.f32 0.0, %v2516
        %v2518 = vpop.f32.mrb[0].mxu0
        %2519 = vdwg.mxu0
        %v2520 = vadd.f32 %v2398, %v2502
        %v2521 = vadd.f32 %v2399, %v2507
        %v2522 = vadd.f32 %v2400, %v2512
        %v2523 = vadd.f32 %v2401, %v2517
        %vm2524 = vcmp.eq.s32.totalorder %v426, %v1086
        %vm2525 = vcmp.eq.s32.totalorder %v427, %v1089
        %vm2526 = vcmp.eq.s32.totalorder %v428, %v1092
        %vm2527 = vcmp.eq.s32.totalorder %v429, %v1095
        %v2528 = vsel %vm2524, 1, 0
        %v2529 = vsel %vm2525, 1, 0
        %v2530 = vsel %vm2526, 1, 0
        %v2531 = vsel %vm2527, 1, 0
        %v2532 = vcvt.s32.f32 %v2528
        %v2533 = vcvt.s32.f32 %v2529
        %v2534 = vcvt.s32.f32 %v2530
        %v2535 = vcvt.s32.f32 %v2531
        %v2536 = vmul.f32 %v2532, 0.5
        %v2537 = vmul.f32 %v2533, 0.5
        %v2538 = vmul.f32 %v2534, 0.5
        %v2539 = vmul.f32 %v2535, 0.5
        %s2540 = scalar_lea.vmem [#allocation8], 384
        %v2541 = vld [vmem:[%s2540] sm:$0xff]
        %v2542 = vld [vmem:[%s2540 + $0x8] sm:$0xff]
        %v2543 = vld [vmem:[%s2540 + $0x10] sm:$0xff]
        %v2544 = vld [vmem:[%s2540 + $0x18] sm:$0xff]
        %v2545 = vld [vmem:[%s2540 + $0x20] sm:$0xff]
        %v2546 = vld [vmem:[%s2540 + $0x28] sm:$0xff]
        %v2547 = vld [vmem:[%s2540 + $0x30] sm:$0xff]
        %v2548 = vld [vmem:[%s2540 + $0x38] sm:$0xff]
        %v2549 = vld [vmem:[%s2540 + $0x40] sm:$0xff]
        %v2550 = vld [vmem:[%s2540 + $0x48] sm:$0xff]
        %v2551 = vld [vmem:[%s2540 + $0x50] sm:$0xff]
        %v2552 = vld [vmem:[%s2540 + $0x58] sm:$0xff]
        %v2553 = vld [vmem:[%s2540 + $0x60] sm:$0xff]
        %v2554 = vld [vmem:[%s2540 + $0x68] sm:$0xff]
        %v2555 = vld [vmem:[%s2540 + $0x70] sm:$0xff]
        %v2556 = vld [vmem:[%s2540 + $0x78] sm:$0xff]
        %2557 = vmatprep.subr.mxu0 0.0
        %2558 = vmatpush1.msra.mxu0 %v2541
        %2559 = vmatprep.subr.mxu0 0.0
        %2560 = vmatpush1.msra.mxu0 %v2542
        %2561 = vmatprep.subr.mxu0 0.0
        %2562 = vmatpush1.msra.mxu0 %v2543
        %2563 = vmatprep.subr.mxu0 0.0
        %2564 = vmatpush1.msra.mxu0 %v2544
        %2565 = vmatprep.subr.mxu0 0.0
        %2566 = vmatpush1.msra.mxu0 %v2545
        %2567 = vmatprep.subr.mxu0 0.0
        %2568 = vmatpush1.msra.mxu0 %v2546
        %2569 = vmatprep.subr.mxu0 0.0
        %2570 = vmatpush1.msra.mxu0 %v2547
        %2571 = vmatprep.subr.mxu0 0.0
        %2572 = vmatpush1.msra.mxu0 %v2548
        %2573 = vmatprep.subr.mxu0 0.0
        %2574 = vmatpush1.msra.mxu0 %v2549
        %2575 = vmatprep.subr.mxu0 0.0
        %2576 = vmatpush1.msra.mxu0 %v2550
        %2577 = vmatprep.subr.mxu0 0.0
        %2578 = vmatpush1.msra.mxu0 %v2551
        %2579 = vmatprep.subr.mxu0 0.0
        %2580 = vmatpush1.msra.mxu0 %v2552
        %2581 = vmatprep.subr.mxu0 0.0
        %2582 = vmatpush1.msra.mxu0 %v2553
        %2583 = vmatprep.subr.mxu0 0.0
        %2584 = vmatpush1.msra.mxu0 %v2554
        %2585 = vmatprep.subr.mxu0 0.0
        %2586 = vmatpush1.msra.mxu0 %v2555
        %2587 = vmatprep.subr.mxu0 0.0
        %2588 = vmatpush1.msra.mxu0 %v2556
        %2589 = vmatprep.subr.mxu0 0.0
        %2590 = vmatpush1.msra.mxu0 0.0
        %2591 = vmatprep.subr.mxu0 0.0
        %2592 = vmatpush1.msra.mxu0 0.0
        %2593 = vmatprep.subr.mxu0 0.0
        %2594 = vmatpush1.msra.mxu0 0.0
        %2595 = vmatprep.subr.mxu0 0.0
        %2596 = vmatpush1.msra.mxu0 0.0
        %2597 = vmatprep.subr.mxu0 0.0
        %2598 = vmatpush1.msra.mxu0 0.0
        %2599 = vmatprep.subr.mxu0 0.0
        %2600 = vmatpush1.msra.mxu0 0.0
        %2601 = vmatprep.subr.mxu0 0.0
        %2602 = vmatpush1.msra.mxu0 0.0
        %2603 = vmatprep.subr.mxu0 0.0
        %2604 = vmatpush1.msra.mxu0 0.0
        %2605 = vmatprep.subr.mxu0 0.0
        %2606 = vmatpush1.msra.mxu0 0.0
        %2607 = vmatprep.subr.mxu0 0.0
        %2608 = vmatpush1.msra.mxu0 0.0
        %2609 = vmatprep.subr.mxu0 0.0
        %2610 = vmatpush1.msra.mxu0 0.0
        %2611 = vmatprep.subr.mxu0 0.0
        %2612 = vmatpush1.msra.mxu0 0.0
        %2613 = vmatprep.subr.mxu0 0.0
        %2614 = vmatpush1.msra.mxu0 0.0
        %2615 = vmatprep.subr.mxu0 0.0
        %2616 = vmatpush1.msra.mxu0 0.0
        %2617 = vmatprep.subr.mxu0 0.0
        %2618 = vmatpush1.msra.mxu0 0.0
        %2619 = vmatprep.subr.mxu0 0.0
        %2620 = vmatpush1.msra.mxu0 0.0
        %2621 = vmatprep.mubr.f32.mxu0 0.0
        %2622 = vmatmul.mubr.f32.gmra.mrb[0].mxu0 %v2536
        %v2623 = vpop.f32.mrb[0].mxu0
        %v2624 = vadd.f32 0.0, %v2623
        %v2625 = vpop.f32.mrb[0].mxu0
        %2626 = vmatprep.mubr.f32.mxu0 0.0
        %2627 = vmatmul.mubr.f32.gmra.mrb[0].mxu0 %v2537
        %v2628 = vpop.f32.mrb[0].mxu0
        %v2629 = vadd.f32 0.0, %v2628
        %v2630 = vpop.f32.mrb[0].mxu0
        %2631 = vmatprep.mubr.f32.mxu0 0.0
        %2632 = vmatmul.mubr.f32.gmra.mrb[0].mxu0 %v2538
        %v2633 = vpop.f32.mrb[0].mxu0
        %v2634 = vadd.f32 0.0, %v2633
        %v2635 = vpop.f32.mrb[0].mxu0
        %2636 = vmatprep.mubr.f32.mxu0 0.0
        %2637 = vmatmul.mubr.f32.gmra.mrb[0].mxu0 %v2539
        %v2638 = vpop.f32.mrb[0].mxu0
        %v2639 = vadd.f32 0.0, %v2638
        %v2640 = vpop.f32.mrb[0].mxu0
        %2641 = vdwg.mxu0
        %v2642 = vadd.f32 %v2520, %v2624
        %v2643 = vadd.f32 %v2521, %v2629
        %v2644 = vadd.f32 %v2522, %v2634
        %v2645 = vadd.f32 %v2523, %v2639
        %vm2646 = vcmp.eq.s32.totalorder %v426, %v1301
        %vm2647 = vcmp.eq.s32.totalorder %v427, %v1304
        %vm2648 = vcmp.eq.s32.totalorder %v428, %v1307
        %vm2649 = vcmp.eq.s32.totalorder %v429, %v1310
        %v2650 = vsel %vm2646, 1, 0
        %v2651 = vsel %vm2647, 1, 0
        %v2652 = vsel %vm2648, 1, 0
        %v2653 = vsel %vm2649, 1, 0
        %v2654 = vcvt.s32.f32 %v2650
        %v2655 = vcvt.s32.f32 %v2651
        %v2656 = vcvt.s32.f32 %v2652
        %v2657 = vcvt.s32.f32 %v2653
        %v2658 = vmul.f32 %v2654, 0.5
        %v2659 = vmul.f32 %v2655, 0.5
        %v2660 = vmul.f32 %v2656, 0.5
        %v2661 = vmul.f32 %v2657, 0.5
        %s2662 = scalar_lea.vmem [#allocation8], 512
        %v2663 = vld [vmem:[%s2662] sm:$0xff]
        %v2664 = vld [vmem:[%s2662 + $0x8] sm:$0xff]
        %v2665 = vld [vmem:[%s2662 + $0x10] sm:$0xff]
        %v2666 = vld [vmem:[%s2662 + $0x18] sm:$0xff]
        %v2667 = vld [vmem:[%s2662 + $0x20] sm:$0xff]
        %v2668 = vld [vmem:[%s2662 + $0x28] sm:$0xff]
        %v2669 = vld [vmem:[%s2662 + $0x30] sm:$0xff]
        %v2670 = vld [vmem:[%s2662 + $0x38] sm:$0xff]
        %v2671 = vld [vmem:[%s2662 + $0x40] sm:$0xff]
        %v2672 = vld [vmem:[%s2662 + $0x48] sm:$0xff]
        %v2673 = vld [vmem:[%s2662 + $0x50] sm:$0xff]
        %v2674 = vld [vmem:[%s2662 + $0x58] sm:$0xff]
        %v2675 = vld [vmem:[%s2662 + $0x60] sm:$0xff]
        %v2676 = vld [vmem:[%s2662 + $0x68] sm:$0xff]
        %v2677 = vld [vmem:[%s2662 + $0x70] sm:$0xff]
        %v2678 = vld [vmem:[%s2662 + $0x78] sm:$0xff]
        %2679 = vmatprep.subr.mxu0 0.0
        %2680 = vmatpush1.msra.mxu0 %v2663
        %2681 = vmatprep.subr.mxu0 0.0
        %2682 = vmatpush1.msra.mxu0 %v2664
        %2683 = vmatprep.subr.mxu0 0.0
        %2684 = vmatpush1.msra.mxu0 %v2665
        %2685 = vmatprep.subr.mxu0 0.0
        %2686 = vmatpush1.msra.mxu0 %v2666
        %2687 = vmatprep.subr.mxu0 0.0
        %2688 = vmatpush1.msra.mxu0 %v2667
        %2689 = vmatprep.subr.mxu0 0.0
        %2690 = vmatpush1.msra.mxu0 %v2668
        %2691 = vmatprep.subr.mxu0 0.0
        %2692 = vmatpush1.msra.mxu0 %v2669
        %2693 = vmatprep.subr.mxu0 0.0
        %2694 = vmatpush1.msra.mxu0 %v2670
        %2695 = vmatprep.subr.mxu0 0.0
        %2696 = vmatpush1.msra.mxu0 %v2671
        %2697 = vmatprep.subr.mxu0 0.0
        %2698 = vmatpush1.msra.mxu0 %v2672
        %2699 = vmatprep.subr.mxu0 0.0
        %2700 = vmatpush1.msra.mxu0 %v2673
        %2701 = vmatprep.subr.mxu0 0.0
        %2702 = vmatpush1.msra.mxu0 %v2674
        %2703 = vmatprep.subr.mxu0 0.0
        %2704 = vmatpush1.msra.mxu0 %v2675
        %2705 = vmatprep.subr.mxu0 0.0
        %2706 = vmatpush1.msra.mxu0 %v2676
        %2707 = vmatprep.subr.mxu0 0.0
        %2708 = vmatpush1.msra.mxu0 %v2677
        %2709 = vmatprep.subr.mxu0 0.0
        %2710 = vmatpush1.msra.mxu0 %v2678
        %2711 = vmatprep.subr.mxu0 0.0
        %2712 = vmatpush1.msra.mxu0 0.0
        %2713 = vmatprep.subr.mxu0 0.0
        %2714 = vmatpush1.msra.mxu0 0.0
        %2715 = vmatprep.subr.mxu0 0.0
        %2716 = vmatpush1.msra.mxu0 0.0
        %2717 = vmatprep.subr.mxu0 0.0
        %2718 = vmatpush1.msra.mxu0 0.0
        %2719 = vmatprep.subr.mxu0 0.0
        %2720 = vmatpush1.msra.mxu0 0.0
        %2721 = vmatprep.subr.mxu0 0.0
        %2722 = vmatpush1.msra.mxu0 0.0
        %2723 = vmatprep.subr.mxu0 0.0
        %2724 = vmatpush1.msra.mxu0 0.0
        %2725 = vmatprep.subr.mxu0 0.0
        %2726 = vmatpush1.msra.mxu0 0.0
        %2727 = vmatprep.subr.mxu0 0.0
        %2728 = vmatpush1.msra.mxu0 0.0
        %2729 = vmatprep.subr.mxu0 0.0
        %2730 = vmatpush1.msra.mxu0 0.0
        %2731 = vmatprep.subr.mxu0 0.0
        %2732 = vmatpush1.msra.mxu0 0.0
        %2733 = vmatprep.subr.mxu0 0.0
        %2734 = vmatpush1.msra.mxu0 0.0
        %2735 = vmatprep.subr.mxu0 0.0
        %2736 = vmatpush1.msra.mxu0 0.0
        %2737 = vmatprep.subr.mxu0 0.0
        %2738 = vmatpush1.msra.mxu0 0.0
        %2739 = vmatprep.subr.mxu0 0.0
        %2740 = vmatpush1.msra.mxu0 0.0
        %2741 = vmatprep.subr.mxu0 0.0
        %2742 = vmatpush1.msra.mxu0 0.0
        %2743 = vmatprep.mubr.f32.mxu0 0.0
        %2744 = vmatmul.mubr.f32.gmra.mrb[0].mxu0 %v2658
        %v2745 = vpop.f32.mrb[0].mxu0
        %v2746 = vadd.f32 0.0, %v2745
        %v2747 = vpop.f32.mrb[0].mxu0
        %2748 = vmatprep.mubr.f32.mxu0 0.0
        %2749 = vmatmul.mubr.f32.gmra.mrb[0].mxu0 %v2659
        %v2750 = vpop.f32.mrb[0].mxu0
        %v2751 = vadd.f32 0.0, %v2750
        %v2752 = vpop.f32.mrb[0].mxu0
        %2753 = vmatprep.mubr.f32.mxu0 0.0
        %2754 = vmatmul.mubr.f32.gmra.mrb[0].mxu0 %v2660
        %v2755 = vpop.f32.mrb[0].mxu0
        %v2756 = vadd.f32 0.0, %v2755
        %v2757 = vpop.f32.mrb[0].mxu0
        %2758 = vmatprep.mubr.f32.mxu0 0.0
        %2759 = vmatmul.mubr.f32.gmra.mrb[0].mxu0 %v2661
        %v2760 = vpop.f32.mrb[0].mxu0
        %v2761 = vadd.f32 0.0, %v2760
        %v2762 = vpop.f32.mrb[0].mxu0
        %2763 = vdwg.mxu0
        %v2764 = vadd.f32 %v2642, %v2746
        %v2765 = vadd.f32 %v2643, %v2751
        %v2766 = vadd.f32 %v2644, %v2756
        %v2767 = vadd.f32 %v2645, %v2761
        %vm2768 = vcmp.eq.s32.totalorder %v426, %v1516
        %vm2769 = vcmp.eq.s32.totalorder %v427, %v1519
        %vm2770 = vcmp.eq.s32.totalorder %v428, %v1522
        %vm2771 = vcmp.eq.s32.totalorder %v429, %v1525
        %v2772 = vsel %vm2768, 1, 0
        %v2773 = vsel %vm2769, 1, 0
        %v2774 = vsel %vm2770, 1, 0
        %v2775 = vsel %vm2771, 1, 0
        %v2776 = vcvt.s32.f32 %v2772
        %v2777 = vcvt.s32.f32 %v2773
        %v2778 = vcvt.s32.f32 %v2774
        %v2779 = vcvt.s32.f32 %v2775
        %v2780 = vmul.f32 %v2776, 0.5
        %v2781 = vmul.f32 %v2777, 0.5
        %v2782 = vmul.f32 %v2778, 0.5
        %v2783 = vmul.f32 %v2779, 0.5
        %s2784 = scalar_lea.vmem [#allocation8], 640
        %v2785 = vld [vmem:[%s2784] sm:$0xff]
        %v2786 = vld [vmem:[%s2784 + $0x8] sm:$0xff]
        %v2787 = vld [vmem:[%s2784 + $0x10] sm:$0xff]
        %v2788 = vld [vmem:[%s2784 + $0x18] sm:$0xff]
        %v2789 = vld [vmem:[%s2784 + $0x20] sm:$0xff]
        %v2790 = vld [vmem:[%s2784 + $0x28] sm:$0xff]
        %v2791 = vld [vmem:[%s2784 + $0x30] sm:$0xff]
        %v2792 = vld [vmem:[%s2784 + $0x38] sm:$0xff]
        %v2793 = vld [vmem:[%s2784 + $0x40] sm:$0xff]
        %v2794 = vld [vmem:[%s2784 + $0x48] sm:$0xff]
        %v2795 = vld [vmem:[%s2784 + $0x50] sm:$0xff]
        %v2796 = vld [vmem:[%s2784 + $0x58] sm:$0xff]
        %v2797 = vld [vmem:[%s2784 + $0x60] sm:$0xff]
        %v2798 = vld [vmem:[%s2784 + $0x68] sm:$0xff]
        %v2799 = vld [vmem:[%s2784 + $0x70] sm:$0xff]
        %v2800 = vld [vmem:[%s2784 + $0x78] sm:$0xff]
        %2801 = vmatprep.subr.mxu0 0.0
        %2802 = vmatpush1.msra.mxu0 %v2785
        %2803 = vmatprep.subr.mxu0 0.0
        %2804 = vmatpush1.msra.mxu0 %v2786
        %2805 = vmatprep.subr.mxu0 0.0
        %2806 = vmatpush1.msra.mxu0 %v2787
        %2807 = vmatprep.subr.mxu0 0.0
        %2808 = vmatpush1.msra.mxu0 %v2788
        %2809 = vmatprep.subr.mxu0 0.0
        %2810 = vmatpush1.msra.mxu0 %v2789
        %2811 = vmatprep.subr.mxu0 0.0
        %2812 = vmatpush1.msra.mxu0 %v2790
        %2813 = vmatprep.subr.mxu0 0.0
        %2814 = vmatpush1.msra.mxu0 %v2791
        %2815 = vmatprep.subr.mxu0 0.0
        %2816 = vmatpush1.msra.mxu0 %v2792
        %2817 = vmatprep.subr.mxu0 0.0
        %2818 = vmatpush1.msra.mxu0 %v2793
        %2819 = vmatprep.subr.mxu0 0.0
        %2820 = vmatpush1.msra.mxu0 %v2794
        %2821 = vmatprep.subr.mxu0 0.0
        %2822 = vmatpush1.msra.mxu0 %v2795
        %2823 = vmatprep.subr.mxu0 0.0
        %2824 = vmatpush1.msra.mxu0 %v2796
        %2825 = vmatprep.subr.mxu0 0.0
        %2826 = vmatpush1.msra.mxu0 %v2797
        %2827 = vmatprep.subr.mxu0 0.0
        %2828 = vmatpush1.msra.mxu0 %v2798
        %2829 = vmatprep.subr.mxu0 0.0
        %2830 = vmatpush1.msra.mxu0 %v2799
        %2831 = vmatprep.subr.mxu0 0.0
        %2832 = vmatpush1.msra.mxu0 %v2800
        %2833 = vmatprep.subr.mxu0 0.0
        %2834 = vmatpush1.msra.mxu0 0.0
        %2835 = vmatprep.subr.mxu0 0.0
        %2836 = vmatpush1.msra.mxu0 0.0
        %2837 = vmatprep.subr.mxu0 0.0
        %2838 = vmatpush1.msra.mxu0 0.0
        %2839 = vmatprep.subr.mxu0 0.0
        %2840 = vmatpush1.msra.mxu0 0.0
        %2841 = vmatprep.subr.mxu0 0.0
        %2842 = vmatpush1.msra.mxu0 0.0
        %2843 = vmatprep.subr.mxu0 0.0
        %2844 = vmatpush1.msra.mxu0 0.0
        %2845 = vmatprep.subr.mxu0 0.0
        %2846 = vmatpush1.msra.mxu0 0.0
        %2847 = vmatprep.subr.mxu0 0.0
        %2848 = vmatpush1.msra.mxu0 0.0
        %2849 = vmatprep.subr.mxu0 0.0
        %2850 = vmatpush1.msra.mxu0 0.0
        %2851 = vmatprep.subr.mxu0 0.0
        %2852 = vmatpush1.msra.mxu0 0.0
        %2853 = vmatprep.subr.mxu0 0.0
        %2854 = vmatpush1.msra.mxu0 0.0
        %2855 = vmatprep.subr.mxu0 0.0
        %2856 = vmatpush1.msra.mxu0 0.0
        %2857 = vmatprep.subr.mxu0 0.0
        %2858 = vmatpush1.msra.mxu0 0.0
        %2859 = vmatprep.subr.mxu0 0.0
        %2860 = vmatpush1.msra.mxu0 0.0
        %2861 = vmatprep.subr.mxu0 0.0
        %2862 = vmatpush1.msra.mxu0 0.0
        %2863 = vmatprep.subr.mxu0 0.0
        %2864 = vmatpush1.msra.mxu0 0.0
        %2865 = vmatprep.mubr.f32.mxu0 0.0
        %2866 = vmatmul.mubr.f32.gmra.mrb[0].mxu0 %v2780
        %v2867 = vpop.f32.mrb[0].mxu0
        %v2868 = vadd.f32 0.0, %v2867
        %v2869 = vpop.f32.mrb[0].mxu0
        %2870 = vmatprep.mubr.f32.mxu0 0.0
        %2871 = vmatmul.mubr.f32.gmra.mrb[0].mxu0 %v2781
        %v2872 = vpop.f32.mrb[0].mxu0
        %v2873 = vadd.f32 0.0, %v2872
        %v2874 = vpop.f32.mrb[0].mxu0
        %2875 = vmatprep.mubr.f32.mxu0 0.0
        %2876 = vmatmul.mubr.f32.gmra.mrb[0].mxu0 %v2782
        %v2877 = vpop.f32.mrb[0].mxu0
        %v2878 = vadd.f32 0.0, %v2877
        %v2879 = vpop.f32.mrb[0].mxu0
        %2880 = vmatprep.mubr.f32.mxu0 0.0
        %2881 = vmatmul.mubr.f32.gmra.mrb[0].mxu0 %v2783
        %v2882 = vpop.f32.mrb[0].mxu0
        %v2883 = vadd.f32 0.0, %v2882
        %v2884 = vpop.f32.mrb[0].mxu0
        %2885 = vdwg.mxu0
        %v2886 = vadd.f32 %v2764, %v2868
        %v2887 = vadd.f32 %v2765, %v2873
        %v2888 = vadd.f32 %v2766, %v2878
        %v2889 = vadd.f32 %v2767, %v2883
        %vm2890 = vcmp.eq.s32.totalorder %v426, %v1731
        %vm2891 = vcmp.eq.s32.totalorder %v427, %v1734
        %vm2892 = vcmp.eq.s32.totalorder %v428, %v1737
        %vm2893 = vcmp.eq.s32.totalorder %v429, %v1740
        %v2894 = vsel %vm2890, 1, 0
        %v2895 = vsel %vm2891, 1, 0
        %v2896 = vsel %vm2892, 1, 0
        %v2897 = vsel %vm2893, 1, 0
        %v2898 = vcvt.s32.f32 %v2894
        %v2899 = vcvt.s32.f32 %v2895
        %v2900 = vcvt.s32.f32 %v2896
        %v2901 = vcvt.s32.f32 %v2897
        %v2902 = vmul.f32 %v2898, 0.5
        %v2903 = vmul.f32 %v2899, 0.5
        %v2904 = vmul.f32 %v2900, 0.5
        %v2905 = vmul.f32 %v2901, 0.5
        %s2906 = scalar_lea.vmem [#allocation8], 768
        %v2907 = vld [vmem:[%s2906] sm:$0xff]
        %v2908 = vld [vmem:[%s2906 + $0x8] sm:$0xff]
        %v2909 = vld [vmem:[%s2906 + $0x10] sm:$0xff]
        %v2910 = vld [vmem:[%s2906 + $0x18] sm:$0xff]
        %v2911 = vld [vmem:[%s2906 + $0x20] sm:$0xff]
        %v2912 = vld [vmem:[%s2906 + $0x28] sm:$0xff]
        %v2913 = vld [vmem:[%s2906 + $0x30] sm:$0xff]
        %v2914 = vld [vmem:[%s2906 + $0x38] sm:$0xff]
        %v2915 = vld [vmem:[%s2906 + $0x40] sm:$0xff]
        %v2916 = vld [vmem:[%s2906 + $0x48] sm:$0xff]
        %v2917 = vld [vmem:[%s2906 + $0x50] sm:$0xff]
        %v2918 = vld [vmem:[%s2906 + $0x58] sm:$0xff]
        %v2919 = vld [vmem:[%s2906 + $0x60] sm:$0xff]
        %v2920 = vld [vmem:[%s2906 + $0x68] sm:$0xff]
        %v2921 = vld [vmem:[%s2906 + $0x70] sm:$0xff]
        %v2922 = vld [vmem:[%s2906 + $0x78] sm:$0xff]
        %2923 = vmatprep.subr.mxu0 0.0
        %2924 = vmatpush1.msra.mxu0 %v2907
        %2925 = vmatprep.subr.mxu0 0.0
        %2926 = vmatpush1.msra.mxu0 %v2908
        %2927 = vmatprep.subr.mxu0 0.0
        %2928 = vmatpush1.msra.mxu0 %v2909
        %2929 = vmatprep.subr.mxu0 0.0
        %2930 = vmatpush1.msra.mxu0 %v2910
        %2931 = vmatprep.subr.mxu0 0.0
        %2932 = vmatpush1.msra.mxu0 %v2911
        %2933 = vmatprep.subr.mxu0 0.0
        %2934 = vmatpush1.msra.mxu0 %v2912
        %2935 = vmatprep.subr.mxu0 0.0
        %2936 = vmatpush1.msra.mxu0 %v2913
        %2937 = vmatprep.subr.mxu0 0.0
        %2938 = vmatpush1.msra.mxu0 %v2914
        %2939 = vmatprep.subr.mxu0 0.0
        %2940 = vmatpush1.msra.mxu0 %v2915
        %2941 = vmatprep.subr.mxu0 0.0
        %2942 = vmatpush1.msra.mxu0 %v2916
        %2943 = vmatprep.subr.mxu0 0.0
        %2944 = vmatpush1.msra.mxu0 %v2917
        %2945 = vmatprep.subr.mxu0 0.0
        %2946 = vmatpush1.msra.mxu0 %v2918
        %2947 = vmatprep.subr.mxu0 0.0
        %2948 = vmatpush1.msra.mxu0 %v2919
        %2949 = vmatprep.subr.mxu0 0.0
        %2950 = vmatpush1.msra.mxu0 %v2920
        %2951 = vmatprep.subr.mxu0 0.0
        %2952 = vmatpush1.msra.mxu0 %v2921
        %2953 = vmatprep.subr.mxu0 0.0
        %2954 = vmatpush1.msra.mxu0 %v2922
        %2955 = vmatprep.subr.mxu0 0.0
        %2956 = vmatpush1.msra.mxu0 0.0
        %2957 = vmatprep.subr.mxu0 0.0
        %2958 = vmatpush1.msra.mxu0 0.0
        %2959 = vmatprep.subr.mxu0 0.0
        %2960 = vmatpush1.msra.mxu0 0.0
        %2961 = vmatprep.subr.mxu0 0.0
        %2962 = vmatpush1.msra.mxu0 0.0
        %2963 = vmatprep.subr.mxu0 0.0
        %2964 = vmatpush1.msra.mxu0 0.0
        %2965 = vmatprep.subr.mxu0 0.0
        %2966 = vmatpush1.msra.mxu0 0.0
        %2967 = vmatprep.subr.mxu0 0.0
        %2968 = vmatpush1.msra.mxu0 0.0
        %2969 = vmatprep.subr.mxu0 0.0
        %2970 = vmatpush1.msra.mxu0 0.0
        %2971 = vmatprep.subr.mxu0 0.0
        %2972 = vmatpush1.msra.mxu0 0.0
        %2973 = vmatprep.subr.mxu0 0.0
        %2974 = vmatpush1.msra.mxu0 0.0
        %2975 = vmatprep.subr.mxu0 0.0
        %2976 = vmatpush1.msra.mxu0 0.0
        %2977 = vmatprep.subr.mxu0 0.0
        %2978 = vmatpush1.msra.mxu0 0.0
        %2979 = vmatprep.subr.mxu0 0.0
        %2980 = vmatpush1.msra.mxu0 0.0
        %2981 = vmatprep.subr.mxu0 0.0
        %2982 = vmatpush1.msra.mxu0 0.0
        %2983 = vmatprep.subr.mxu0 0.0
        %2984 = vmatpush1.msra.mxu0 0.0
        %2985 = vmatprep.subr.mxu0 0.0
        %2986 = vmatpush1.msra.mxu0 0.0
        %2987 = vmatprep.mubr.f32.mxu0 0.0
        %2988 = vmatmul.mubr.f32.gmra.mrb[0].mxu0 %v2902
        %v2989 = vpop.f32.mrb[0].mxu0
        %v2990 = vadd.f32 0.0, %v2989
        %v2991 = vpop.f32.mrb[0].mxu0
        %2992 = vmatprep.mubr.f32.mxu0 0.0
        %2993 = vmatmul.mubr.f32.gmra.mrb[0].mxu0 %v2903
        %v2994 = vpop.f32.mrb[0].mxu0
        %v2995 = vadd.f32 0.0, %v2994
        %v2996 = vpop.f32.mrb[0].mxu0
        %2997 = vmatprep.mubr.f32.mxu0 0.0
        %2998 = vmatmul.mubr.f32.gmra.mrb[0].mxu0 %v2904
        %v2999 = vpop.f32.mrb[0].mxu0
        %v3000 = vadd.f32 0.0, %v2999
        %v3001 = vpop.f32.mrb[0].mxu0
        %3002 = vmatprep.mubr.f32.mxu0 0.0
        %3003 = vmatmul.mubr.f32.gmra.mrb[0].mxu0 %v2905
        %v3004 = vpop.f32.mrb[0].mxu0
        %v3005 = vadd.f32 0.0, %v3004
        %v3006 = vpop.f32.mrb[0].mxu0
        %3007 = vdwg.mxu0
        %v3008 = vadd.f32 %v2886, %v2990
        %v3009 = vadd.f32 %v2887, %v2995
        %v3010 = vadd.f32 %v2888, %v3000
        %v3011 = vadd.f32 %v2889, %v3005
        %vm3012 = vcmp.eq.s32.totalorder %v426, %v1946
        %vm3013 = vcmp.eq.s32.totalorder %v427, %v1949
        %vm3014 = vcmp.eq.s32.totalorder %v428, %v1952
        %vm3015 = vcmp.eq.s32.totalorder %v429, %v1955
        %v3016 = vsel %vm3012, 1, 0
        %v3017 = vsel %vm3013, 1, 0
        %v3018 = vsel %vm3014, 1, 0
        %v3019 = vsel %vm3015, 1, 0
        %v3020 = vcvt.s32.f32 %v3016
        %v3021 = vcvt.s32.f32 %v3017
        %v3022 = vcvt.s32.f32 %v3018
        %v3023 = vcvt.s32.f32 %v3019
        %v3024 = vmul.f32 %v3020, 0.5
        %v3025 = vmul.f32 %v3021, 0.5
        %v3026 = vmul.f32 %v3022, 0.5
        %v3027 = vmul.f32 %v3023, 0.5
        %s3028 = scalar_lea.vmem [#allocation8], 896
        %v3029 = vld [vmem:[%s3028] sm:$0xff]
        %v3030 = vld [vmem:[%s3028 + $0x8] sm:$0xff]
        %v3031 = vld [vmem:[%s3028 + $0x10] sm:$0xff]
        %v3032 = vld [vmem:[%s3028 + $0x18] sm:$0xff]
        %v3033 = vld [vmem:[%s3028 + $0x20] sm:$0xff]
        %v3034 = vld [vmem:[%s3028 + $0x28] sm:$0xff]
        %v3035 = vld [vmem:[%s3028 + $0x30] sm:$0xff]
        %v3036 = vld [vmem:[%s3028 + $0x38] sm:$0xff]
        %v3037 = vld [vmem:[%s3028 + $0x40] sm:$0xff]
        %v3038 = vld [vmem:[%s3028 + $0x48] sm:$0xff]
        %v3039 = vld [vmem:[%s3028 + $0x50] sm:$0xff]
        %v3040 = vld [vmem:[%s3028 + $0x58] sm:$0xff]
        %v3041 = vld [vmem:[%s3028 + $0x60] sm:$0xff]
        %v3042 = vld [vmem:[%s3028 + $0x68] sm:$0xff]
        %v3043 = vld [vmem:[%s3028 + $0x70] sm:$0xff]
        %v3044 = vld [vmem:[%s3028 + $0x78] sm:$0xff]
        %3045 = vmatprep.subr.mxu0 0.0
        %3046 = vmatpush1.msra.mxu0 %v3029
        %3047 = vmatprep.subr.mxu0 0.0
        %3048 = vmatpush1.msra.mxu0 %v3030
        %3049 = vmatprep.subr.mxu0 0.0
        %3050 = vmatpush1.msra.mxu0 %v3031
        %3051 = vmatprep.subr.mxu0 0.0
        %3052 = vmatpush1.msra.mxu0 %v3032
        %3053 = vmatprep.subr.mxu0 0.0
        %3054 = vmatpush1.msra.mxu0 %v3033
        %3055 = vmatprep.subr.mxu0 0.0
        %3056 = vmatpush1.msra.mxu0 %v3034
        %3057 = vmatprep.subr.mxu0 0.0
        %3058 = vmatpush1.msra.mxu0 %v3035
        %3059 = vmatprep.subr.mxu0 0.0
        %3060 = vmatpush1.msra.mxu0 %v3036
        %3061 = vmatprep.subr.mxu0 0.0
        %3062 = vmatpush1.msra.mxu0 %v3037
        %3063 = vmatprep.subr.mxu0 0.0
        %3064 = vmatpush1.msra.mxu0 %v3038
        %3065 = vmatprep.subr.mxu0 0.0
        %3066 = vmatpush1.msra.mxu0 %v3039
        %3067 = vmatprep.subr.mxu0 0.0
        %3068 = vmatpush1.msra.mxu0 %v3040
        %3069 = vmatprep.subr.mxu0 0.0
        %3070 = vmatpush1.msra.mxu0 %v3041
        %3071 = vmatprep.subr.mxu0 0.0
        %3072 = vmatpush1.msra.mxu0 %v3042
        %3073 = vmatprep.subr.mxu0 0.0
        %3074 = vmatpush1.msra.mxu0 %v3043
        %3075 = vmatprep.subr.mxu0 0.0
        %3076 = vmatpush1.msra.mxu0 %v3044
        %3077 = vmatprep.subr.mxu0 0.0
        %3078 = vmatpush1.msra.mxu0 0.0
        %3079 = vmatprep.subr.mxu0 0.0
        %3080 = vmatpush1.msra.mxu0 0.0
        %3081 = vmatprep.subr.mxu0 0.0
        %3082 = vmatpush1.msra.mxu0 0.0
        %3083 = vmatprep.subr.mxu0 0.0
        %3084 = vmatpush1.msra.mxu0 0.0
        %3085 = vmatprep.subr.mxu0 0.0
        %3086 = vmatpush1.msra.mxu0 0.0
        %3087 = vmatprep.subr.mxu0 0.0
        %3088 = vmatpush1.msra.mxu0 0.0
        %3089 = vmatprep.subr.mxu0 0.0
        %3090 = vmatpush1.msra.mxu0 0.0
        %3091 = vmatprep.subr.mxu0 0.0
        %3092 = vmatpush1.msra.mxu0 0.0
        %3093 = vmatprep.subr.mxu0 0.0
        %3094 = vmatpush1.msra.mxu0 0.0
        %3095 = vmatprep.subr.mxu0 0.0
        %3096 = vmatpush1.msra.mxu0 0.0
        %3097 = vmatprep.subr.mxu0 0.0
        %3098 = vmatpush1.msra.mxu0 0.0
        %3099 = vmatprep.subr.mxu0 0.0
        %3100 = vmatpush1.msra.mxu0 0.0
        %3101 = vmatprep.subr.mxu0 0.0
        %3102 = vmatpush1.msra.mxu0 0.0
        %3103 = vmatprep.subr.mxu0 0.0
        %3104 = vmatpush1.msra.mxu0 0.0
        %3105 = vmatprep.subr.mxu0 0.0
        %3106 = vmatpush1.msra.mxu0 0.0
        %3107 = vmatprep.subr.mxu0 0.0
        %3108 = vmatpush1.msra.mxu0 0.0
        %3109 = vmatprep.mubr.f32.mxu0 0.0
        %3110 = vmatmul.mubr.f32.gmra.mrb[0].mxu0 %v3024
        %v3111 = vpop.f32.mrb[0].mxu0
        %v3112 = vadd.f32 0.0, %v3111
        %v3113 = vpop.f32.mrb[0].mxu0
        %3114 = vmatprep.mubr.f32.mxu0 0.0
        %3115 = vmatmul.mubr.f32.gmra.mrb[0].mxu0 %v3025
        %v3116 = vpop.f32.mrb[0].mxu0
        %v3117 = vadd.f32 0.0, %v3116
        %v3118 = vpop.f32.mrb[0].mxu0
        %3119 = vmatprep.mubr.f32.mxu0 0.0
        %3120 = vmatmul.mubr.f32.gmra.mrb[0].mxu0 %v3026
        %v3121 = vpop.f32.mrb[0].mxu0
        %v3122 = vadd.f32 0.0, %v3121
        %v3123 = vpop.f32.mrb[0].mxu0
        %3124 = vmatprep.mubr.f32.mxu0 0.0
        %3125 = vmatmul.mubr.f32.gmra.mrb[0].mxu0 %v3027
        %v3126 = vpop.f32.mrb[0].mxu0
        %v3127 = vadd.f32 0.0, %v3126
        %v3128 = vpop.f32.mrb[0].mxu0
        %3129 = vdwg.mxu0
        %v3130 = vadd.f32 %v3008, %v3112
        %v3131 = vadd.f32 %v3009, %v3117
        %v3132 = vadd.f32 %v3010, %v3122
        %v3133 = vadd.f32 %v3011, %v3127
        %v3134 = vld [vmem:[%s4] sm:$0x1]
        %v3136 = vlaneseq
        %v3137 = vshrl.u32 %v3136, 7
        %v3138 = vsub.s32 0, %v3137
        %v3139 = vrot.slane %v3134, %v3138
        %v3141 = vadd.f32 %v3130, %v3139
        %v3142 = vadd.f32 %v3131, %v3139
        %v3143 = vadd.f32 %v3132, %v3139
        %v3144 = vadd.f32 %v3133, %v3139
        %v3145 = vmax.f32 %v3141, 0.0
        %v3146 = vmax.f32 %v3142, 0.0
        %v3147 = vmax.f32 %v3143, 0.0
        %v3148 = vmax.f32 %v3144, 0.0
        %v3149 = vld [vmem:[#allocation10] sm:$0xff]
        %v3150 = vld [vmem:[#allocation10 + $0x8] sm:$0xff]
        %v3151 = vld [vmem:[#allocation10 + $0x10] sm:$0xff]
        %v3152 = vld [vmem:[#allocation10 + $0x18] sm:$0xff]
        %v3153 = vld [vmem:[#allocation10 + $0x20] sm:$0xff]
        %v3154 = vld [vmem:[#allocation10 + $0x28] sm:$0xff]
        %v3155 = vld [vmem:[#allocation10 + $0x30] sm:$0xff]
        %v3156 = vld [vmem:[#allocation10 + $0x38] sm:$0xff]
        %v3157 = vld [vmem:[#allocation10 + $0x40] sm:$0xff]
        %v3158 = vld [vmem:[#allocation10 + $0x48] sm:$0xff]
        %v3159 = vld [vmem:[#allocation10 + $0x50] sm:$0xff]
        %v3160 = vld [vmem:[#allocation10 + $0x58] sm:$0xff]
        %v3161 = vld [vmem:[#allocation10 + $0x60] sm:$0xff]
        %v3162 = vld [vmem:[#allocation10 + $0x68] sm:$0xff]
        %v3163 = vld [vmem:[#allocation10 + $0x70] sm:$0xff]
        %v3164 = vld [vmem:[#allocation10 + $0x78] sm:$0xff]
        %v3165 = vld [vmem:[%s6] sm:$0x1]
        %v3167 = vlaneseq
        %v3168 = vshrl.u32 %v3167, 7
        %v3169 = vsub.s32 0, %v3168
        %v3170 = vrot.slane %v3165, %v3169
        %3172 = vmatprep.subr.mxu0 0.0
        %3173 = vmatpush1.msra.mxu0 %v3149
        %3174 = vmatprep.subr.mxu0 0.0
        %3175 = vmatpush1.msra.mxu0 %v3150
        %3176 = vmatprep.subr.mxu0 0.0
        %3177 = vmatpush1.msra.mxu0 %v3151
        %3178 = vmatprep.subr.mxu0 0.0
        %3179 = vmatpush1.msra.mxu0 %v3152
        %3180 = vmatprep.subr.mxu0 0.0
        %3181 = vmatpush1.msra.mxu0 %v3153
        %3182 = vmatprep.subr.mxu0 0.0
        %3183 = vmatpush1.msra.mxu0 %v3154
        %3184 = vmatprep.subr.mxu0 0.0
        %3185 = vmatpush1.msra.mxu0 %v3155
        %3186 = vmatprep.subr.mxu0 0.0
        %3187 = vmatpush1.msra.mxu0 %v3156
        %3188 = vmatprep.subr.mxu0 0.0
        %3189 = vmatpush1.msra.mxu0 %v3157
        %3190 = vmatprep.subr.mxu0 0.0
        %3191 = vmatpush1.msra.mxu0 %v3158
        %3192 = vmatprep.subr.mxu0 0.0
        %3193 = vmatpush1.msra.mxu0 %v3159
        %3194 = vmatprep.subr.mxu0 0.0
        %3195 = vmatpush1.msra.mxu0 %v3160
        %3196 = vmatprep.subr.mxu0 0.0
        %3197 = vmatpush1.msra.mxu0 %v3161
        %3198 = vmatprep.subr.mxu0 0.0
        %3199 = vmatpush1.msra.mxu0 %v3162
        %3200 = vmatprep.subr.mxu0 0.0
        %3201 = vmatpush1.msra.mxu0 %v3163
        %3202 = vmatprep.subr.mxu0 0.0
        %3203 = vmatpush1.msra.mxu0 %v3164
        %3204 = vmatprep.subr.mxu0 0.0
        %3205 = vmatpush1.msra.mxu0 0.0
        %3206 = vmatprep.subr.mxu0 0.0
        %3207 = vmatpush1.msra.mxu0 0.0
        %3208 = vmatprep.subr.mxu0 0.0
        %3209 = vmatpush1.msra.mxu0 0.0
        %3210 = vmatprep.subr.mxu0 0.0
        %3211 = vmatpush1.msra.mxu0 0.0
        %3212 = vmatprep.subr.mxu0 0.0
        %3213 = vmatpush1.msra.mxu0 0.0
        %3214 = vmatprep.subr.mxu0 0.0
        %3215 = vmatpush1.msra.mxu0 0.0
        %3216 = vmatprep.subr.mxu0 0.0
        %3217 = vmatpush1.msra.mxu0 0.0
        %3218 = vmatprep.subr.mxu0 0.0
        %3219 = vmatpush1.msra.mxu0 0.0
        %3220 = vmatprep.subr.mxu0 0.0
        %3221 = vmatpush1.msra.mxu0 0.0
        %3222 = vmatprep.subr.mxu0 0.0
        %3223 = vmatpush1.msra.mxu0 0.0
        %3224 = vmatprep.subr.mxu0 0.0
        %3225 = vmatpush1.msra.mxu0 0.0
        %3226 = vmatprep.subr.mxu0 0.0
        %3227 = vmatpush1.msra.mxu0 0.0
        %3228 = vmatprep.subr.mxu0 0.0
        %3229 = vmatpush1.msra.mxu0 0.0
        %3230 = vmatprep.subr.mxu0 0.0
        %3231 = vmatpush1.msra.mxu0 0.0
        %3232 = vmatprep.subr.mxu0 0.0
        %3233 = vmatpush1.msra.mxu0 0.0
        %3234 = vmatprep.subr.mxu0 0.0
        %3235 = vmatpush1.msra.mxu0 0.0
        %3236 = vmatprep.mubr.f32.mxu0 0.0
        %3237 = vmatmul.mubr.f32.gmra.mrb[0].mxu0 %v3145
        %v3238 = vpop.f32.mrb[0].mxu0
        %v3239 = vadd.f32 %v3170, %v3238
        %v3240 = vpop.f32.mrb[0].mxu0
        %3241 = vmatprep.mubr.f32.mxu0 0.0
        %3242 = vmatmul.mubr.f32.gmra.mrb[0].mxu0 %v3146
        %v3243 = vpop.f32.mrb[0].mxu0
        %v3244 = vadd.f32 %v3170, %v3243
        %v3245 = vpop.f32.mrb[0].mxu0
        %3246 = vmatprep.mubr.f32.mxu0 0.0
        %3247 = vmatmul.mubr.f32.gmra.mrb[0].mxu0 %v3147
        %v3248 = vpop.f32.mrb[0].mxu0
        %v3249 = vadd.f32 %v3170, %v3248
        %v3250 = vpop.f32.mrb[0].mxu0
        %3251 = vmatprep.mubr.f32.mxu0 0.0
        %3252 = vmatmul.mubr.f32.gmra.mrb[0].mxu0 %v3148
        %v3253 = vpop.f32.mrb[0].mxu0
        %v3254 = vadd.f32 %v3170, %v3253
        %v3255 = vpop.f32.mrb[0].mxu0
        %3256 = vdwg.mxu0
        %v3257 = vmax.f32 %v3239, 0.0
        %v3258 = vmax.f32 %v3244, 0.0
        %v3259 = vmax.f32 %v3249, 0.0
        %v3260 = vmax.f32 %v3254, 0.0
        %v3261 = vld [vmem:[#allocation11] sm:$0xff]
        %v3262 = vld [vmem:[#allocation11 + $0x8] sm:$0xff]
        %v3263 = vld [vmem:[#allocation11 + $0x10] sm:$0xff]
        %v3264 = vld [vmem:[#allocation11 + $0x18] sm:$0xff]
        %v3265 = vld [vmem:[#allocation11 + $0x20] sm:$0xff]
        %v3266 = vld [vmem:[#allocation11 + $0x28] sm:$0xff]
        %v3267 = vld [vmem:[#allocation11 + $0x30] sm:$0xff]
        %v3268 = vld [vmem:[#allocation11 + $0x38] sm:$0xff]
        %v3269 = vld [vmem:[#allocation11 + $0x40] sm:$0xff]
        %v3270 = vld [vmem:[#allocation11 + $0x48] sm:$0xff]
        %v3271 = vld [vmem:[#allocation11 + $0x50] sm:$0xff]
        %v3272 = vld [vmem:[#allocation11 + $0x58] sm:$0xff]
        %v3273 = vld [vmem:[#allocation11 + $0x60] sm:$0xff]
        %v3274 = vld [vmem:[#allocation11 + $0x68] sm:$0xff]
        %v3275 = vld [vmem:[#allocation11 + $0x70] sm:$0xff]
        %v3276 = vld [vmem:[#allocation11 + $0x78] sm:$0xff]
        %v3277 = vld [vmem:[%s8] sm:$0x1]
        %v3279 = vlaneseq
        %v3280 = vshrl.u32 %v3279, 7
        %v3281 = vsub.s32 0, %v3280
        %v3282 = vrot.slane %v3277, %v3281
        %3284 = vmatprep.subr.mxu0 0.0
        %3285 = vmatpush1.msra.mxu0 %v3261
        %3286 = vmatprep.subr.mxu0 0.0
        %3287 = vmatpush1.msra.mxu0 %v3262
        %3288 = vmatprep.subr.mxu0 0.0
        %3289 = vmatpush1.msra.mxu0 %v3263
        %3290 = vmatprep.subr.mxu0 0.0
        %3291 = vmatpush1.msra.mxu0 %v3264
        %3292 = vmatprep.subr.mxu0 0.0
        %3293 = vmatpush1.msra.mxu0 %v3265
        %3294 = vmatprep.subr.mxu0 0.0
        %3295 = vmatpush1.msra.mxu0 %v3266
        %3296 = vmatprep.subr.mxu0 0.0
        %3297 = vmatpush1.msra.mxu0 %v3267
        %3298 = vmatprep.subr.mxu0 0.0
        %3299 = vmatpush1.msra.mxu0 %v3268
        %3300 = vmatprep.subr.mxu0 0.0
        %3301 = vmatpush1.msra.mxu0 %v3269
        %3302 = vmatprep.subr.mxu0 0.0
        %3303 = vmatpush1.msra.mxu0 %v3270
        %3304 = vmatprep.subr.mxu0 0.0
        %3305 = vmatpush1.msra.mxu0 %v3271
        %3306 = vmatprep.subr.mxu0 0.0
        %3307 = vmatpush1.msra.mxu0 %v3272
        %3308 = vmatprep.subr.mxu0 0.0
        %3309 = vmatpush1.msra.mxu0 %v3273
        %3310 = vmatprep.subr.mxu0 0.0
        %3311 = vmatpush1.msra.mxu0 %v3274
        %3312 = vmatprep.subr.mxu0 0.0
        %3313 = vmatpush1.msra.mxu0 %v3275
        %3314 = vmatprep.subr.mxu0 0.0
        %3315 = vmatpush1.msra.mxu0 %v3276
        %3316 = vmatprep.subr.mxu0 0.0
        %3317 = vmatpush1.msra.mxu0 0.0
        %3318 = vmatprep.subr.mxu0 0.0
        %3319 = vmatpush1.msra.mxu0 0.0
        %3320 = vmatprep.subr.mxu0 0.0
        %3321 = vmatpush1.msra.mxu0 0.0
        %3322 = vmatprep.subr.mxu0 0.0
        %3323 = vmatpush1.msra.mxu0 0.0
        %3324 = vmatprep.subr.mxu0 0.0
        %3325 = vmatpush1.msra.mxu0 0.0
        %3326 = vmatprep.subr.mxu0 0.0
        %3327 = vmatpush1.msra.mxu0 0.0
        %3328 = vmatprep.subr.mxu0 0.0
        %3329 = vmatpush1.msra.mxu0 0.0
        %3330 = vmatprep.subr.mxu0 0.0
        %3331 = vmatpush1.msra.mxu0 0.0
        %3332 = vmatprep.subr.mxu0 0.0
        %3333 = vmatpush1.msra.mxu0 0.0
        %3334 = vmatprep.subr.mxu0 0.0
        %3335 = vmatpush1.msra.mxu0 0.0
        %3336 = vmatprep.subr.mxu0 0.0
        %3337 = vmatpush1.msra.mxu0 0.0
        %3338 = vmatprep.subr.mxu0 0.0
        %3339 = vmatpush1.msra.mxu0 0.0
        %3340 = vmatprep.subr.mxu0 0.0
        %3341 = vmatpush1.msra.mxu0 0.0
        %3342 = vmatprep.subr.mxu0 0.0
        %3343 = vmatpush1.msra.mxu0 0.0
        %3344 = vmatprep.subr.mxu0 0.0
        %3345 = vmatpush1.msra.mxu0 0.0
        %3346 = vmatprep.subr.mxu0 0.0
        %3347 = vmatpush1.msra.mxu0 0.0
        %3348 = vmatprep.mubr.f32.mxu0 0.0
        %3349 = vmatmul.mubr.f32.gmra.mrb[0].mxu0 %v3257
        %v3350 = vpop.f32.mrb[0].mxu0
        %v3351 = vadd.f32 %v3282, %v3350
        %v3352 = vpop.f32.mrb[0].mxu0
        %3353 = vmatprep.mubr.f32.mxu0 0.0
        %3354 = vmatmul.mubr.f32.gmra.mrb[0].mxu0 %v3258
        %v3355 = vpop.f32.mrb[0].mxu0
        %v3356 = vadd.f32 %v3282, %v3355
        %v3357 = vpop.f32.mrb[0].mxu0
        %3358 = vmatprep.mubr.f32.mxu0 0.0
        %3359 = vmatmul.mubr.f32.gmra.mrb[0].mxu0 %v3259
        %v3360 = vpop.f32.mrb[0].mxu0
        %v3361 = vadd.f32 %v3282, %v3360
        %v3362 = vpop.f32.mrb[0].mxu0
        %3363 = vmatprep.mubr.f32.mxu0 0.0
        %3364 = vmatmul.mubr.f32.gmra.mrb[0].mxu0 %v3260
        %v3365 = vpop.f32.mrb[0].mxu0
        %v3366 = vadd.f32 %v3282, %v3365
        %v3367 = vpop.f32.mrb[0].mxu0
        %3368 = vdwg.mxu0
        %3369 = vst [vmem:[%s423] sm:$0xff] %v3351
        %3370 = vst [vmem:[%s423 + $0x8] sm:$0xff] %v3356
        %3371 = vst [vmem:[%s423 + $0x10] sm:$0xff] %v3361
        %3372 = vst [vmem:[%s423 + $0x18] sm:$0xff] %v3366
        %s3373 = sand.u32 %s231, 1
        %s3374 = scalar_lea.sflag [#allocation4], %s3373
        %s3375 = sand.u32 %s231, 1
        %s3376 = smul.addr %s3375, 32
        %s3377 = scalar_lea.vmem [#allocation13], %s3376
        // Predicated region
        $region81: #{tpu_custom_call.1} parent=55 // pred_check
          %p3378 = pneg %p241
        $region82: #{tpu_custom_call.1} parent=55 // pred_check_branch
          %3380 = sbr.rel (%p3378) target = $region84
        $region83: #{tpu_custom_call.1} parent=55 // pred_region
          %s3381 = smul.u32 4, %s29
          %s3383 = ssub.s32 512, 512
          %3384 = vsyncadd %s3374, %s3383
          %s3385 = smul.addr %s3381, 128
          %s3386 = scalar_lea.hbm %s9, %s3385
          %s3387 = sshll.u32 %s3377, 4
          %s3388 = int_to_ptr.vmem [resolvable:$true] %s3387
          %3393 = dma.vmem_to_hbm [thread:$0]  %s3388, 512, %s3386, %s3374, 128, 128, 8
        $region84: #{tpu_custom_call.1} parent=55 // pred_fallthru
          _
      $region56: #{tpu_custom_call.1} parent=5 // pred_fallthru
        _
      %p3394 = scmp.le.s32.totalorder 2, %s24
      // Predicated region
      $region85: #{tpu_custom_call.1} parent=5 // pred_check
        %p3395 = pneg %p3394
      $region86: #{tpu_custom_call.1} parent=5 // pred_check_branch
        %3397 = sbr.rel (%p3395) target = $region88
      $region87: #{tpu_custom_call.1} parent=5 // pred_region
        %s3398 = ssub.s32 %s24, 2
        // Predicated region
        $region89: #{tpu_custom_call.1} parent=87 // pred_check
          %p3399 = pneg %p247
        $region90: #{tpu_custom_call.1} parent=87 // pred_check_branch
          %3401 = sbr.rel (%p3399) target = $region92
        $region91: #{tpu_custom_call.1} parent=87 // pred_region
          %s3402 = sand.u32 %s232, 1
          %s3403 = scalar_lea.sflag [#allocation4], %s3402
          %s3404 = sand.u32 %s232, 1
          %s3405 = smul.addr %s3404, 32
          %s3406 = scalar_lea.vmem [#allocation13], %s3405
          %3407 = dma.done %s3403, 512
        $region92: #{tpu_custom_call.1} parent=87 // pred_fallthru
          _
      $region88: #{tpu_custom_call.1} parent=5 // pred_fallthru
        _
    $region6: #{tpu_custom_call.1} parent=1 // loop_footer
      %s28 = sadd.s32 1, %s24
    $region7: #{tpu_custom_call.1} parent=1 // loop_footer_branch
      %23 = sbr.rel target = $region3
    $region8: #{tpu_custom_call.1} parent=1 // loop_exit
      _
    %3408 = vsyncpa [#allocation3], 1
    %s3409 = scalar_lea.sflag [#allocation3], 1
    %3410 = vsyncpa %s3409, 1
    %3411 = vsyncpa [#allocation6], 1
    %3412 = vsyncpa [#allocation9], 1
    %3413 = vsyncpa [#allocation12], 1
    %3414 = vsyncpa [#allocation4], 1
    %s3415 = scalar_lea.sflag [#allocation4], 1
    %3416 = vsyncpa %s3415, 1

</llo_original>
